<compile_context>
chip_gen: v7x
topology: tpu7x:2x2x1
jax: 0.10.0
libtpu: 0.0.40
codegen_flags: <defaults>
</compile_context>

<pallas_src>
import jax
import jax.numpy as jnp
from jax.experimental import pallas as pl
from jax.experimental.pallas import tpu as pltpu

# Small, deterministic configuration (original uses F_DIM=64, neighbor counts=10).
F_DIM = 64
CONSUM_NUM = 4
NEIGHB_URL_NUM = 4      # must equal CONSUM_NUM for lane pairing
FRIEND_NUM = 4
NEIGHT_USER_NUM = 4     # must equal FRIEND_NUM for lane pairing

URL_VOCABS = [4732 + 1, 20 + 1, 6 + 1, 10 + 1, 10 + 1]                     # 5 url features
USER_VOCABS = [11576 + 1, 10 + 1, 10 + 1, 10 + 1, 10 + 1, 20 + 1, 6 + 1]   # 7 user features


def _round_up(x, m):
    return (x + m - 1) // m * m


def _pick_tm(n):
    # Per-generation guidance: v5e ~128-256, v6e ~512, v7x ~256-384 rows. 256 is a safe
    # default that fits every generation's scoped VMEM with the bf16 / lane-paired layout.
    if n <= 256:
        return _round_up(max(n, 1), 16)   # multiple of 16 (bf16 sublane packing)
    return 256


# ----------------------------------------------------------------------------
# Single fused, batch-tiled Pallas kernel
# ----------------------------------------------------------------------------
def _fused_kernel(xcat_ref,                           # [TM, 12F]      bf16
                  xu_ref,                             # [C, 5, TM, 2F] bf16  (cons | nurl)
                  xs_ref,                             # [C, 7, TM, 2F] bf16  (frnd | nusr)
                  watt_u_ref, wc_u_ref, bias_u_ref,   # [1,5,1,2F], [C,5,1,2F], [1,2F]
                  watt_s_ref, wc_s_ref, bias_s_ref,   # [1,7,1,2F], [C,7,1,2F], [1,2F]
                  w_lin_ref, b_lin_ref,               # [12F, 2F], [1, 2F]  (block-diag)
                  wg_url_ref, bg_url_ref,             # [2F, F], [1, F]
                  wg_usr_ref, bg_usr_ref,             # [2F, F], [1, F]
                  o_ref):                             # [TM, 4F] f32
    fd = wg_url_ref.shape[1]                          # F_DIM

    # ---- fused user/url Linear + ReLU (one MXU dot via block-diagonal weight) ----------
    xcat = xcat_ref[...].astype(jnp.float32)
    lin = jnp.dot(xcat, w_lin_ref[...], preferred_element_type=jnp.float32)
    lin = jnp.maximum(lin + b_lin_ref[...], 0.0)      # [TM, 2F] = [user_f | url_f]
    o_ref[:, 2 * fd:] = lin                           # 128-lane dense slab store

    # ---- paired attenModel: two modules packed on the 128-lane axis ---------------------
    def atten_pair(xp_ref, watt_ref, wc_ref, bias_ref):
        c, h, tm, f2 = xp_ref.shape
        fh = f2 // 2
        w_acc = jnp.zeros((c, tm, f2), jnp.float32)   # attention-score accumulator
        y_acc = jnp.zeros((c, tm, f2), jnp.float32)   # (h,1)-conv accumulator
        for j in range(h):                            # unrolled; temporaries stay 3-D
            x_j = xp_ref[:, j].astype(jnp.float32)    # [C, TM, 2F]  (bf16 -> f32 on load)
            w_acc = w_acc + x_j * watt_ref[0, j]      # [1, 2F]  broadcast
            y_acc = y_acc + x_j * wc_ref[:, j]        # [C, 1, 2F] broadcast
        s_l = jnp.sum(w_acc[..., :fh], axis=-1, keepdims=True)   # [C, TM, 1]
        s_r = jnp.sum(w_acc[..., fh:], axis=-1, keepdims=True)

        def softmax_c(s):                             # softmax over the C neighbors
            m = jnp.max(s, axis=0, keepdims=True)
            e = jnp.exp(s - m)
            return e * pl.reciprocal(jnp.sum(e, axis=0, keepdims=True), approx=True)

        a_l, a_r = softmax_c(s_l), softmax_c(s_r)     # [C, TM, 1]
        out_l = jnp.sum(a_l * y_acc[..., :fh], axis=0) + bias_ref[:, :fh]   # [TM, F]
        out_r = jnp.sum(a_r * y_acc[..., fh:], axis=0) + bias_ref[:, fh:]   # [TM, F]
        return out_l, out_r

    cons_x, nurl_x = atten_pair(xu_ref, watt_u_ref, wc_u_ref, bias_u_ref)
    frnd_x, nusr_x = atten_pair(xs_ref, watt_s_ref, wc_s_ref, bias_s_ref)

    # ---- gates + gated fuse (split gate weight => no in-kernel lane concatenation) -----
    def gated(x_a, x_b, wg_ref, bg_ref):
        g = jax.nn.sigmoid(
            jnp.dot(x_a, wg_ref[:fd, :], preferred_element_type=jnp.float32)
            + jnp.dot(x_b, wg_ref[fd:, :], preferred_element_type=jnp.float32)
            + bg_ref[...])
        return g * x_a + (1.0 - g) * x_b

    o_ref[:, 0:fd] = gated(cons_x, nurl_x, wg_url_ref, bg_url_ref)       # url_feature_x
    o_ref[:, fd:2 * fd] = gated(frnd_x, nusr_x, wg_usr_ref, bg_usr_ref)  # user_feature_x


# ----------------------------------------------------------------------------
# Parameter initialization (deterministic, synthetic)
# ----------------------------------------------------------------------------
def init_params(key, f_dim=F_DIM):
    ks = iter(jax.random.split(key, 64))

    def nrm(shape, scale=0.05):
        return scale * jax.random.normal(next(ks), shape, jnp.float32)

    p = {}

    # One combined embedding table (user features first, then url), stored bf16.
    sizes = USER_VOCABS + URL_VOCABS
    tables = [nrm((v, f_dim), 0.01) for v in sizes]
    starts, s = [], 0
    for v in sizes:
        starts.append(s)
        s += v
    p["table"] = jnp.concatenate(tables, axis=0).astype(jnp.bfloat16)
    p["user_offsets"] = jnp.asarray(starts[:len(USER_VOCABS)], jnp.int32)
    p["url_offsets"] = jnp.asarray(starts[len(USER_VOCABS):], jnp.int32)

    # Block-diagonal fused user/url Linear: [user_flat | url_flat] @ W -> [user_f | url_f]
    user_w, user_b = nrm((7 * f_dim, f_dim)), nrm((f_dim,))
    url_w, url_b = nrm((5 * f_dim, f_dim)), nrm((f_dim,))
    w_lin = jnp.zeros((12 * f_dim, 2 * f_dim), jnp.float32)
    w_lin = w_lin.at[:7 * f_dim, :f_dim].set(user_w)
    w_lin = w_lin.at[7 * f_dim:, f_dim:].set(url_w)
    p["w_lin"] = w_lin
    p["b_lin"] = jnp.concatenate([user_b, url_b]).reshape(1, 2 * f_dim)

    # Paired attenModel params: module A occupies lanes [:F], module B lanes [F:].
    def atten_pair_params(c, h):
        def single():
            watt = nrm((h, f_dim))     # attend_f weight
            wc = nrm((c, h))           # Conv2d(C, 1, (h,1)) weight (out_conv)
            bias = nrm(())             # Conv2d bias (out_channels=1)
            return watt, wc, bias

        wa_a, wc_a, b_a = single()
        wa_b, wc_b, b_b = single()
        watt = jnp.concatenate([wa_a, wa_b], axis=-1).reshape(1, h, 1, 2 * f_dim)
        wc = jnp.concatenate(
            [jnp.broadcast_to(wc_a[:, :, None], (c, h, f_dim)),
             jnp.broadcast_to(wc_b[:, :, None], (c, h, f_dim))],
            axis=-1).reshape(c, h, 1, 2 * f_dim)
        bias = jnp.concatenate([jnp.broadcast_to(b_a, (f_dim,)),
                                jnp.broadcast_to(b_b, (f_dim,))]).reshape(1, 2 * f_dim)
        return (watt.astype(jnp.float32), wc.astype(jnp.float32), bias.astype(jnp.float32))

    p["watt_url"], p["wc_url"], p["bias_url"] = atten_pair_params(CONSUM_NUM, 5)
    p["watt_usr"], p["wc_usr"], p["bias_usr"] = atten_pair_params(FRIEND_NUM, 7)

    # Gates (applied as split dots in-kernel; rows [:F] multiply module A, [F:] module B).
    def gate_params():
        return nrm((2 * f_dim, f_dim)), nrm((f_dim,)).reshape(1, f_dim)

    p["wg_url"], p["bg_url"] = gate_params()
    p["wg_usr"], p["bg_usr"] = gate_params()
    return p


# ----------------------------------------------------------------------------
# Forward pass (out_conv=True branch)
# ----------------------------------------------------------------------------
@jax.jit
def feature_model_forward(params, user_idxs, url_idxs, user_f_list, url_f_list,
                          consume_urls_f_list, neighb_urls_f_list,
                          friend_users_f_list, neighb_users_f_list):
    del user_idxs, url_idxs  # unused in the reference forward as well
    n = user_f_list.shape[0]
    f = F_DIM
    tab = params["table"]
    user_off = params["user_offsets"]
    url_off = params["url_offsets"]

    c_url = consume_urls_f_list.shape[1]
    c_usr = friend_users_f_list.shape[1]
    assert neighb_urls_f_list.shape[1] == c_url, "lane pairing requires equal channel counts"
    assert neighb_users_f_list.shape[1] == c_usr, "lane pairing requires equal channel counts"

    tm = _pick_tm(n)
    npad = _round_up(n, tm)
    pad = npad - n

    def pad_rows(x):
        if pad == 0:
            return x
        return jnp.pad(x, [(0, pad)] + [(0, 0)] * (x.ndim - 1))

    user_f_list = pad_rows(user_f_list)
    url_f_list = pad_rows(url_f_list)
    cons = pad_rows(consume_urls_f_list)
    nurl = pad_rows(neighb_urls_f_list)
    frnd = pad_rows(friend_users_f_list)
    nusr = pad_rows(neighb_users_f_list)

    # One gather for [user_flat | url_flat]; reshape of the contiguous (12, F) tail is free.
    xcat_idx = jnp.concatenate([user_f_list + user_off[None, :],
                                url_f_list + url_off[None, :]], axis=1)        # [Npad, 12]
    xcat = tab[xcat_idx].reshape(npad, 12 * f)                                 # bf16

    # Neighbor pairs gathered directly in kernel layout [C, h, Npad, 2F]:
    # the tiny int32 index arrays are transposed/stacked, so the gather itself writes the
    # lane-paired layout and the trailing (2, F) -> 2F reshape is a no-op.
    def pair_gather(idx_a, idx_b, off):
        ia = jnp.transpose(idx_a, (1, 2, 0)) + off[None, :, None]              # [C, h, Npad]
        ib = jnp.transpose(idx_b, (1, 2, 0)) + off[None, :, None]
        stacked = jnp.stack([ia, ib], axis=-1)                                 # [C, h, Npad, 2]
        e = tab[stacked]                                                       # [C, h, Npad, 2, F]
        return e.reshape(e.shape[0], e.shape[1], npad, 2 * f)                  # bf16

    xp_url = pair_gather(cons, nurl, url_off)       # [C, 5, Npad, 2F]
    xp_usr = pair_gather(frnd, nusr, user_off)      # [C, 7, Npad, 2F]

    def resident(x):
        nd = x.ndim
        return pl.BlockSpec(x.shape, lambda i, _nd=nd: (0,) * _nd)   # fetched once, stays resident

    out = pl.pallas_call(
        _fused_kernel,
        out_shape=jax.ShapeDtypeStruct((npad, 4 * f), jnp.float32),
        grid=(npad // tm,),
        in_specs=[
            pl.BlockSpec((tm, 12 * f), lambda i: (i, 0)),
            pl.BlockSpec((c_url, 5, tm, 2 * f), lambda i: (0, 0, i, 0)),
            pl.BlockSpec((c_usr, 7, tm, 2 * f), lambda i: (0, 0, i, 0)),
            resident(params["watt_url"]), resident(params["wc_url"]), resident(params["bias_url"]),
            resident(params["watt_usr"]), resident(params["wc_usr"]), resident(params["bias_usr"]),
            resident(params["w_lin"]), resident(params["b_lin"]),
            resident(params["wg_url"]), resident(params["bg_url"]),
            resident(params["wg_usr"]), resident(params["bg_usr"]),
        ],
        out_specs=pl.BlockSpec((tm, 4 * f), lambda i: (i, 0)),
        compiler_params=pltpu.CompilerParams(
            dimension_semantics=("parallel",),          # 2x across TCs on v7x
            vmem_limit_bytes=64 * 1024 * 1024,
        ),
    )(
        xcat, xp_url, xp_usr,
        params["watt_url"], params["wc_url"], params["bias_url"],
        params["watt_usr"], params["wc_usr"], params["bias_usr"],
        params["w_lin"], params["b_lin"],
        params["wg_url"], params["bg_url"],
        params["wg_usr"], params["bg_usr"],
    )
    return out[:n]


# ----------------------------------------------------------------------------
# Main
# ----------------------------------------------------------------------------
if __name__ == "__main__":
    key = jax.random.PRNGKey(0)
    pkey, dkey = jax.random.split(key)
    params = init_params(pkey)

    N = 8
    keys = jax.random.split(dkey, 8)

    def rand_feats(k, shape_prefix, vocabs):
        kk = jax.random.split(k, len(vocabs))
        cols = [jax.random.randint(kk[i], shape_prefix, 0, v) for i, v in enumerate(vocabs)]
        return jnp.stack(cols, axis=-1).astype(jnp.int32)

    user_idxs = jax.random.randint(keys[0], (N,), 0, USER_VOCABS[0])
    url_idxs = jax.random.randint(keys[1], (N,), 0, URL_VOCABS[0])
    user_f_list = rand_feats(keys[2], (N,), USER_VOCABS)                          # [N, 7]
    url_f_list = rand_feats(keys[3], (N,), URL_VOCABS)                            # [N, 5]
    consume_urls_f_list = rand_feats(keys[4], (N, CONSUM_NUM), URL_VOCABS)        # [N, 4, 5]
    neighb_urls_f_list = rand_feats(keys[5], (N, NEIGHB_URL_NUM), URL_VOCABS)     # [N, 4, 5]
    friend_users_f_list = rand_feats(keys[6], (N, FRIEND_NUM), USER_VOCABS)       # [N, 4, 7]
    neighb_users_f_list = rand_feats(keys[7], (N, NEIGHT_USER_NUM), USER_VOCABS)  # [N, 4, 7]

    out = feature_model_forward(params, user_idxs, url_idxs, user_f_list, url_f_list,
                                consume_urls_f_list, neighb_urls_f_list,
                                friend_users_f_list, neighb_users_f_list)
    out = jax.block_until_ready(out)
    assert out.shape == (N, 4 * F_DIM), out.shape
    assert bool(jnp.all(jnp.isfinite(out)))
    print("KERNEL_OK")
</pallas_src>

<mosaic_0001>
module attributes {stable_mosaic.version = 11 : i64} {
  func.func @_fused_kernel(%arg0: i32, %arg1: memref<16x768xbf16, #tpu.memory_space<vmem>>, %arg2: memref<4x5x16x128xbf16, #tpu.memory_space<vmem>>, %arg3: memref<4x7x16x128xbf16, #tpu.memory_space<vmem>>, %arg4: memref<1x5x1x128xf32, #tpu.memory_space<vmem>>, %arg5: memref<4x5x1x128xf32, #tpu.memory_space<vmem>>, %arg6: memref<1x128xf32, #tpu.memory_space<vmem>>, %arg7: memref<1x7x1x128xf32, #tpu.memory_space<vmem>>, %arg8: memref<4x7x1x128xf32, #tpu.memory_space<vmem>>, %arg9: memref<1x128xf32, #tpu.memory_space<vmem>>, %arg10: memref<768x128xf32, #tpu.memory_space<vmem>>, %arg11: memref<1x128xf32, #tpu.memory_space<vmem>>, %arg12: memref<128x64xf32, #tpu.memory_space<vmem>>, %arg13: memref<1x64xf32, #tpu.memory_space<vmem>>, %arg14: memref<128x64xf32, #tpu.memory_space<vmem>>, %arg15: memref<1x64xf32, #tpu.memory_space<vmem>>, %arg16: memref<16x256xf32, #tpu.memory_space<vmem>>) attributes {dimension_semantics = [#tpu.dimension_semantics<parallel>], iteration_bounds = array<i64: 1>, scalar_prefetch = 0 : i64, scratch_operands = 0 : i64, tpu.core_type = #tpu.core_type<tc>, window_params = [{transform_indices = @transform_0, window_bounds = array<i64: 16, 768>}, {transform_indices = @transform_1, window_bounds = array<i64: 4, 5, 16, 128>}, {transform_indices = @transform_2, window_bounds = array<i64: 4, 7, 16, 128>}, {pipeline_mode = #tpu.pipeline_mode<synchronous>, transform_indices = @transform_3, window_bounds = array<i64: 1, 5, 1, 128>}, {pipeline_mode = #tpu.pipeline_mode<synchronous>, transform_indices = @transform_4, window_bounds = array<i64: 4, 5, 1, 128>}, {pipeline_mode = #tpu.pipeline_mode<synchronous>, transform_indices = @transform_5, window_bounds = array<i64: 1, 128>}, {pipeline_mode = #tpu.pipeline_mode<synchronous>, transform_indices = @transform_6, window_bounds = array<i64: 1, 7, 1, 128>}, {pipeline_mode = #tpu.pipeline_mode<synchronous>, transform_indices = @transform_7, window_bounds = array<i64: 4, 7, 1, 128>}, {pipeline_mode = #tpu.pipeline_mode<synchronous>, transform_indices = @transform_8, window_bounds = array<i64: 1, 128>}, {pipeline_mode = #tpu.pipeline_mode<synchronous>, transform_indices = @transform_9, window_bounds = array<i64: 768, 128>}, {pipeline_mode = #tpu.pipeline_mode<synchronous>, transform_indices = @transform_10, window_bounds = array<i64: 1, 128>}, {pipeline_mode = #tpu.pipeline_mode<synchronous>, transform_indices = @transform_11, window_bounds = array<i64: 128, 64>}, {pipeline_mode = #tpu.pipeline_mode<synchronous>, transform_indices = @transform_12, window_bounds = array<i64: 1, 64>}, {pipeline_mode = #tpu.pipeline_mode<synchronous>, transform_indices = @transform_13, window_bounds = array<i64: 128, 64>}, {pipeline_mode = #tpu.pipeline_mode<synchronous>, transform_indices = @transform_14, window_bounds = array<i64: 1, 64>}, {transform_indices = @transform_15, window_bounds = array<i64: 16, 256>}]} {
    %c0 = arith.constant 0 : index
    %c0_0 = arith.constant 0 : index
    %0 = vector.load %arg1[%c0, %c0_0] : memref<16x768xbf16, #tpu.memory_space<vmem>>, vector<16x768xbf16>
    %1 = arith.extf %0 : vector<16x768xbf16> to vector<16x768xf32>
    %c0_1 = arith.constant 0 : index
    %c0_2 = arith.constant 0 : index
    %2 = vector.load %arg10[%c0_1, %c0_2] : memref<768x128xf32, #tpu.memory_space<vmem>>, vector<768x128xf32>
    %cst = arith.constant dense<0.000000e+00> : vector<16x128xf32>
    %3 = tpu.matmul %1, %2, %cst {dimension_numbers = #tpu.dot_dimension_numbers<[1], [0], [0], [1], [0, 0, 1, 1], [], []>} : vector<16x768xf32>, vector<768x128xf32>, vector<16x128xf32> -> vector<16x128xf32>
    %c0_3 = arith.constant 0 : index
    %c0_4 = arith.constant 0 : index
    %4 = vector.load %arg11[%c0_3, %c0_4] : memref<1x128xf32, #tpu.memory_space<vmem>>, vector<1x128xf32>
    %5 = vector.broadcast %4 : vector<1x128xf32> to vector<16x128xf32>
    %6 = arith.addf %3, %5 : vector<16x128xf32>
    %cst_5 = arith.constant 0.000000e+00 : f32
    %7 = vector.broadcast %cst_5 : f32 to vector<16x128xf32>
    %8 = arith.maximumf %6, %7 : vector<16x128xf32>
    %c0_6 = arith.constant 0 : index
    %c128 = arith.constant 128 : index
    %9 = vector.load %arg16[%c0_6, %c128] : memref<16x256xf32, #tpu.memory_space<vmem>>, vector<16x128xf32>
    tpu.vector_store %arg16[%c0_6, %c128], %8 {strides = array<i32>} : memref<16x256xf32, #tpu.memory_space<vmem>>, vector<16x128xf32>,
    %cst_7 = arith.constant 0.000000e+00 : f32
    %10 = vector.broadcast %cst_7 : f32 to vector<4x16x128xf32>
    %cst_8 = arith.constant 0.000000e+00 : f32
    %11 = vector.broadcast %cst_8 : f32 to vector<4x16x128xf32>
    %c0_9 = arith.constant 0 : index
    %c0_10 = arith.constant 0 : index
    %c0_11 = arith.constant 0 : index
    %c0_12 = arith.constant 0 : index
    %12 = vector.load %arg2[%c0_9, %c0_10, %c0_11, %c0_12] : memref<4x5x16x128xbf16, #tpu.memory_space<vmem>>, vector<4x1x16x128xbf16>
    %13 = vector.shape_cast %12 : vector<4x1x16x128xbf16> to vector<4x16x128xbf16>
    %14 = arith.extf %13 : vector<4x16x128xbf16> to vector<4x16x128xf32>
    %c0_13 = arith.constant 0 : index
    %c0_14 = arith.constant 0 : index
    %c0_15 = arith.constant 0 : index
    %c0_16 = arith.constant 0 : index
    %15 = vector.load %arg4[%c0_13, %c0_14, %c0_15, %c0_16] : memref<1x5x1x128xf32, #tpu.memory_space<vmem>>, vector<1x1x1x128xf32>
    %16 = vector.shape_cast %15 : vector<1x1x1x128xf32> to vector<1x128xf32>
    %17 = vector.shape_cast %16 : vector<1x128xf32> to vector<1x1x128xf32>
    %18 = vector.broadcast %17 : vector<1x1x128xf32> to vector<4x16x128xf32>
    %19 = arith.mulf %14, %18 : vector<4x16x128xf32>
    %20 = arith.addf %10, %19 : vector<4x16x128xf32>
    %c0_17 = arith.constant 0 : index
    %c0_18 = arith.constant 0 : index
    %c0_19 = arith.constant 0 : index
    %c0_20 = arith.constant 0 : index
    %21 = vector.load %arg5[%c0_17, %c0_18, %c0_19, %c0_20] : memref<4x5x1x128xf32, #tpu.memory_space<vmem>>, vector<4x1x1x128xf32>
    %22 = vector.shape_cast %21 : vector<4x1x1x128xf32> to vector<4x1x128xf32>
    %23 = vector.broadcast %22 : vector<4x1x128xf32> to vector<4x16x128xf32>
    %24 = arith.mulf %14, %23 : vector<4x16x128xf32>
    %25 = arith.addf %11, %24 : vector<4x16x128xf32>
    %c0_21 = arith.constant 0 : index
    %c1 = arith.constant 1 : index
    %c0_22 = arith.constant 0 : index
    %c0_23 = arith.constant 0 : index
    %26 = vector.load %arg2[%c0_21, %c1, %c0_22, %c0_23] : memref<4x5x16x128xbf16, #tpu.memory_space<vmem>>, vector<4x1x16x128xbf16>
    %27 = vector.shape_cast %26 : vector<4x1x16x128xbf16> to vector<4x16x128xbf16>
    %28 = arith.extf %27 : vector<4x16x128xbf16> to vector<4x16x128xf32>
    %c0_24 = arith.constant 0 : index
    %c1_25 = arith.constant 1 : index
    %c0_26 = arith.constant 0 : index
    %c0_27 = arith.constant 0 : index
    %29 = vector.load %arg4[%c0_24, %c1_25, %c0_26, %c0_27] : memref<1x5x1x128xf32, #tpu.memory_space<vmem>>, vector<1x1x1x128xf32>
    %30 = vector.shape_cast %29 : vector<1x1x1x128xf32> to vector<1x128xf32>
    %31 = vector.shape_cast %30 : vector<1x128xf32> to vector<1x1x128xf32>
    %32 = vector.broadcast %31 : vector<1x1x128xf32> to vector<4x16x128xf32>
    %33 = arith.mulf %28, %32 : vector<4x16x128xf32>
    %34 = arith.addf %20, %33 : vector<4x16x128xf32>
    %c0_28 = arith.constant 0 : index
    %c1_29 = arith.constant 1 : index
    %c0_30 = arith.constant 0 : index
    %c0_31 = arith.constant 0 : index
    %35 = vector.load %arg5[%c0_28, %c1_29, %c0_30, %c0_31] : memref<4x5x1x128xf32, #tpu.memory_space<vmem>>, vector<4x1x1x128xf32>
    %36 = vector.shape_cast %35 : vector<4x1x1x128xf32> to vector<4x1x128xf32>
    %37 = vector.broadcast %36 : vector<4x1x128xf32> to vector<4x16x128xf32>
    %38 = arith.mulf %28, %37 : vector<4x16x128xf32>
    %39 = arith.addf %25, %38 : vector<4x16x128xf32>
    %c0_32 = arith.constant 0 : index
    %c2 = arith.constant 2 : index
    %c0_33 = arith.constant 0 : index
    %c0_34 = arith.constant 0 : index
    %40 = vector.load %arg2[%c0_32, %c2, %c0_33, %c0_34] : memref<4x5x16x128xbf16, #tpu.memory_space<vmem>>, vector<4x1x16x128xbf16>
    %41 = vector.shape_cast %40 : vector<4x1x16x128xbf16> to vector<4x16x128xbf16>
    %42 = arith.extf %41 : vector<4x16x128xbf16> to vector<4x16x128xf32>
    %c0_35 = arith.constant 0 : index
    %c2_36 = arith.constant 2 : index
    %c0_37 = arith.constant 0 : index
    %c0_38 = arith.constant 0 : index
    %43 = vector.load %arg4[%c0_35, %c2_36, %c0_37, %c0_38] : memref<1x5x1x128xf32, #tpu.memory_space<vmem>>, vector<1x1x1x128xf32>
    %44 = vector.shape_cast %43 : vector<1x1x1x128xf32> to vector<1x128xf32>
    %45 = vector.shape_cast %44 : vector<1x128xf32> to vector<1x1x128xf32>
    %46 = vector.broadcast %45 : vector<1x1x128xf32> to vector<4x16x128xf32>
    %47 = arith.mulf %42, %46 : vector<4x16x128xf32>
    %48 = arith.addf %34, %47 : vector<4x16x128xf32>
    %c0_39 = arith.constant 0 : index
    %c2_40 = arith.constant 2 : index
    %c0_41 = arith.constant 0 : index
    %c0_42 = arith.constant 0 : index
    %49 = vector.load %arg5[%c0_39, %c2_40, %c0_41, %c0_42] : memref<4x5x1x128xf32, #tpu.memory_space<vmem>>, vector<4x1x1x128xf32>
    %50 = vector.shape_cast %49 : vector<4x1x1x128xf32> to vector<4x1x128xf32>
    %51 = vector.broadcast %50 : vector<4x1x128xf32> to vector<4x16x128xf32>
    %52 = arith.mulf %42, %51 : vector<4x16x128xf32>
    %53 = arith.addf %39, %52 : vector<4x16x128xf32>
    %c0_43 = arith.constant 0 : index
    %c3 = arith.constant 3 : index
    %c0_44 = arith.constant 0 : index
    %c0_45 = arith.constant 0 : index
    %54 = vector.load %arg2[%c0_43, %c3, %c0_44, %c0_45] : memref<4x5x16x128xbf16, #tpu.memory_space<vmem>>, vector<4x1x16x128xbf16>
    %55 = vector.shape_cast %54 : vector<4x1x16x128xbf16> to vector<4x16x128xbf16>
    %56 = arith.extf %55 : vector<4x16x128xbf16> to vector<4x16x128xf32>
    %c0_46 = arith.constant 0 : index
    %c3_47 = arith.constant 3 : index
    %c0_48 = arith.constant 0 : index
    %c0_49 = arith.constant 0 : index
    %57 = vector.load %arg4[%c0_46, %c3_47, %c0_48, %c0_49] : memref<1x5x1x128xf32, #tpu.memory_space<vmem>>, vector<1x1x1x128xf32>
    %58 = vector.shape_cast %57 : vector<1x1x1x128xf32> to vector<1x128xf32>
    %59 = vector.shape_cast %58 : vector<1x128xf32> to vector<1x1x128xf32>
    %60 = vector.broadcast %59 : vector<1x1x128xf32> to vector<4x16x128xf32>
    %61 = arith.mulf %56, %60 : vector<4x16x128xf32>
    %62 = arith.addf %48, %61 : vector<4x16x128xf32>
    %c0_50 = arith.constant 0 : index
    %c3_51 = arith.constant 3 : index
    %c0_52 = arith.constant 0 : index
    %c0_53 = arith.constant 0 : index
    %63 = vector.load %arg5[%c0_50, %c3_51, %c0_52, %c0_53] : memref<4x5x1x128xf32, #tpu.memory_space<vmem>>, vector<4x1x1x128xf32>
    %64 = vector.shape_cast %63 : vector<4x1x1x128xf32> to vector<4x1x128xf32>
    %65 = vector.broadcast %64 : vector<4x1x128xf32> to vector<4x16x128xf32>
    %66 = arith.mulf %56, %65 : vector<4x16x128xf32>
    %67 = arith.addf %53, %66 : vector<4x16x128xf32>
    %c0_54 = arith.constant 0 : index
    %c4 = arith.constant 4 : index
    %c0_55 = arith.constant 0 : index
    %c0_56 = arith.constant 0 : index
    %68 = vector.load %arg2[%c0_54, %c4, %c0_55, %c0_56] : memref<4x5x16x128xbf16, #tpu.memory_space<vmem>>, vector<4x1x16x128xbf16>
    %69 = vector.shape_cast %68 : vector<4x1x16x128xbf16> to vector<4x16x128xbf16>
    %70 = arith.extf %69 : vector<4x16x128xbf16> to vector<4x16x128xf32>
    %c0_57 = arith.constant 0 : index
    %c4_58 = arith.constant 4 : index
    %c0_59 = arith.constant 0 : index
    %c0_60 = arith.constant 0 : index
    %71 = vector.load %arg4[%c0_57, %c4_58, %c0_59, %c0_60] : memref<1x5x1x128xf32, #tpu.memory_space<vmem>>, vector<1x1x1x128xf32>
    %72 = vector.shape_cast %71 : vector<1x1x1x128xf32> to vector<1x128xf32>
    %73 = vector.shape_cast %72 : vector<1x128xf32> to vector<1x1x128xf32>
    %74 = vector.broadcast %73 : vector<1x1x128xf32> to vector<4x16x128xf32>
    %75 = arith.mulf %70, %74 : vector<4x16x128xf32>
    %76 = arith.addf %62, %75 : vector<4x16x128xf32>
    %c0_61 = arith.constant 0 : index
    %c4_62 = arith.constant 4 : index
    %c0_63 = arith.constant 0 : index
    %c0_64 = arith.constant 0 : index
    %77 = vector.load %arg5[%c0_61, %c4_62, %c0_63, %c0_64] : memref<4x5x1x128xf32, #tpu.memory_space<vmem>>, vector<4x1x1x128xf32>
    %78 = vector.shape_cast %77 : vector<4x1x1x128xf32> to vector<4x1x128xf32>
    %79 = vector.broadcast %78 : vector<4x1x128xf32> to vector<4x16x128xf32>
    %80 = arith.mulf %70, %79 : vector<4x16x128xf32>
    %81 = arith.addf %67, %80 : vector<4x16x128xf32>
    %82 = vector.extract_strided_slice %76 {offsets = [0, 0, 0], sizes = [4, 16, 64], strides = [1, 1, 1]} : vector<4x16x128xf32> to vector<4x16x64xf32>
    %cst_65 = arith.constant dense<0.000000e+00> : vector<4x16xf32>
    %83 = vector.multi_reduction <add>, %82, %cst_65 [2] : vector<4x16x64xf32> to vector<4x16xf32>
    %84 = vector.shape_cast %83 : vector<4x16xf32> to vector<4x16x1xf32>
    %85 = vector.extract_strided_slice %76 {offsets = [0, 0, 64], sizes = [4, 16, 64], strides = [1, 1, 1]} : vector<4x16x128xf32> to vector<4x16x64xf32>
    %cst_66 = arith.constant dense<0.000000e+00> : vector<4x16xf32>
    %86 = vector.multi_reduction <add>, %85, %cst_66 [2] : vector<4x16x64xf32> to vector<4x16xf32>
    %87 = vector.shape_cast %86 : vector<4x16xf32> to vector<4x16x1xf32>
    %cst_67 = arith.constant dense<0xFF800000> : vector<16x1xf32>
    %88 = vector.multi_reduction <maximumf>, %84, %cst_67 [0] : vector<4x16x1xf32> to vector<16x1xf32>
    %89 = vector.shape_cast %88 : vector<16x1xf32> to vector<1x16x1xf32>
    %90 = vector.broadcast %89 : vector<1x16x1xf32> to vector<4x16x1xf32>
    %91 = arith.subf %84, %90 : vector<4x16x1xf32>
    %92 = math.exp %91 : vector<4x16x1xf32>
    %cst_68 = arith.constant dense<0.000000e+00> : vector<16x1xf32>
    %93 = vector.multi_reduction <add>, %92, %cst_68 [0] : vector<4x16x1xf32> to vector<16x1xf32>
    %94 = vector.shape_cast %93 : vector<16x1xf32> to vector<1x16x1xf32>
    %95 = tpu.reciprocal %94 {approx = true} : vector<1x16x1xf32> -> vector<1x16x1xf32>
    %96 = vector.broadcast %95 : vector<1x16x1xf32> to vector<4x16x1xf32>
    %97 = arith.mulf %92, %96 : vector<4x16x1xf32>
    %cst_69 = arith.constant dense<0xFF800000> : vector<16x1xf32>
    %98 = vector.multi_reduction <maximumf>, %87, %cst_69 [0] : vector<4x16x1xf32> to vector<16x1xf32>
    %99 = vector.shape_cast %98 : vector<16x1xf32> to vector<1x16x1xf32>
    %100 = vector.broadcast %99 : vector<1x16x1xf32> to vector<4x16x1xf32>
    %101 = arith.subf %87, %100 : vector<4x16x1xf32>
    %102 = math.exp %101 : vector<4x16x1xf32>
    %cst_70 = arith.constant dense<0.000000e+00> : vector<16x1xf32>
    %103 = vector.multi_reduction <add>, %102, %cst_70 [0] : vector<4x16x1xf32> to vector<16x1xf32>
    %104 = vector.shape_cast %103 : vector<16x1xf32> to vector<1x16x1xf32>
    %105 = tpu.reciprocal %104 {approx = true} : vector<1x16x1xf32> -> vector<1x16x1xf32>
    %106 = vector.broadcast %105 : vector<1x16x1xf32> to vector<4x16x1xf32>
    %107 = arith.mulf %102, %106 : vector<4x16x1xf32>
    %108 = vector.extract_strided_slice %81 {offsets = [0, 0, 0], sizes = [4, 16, 64], strides = [1, 1, 1]} : vector<4x16x128xf32> to vector<4x16x64xf32>
    %109 = vector.broadcast %97 : vector<4x16x1xf32> to vector<4x16x64xf32>
    %110 = arith.mulf %109, %108 : vector<4x16x64xf32>
    %cst_71 = arith.constant dense<0.000000e+00> : vector<16x64xf32>
    %111 = vector.multi_reduction <add>, %110, %cst_71 [0] : vector<4x16x64xf32> to vector<16x64xf32>
    %c0_72 = arith.constant 0 : index
    %c0_73 = arith.constant 0 : index
    %112 = vector.load %arg6[%c0_72, %c0_73] : memref<1x128xf32, #tpu.memory_space<vmem>>, vector<1x64xf32>
    %113 = vector.broadcast %112 : vector<1x64xf32> to vector<16x64xf32>
    %114 = arith.addf %111, %113 : vector<16x64xf32>
    %115 = vector.extract_strided_slice %81 {offsets = [0, 0, 64], sizes = [4, 16, 64], strides = [1, 1, 1]} : vector<4x16x128xf32> to vector<4x16x64xf32>
    %116 = vector.broadcast %107 : vector<4x16x1xf32> to vector<4x16x64xf32>
    %117 = arith.mulf %116, %115 : vector<4x16x64xf32>
    %cst_74 = arith.constant dense<0.000000e+00> : vector<16x64xf32>
    %118 = vector.multi_reduction <add>, %117, %cst_74 [0] : vector<4x16x64xf32> to vector<16x64xf32>
    %c0_75 = arith.constant 0 : index
    %c64 = arith.constant 64 : index
    %119 = vector.load %arg6[%c0_75, %c64] : memref<1x128xf32, #tpu.memory_space<vmem>>, vector<1x64xf32>
    %120 = vector.broadcast %119 : vector<1x64xf32> to vector<16x64xf32>
    %121 = arith.addf %118, %120 : vector<16x64xf32>
    %cst_76 = arith.constant 0.000000e+00 : f32
    %122 = vector.broadcast %cst_76 : f32 to vector<4x16x128xf32>
    %cst_77 = arith.constant 0.000000e+00 : f32
    %123 = vector.broadcast %cst_77 : f32 to vector<4x16x128xf32>
    %c0_78 = arith.constant 0 : index
    %c0_79 = arith.constant 0 : index
    %c0_80 = arith.constant 0 : index
    %c0_81 = arith.constant 0 : index
    %124 = vector.load %arg3[%c0_78, %c0_79, %c0_80, %c0_81] : memref<4x7x16x128xbf16, #tpu.memory_space<vmem>>, vector<4x1x16x128xbf16>
    %125 = vector.shape_cast %124 : vector<4x1x16x128xbf16> to vector<4x16x128xbf16>
    %126 = arith.extf %125 : vector<4x16x128xbf16> to vector<4x16x128xf32>
    %c0_82 = arith.constant 0 : index
    %c0_83 = arith.constant 0 : index
    %c0_84 = arith.constant 0 : index
    %c0_85 = arith.constant 0 : index
    %127 = vector.load %arg7[%c0_82, %c0_83, %c0_84, %c0_85] : memref<1x7x1x128xf32, #tpu.memory_space<vmem>>, vector<1x1x1x128xf32>
    %128 = vector.shape_cast %127 : vector<1x1x1x128xf32> to vector<1x128xf32>
    %129 = vector.shape_cast %128 : vector<1x128xf32> to vector<1x1x128xf32>
    %130 = vector.broadcast %129 : vector<1x1x128xf32> to vector<4x16x128xf32>
    %131 = arith.mulf %126, %130 : vector<4x16x128xf32>
    %132 = arith.addf %122, %131 : vector<4x16x128xf32>
    %c0_86 = arith.constant 0 : index
    %c0_87 = arith.constant 0 : index
    %c0_88 = arith.constant 0 : index
    %c0_89 = arith.constant 0 : index
    %133 = vector.load %arg8[%c0_86, %c0_87, %c0_88, %c0_89] : memref<4x7x1x128xf32, #tpu.memory_space<vmem>>, vector<4x1x1x128xf32>
    %134 = vector.shape_cast %133 : vector<4x1x1x128xf32> to vector<4x1x128xf32>
    %135 = vector.broadcast %134 : vector<4x1x128xf32> to vector<4x16x128xf32>
    %136 = arith.mulf %126, %135 : vector<4x16x128xf32>
    %137 = arith.addf %123, %136 : vector<4x16x128xf32>
    %c0_90 = arith.constant 0 : index
    %c1_91 = arith.constant 1 : index
    %c0_92 = arith.constant 0 : index
    %c0_93 = arith.constant 0 : index
    %138 = vector.load %arg3[%c0_90, %c1_91, %c0_92, %c0_93] : memref<4x7x16x128xbf16, #tpu.memory_space<vmem>>, vector<4x1x16x128xbf16>
    %139 = vector.shape_cast %138 : vector<4x1x16x128xbf16> to vector<4x16x128xbf16>
    %140 = arith.extf %139 : vector<4x16x128xbf16> to vector<4x16x128xf32>
    %c0_94 = arith.constant 0 : index
    %c1_95 = arith.constant 1 : index
    %c0_96 = arith.constant 0 : index
    %c0_97 = arith.constant 0 : index
    %141 = vector.load %arg7[%c0_94, %c1_95, %c0_96, %c0_97] : memref<1x7x1x128xf32, #tpu.memory_space<vmem>>, vector<1x1x1x128xf32>
    %142 = vector.shape_cast %141 : vector<1x1x1x128xf32> to vector<1x128xf32>
    %143 = vector.shape_cast %142 : vector<1x128xf32> to vector<1x1x128xf32>
    %144 = vector.broadcast %143 : vector<1x1x128xf32> to vector<4x16x128xf32>
    %145 = arith.mulf %140, %144 : vector<4x16x128xf32>
    %146 = arith.addf %132, %145 : vector<4x16x128xf32>
    %c0_98 = arith.constant 0 : index
    %c1_99 = arith.constant 1 : index
    %c0_100 = arith.constant 0 : index
    %c0_101 = arith.constant 0 : index
    %147 = vector.load %arg8[%c0_98, %c1_99, %c0_100, %c0_101] : memref<4x7x1x128xf32, #tpu.memory_space<vmem>>, vector<4x1x1x128xf32>
    %148 = vector.shape_cast %147 : vector<4x1x1x128xf32> to vector<4x1x128xf32>
    %149 = vector.broadcast %148 : vector<4x1x128xf32> to vector<4x16x128xf32>
    %150 = arith.mulf %140, %149 : vector<4x16x128xf32>
    %151 = arith.addf %137, %150 : vector<4x16x128xf32>
    %c0_102 = arith.constant 0 : index
    %c2_103 = arith.constant 2 : index
    %c0_104 = arith.constant 0 : index
    %c0_105 = arith.constant 0 : index
    %152 = vector.load %arg3[%c0_102, %c2_103, %c0_104, %c0_105] : memref<4x7x16x128xbf16, #tpu.memory_space<vmem>>, vector<4x1x16x128xbf16>
    %153 = vector.shape_cast %152 : vector<4x1x16x128xbf16> to vector<4x16x128xbf16>
    %154 = arith.extf %153 : vector<4x16x128xbf16> to vector<4x16x128xf32>
    %c0_106 = arith.constant 0 : index
    %c2_107 = arith.constant 2 : index
    %c0_108 = arith.constant 0 : index
    %c0_109 = arith.constant 0 : index
    %155 = vector.load %arg7[%c0_106, %c2_107, %c0_108, %c0_109] : memref<1x7x1x128xf32, #tpu.memory_space<vmem>>, vector<1x1x1x128xf32>
    %156 = vector.shape_cast %155 : vector<1x1x1x128xf32> to vector<1x128xf32>
    %157 = vector.shape_cast %156 : vector<1x128xf32> to vector<1x1x128xf32>
    %158 = vector.broadcast %157 : vector<1x1x128xf32> to vector<4x16x128xf32>
    %159 = arith.mulf %154, %158 : vector<4x16x128xf32>
    %160 = arith.addf %146, %159 : vector<4x16x128xf32>
    %c0_110 = arith.constant 0 : index
    %c2_111 = arith.constant 2 : index
    %c0_112 = arith.constant 0 : index
    %c0_113 = arith.constant 0 : index
    %161 = vector.load %arg8[%c0_110, %c2_111, %c0_112, %c0_113] : memref<4x7x1x128xf32, #tpu.memory_space<vmem>>, vector<4x1x1x128xf32>
    %162 = vector.shape_cast %161 : vector<4x1x1x128xf32> to vector<4x1x128xf32>
    %163 = vector.broadcast %162 : vector<4x1x128xf32> to vector<4x16x128xf32>
    %164 = arith.mulf %154, %163 : vector<4x16x128xf32>
    %165 = arith.addf %151, %164 : vector<4x16x128xf32>
    %c0_114 = arith.constant 0 : index
    %c3_115 = arith.constant 3 : index
    %c0_116 = arith.constant 0 : index
    %c0_117 = arith.constant 0 : index
    %166 = vector.load %arg3[%c0_114, %c3_115, %c0_116, %c0_117] : memref<4x7x16x128xbf16, #tpu.memory_space<vmem>>, vector<4x1x16x128xbf16>
    %167 = vector.shape_cast %166 : vector<4x1x16x128xbf16> to vector<4x16x128xbf16>
    %168 = arith.extf %167 : vector<4x16x128xbf16> to vector<4x16x128xf32>
    %c0_118 = arith.constant 0 : index
    %c3_119 = arith.constant 3 : index
    %c0_120 = arith.constant 0 : index
    %c0_121 = arith.constant 0 : index
    %169 = vector.load %arg7[%c0_118, %c3_119, %c0_120, %c0_121] : memref<1x7x1x128xf32, #tpu.memory_space<vmem>>, vector<1x1x1x128xf32>
    %170 = vector.shape_cast %169 : vector<1x1x1x128xf32> to vector<1x128xf32>
    %171 = vector.shape_cast %170 : vector<1x128xf32> to vector<1x1x128xf32>
    %172 = vector.broadcast %171 : vector<1x1x128xf32> to vector<4x16x128xf32>
    %173 = arith.mulf %168, %172 : vector<4x16x128xf32>
    %174 = arith.addf %160, %173 : vector<4x16x128xf32>
    %c0_122 = arith.constant 0 : index
    %c3_123 = arith.constant 3 : index
    %c0_124 = arith.constant 0 : index
    %c0_125 = arith.constant 0 : index
    %175 = vector.load %arg8[%c0_122, %c3_123, %c0_124, %c0_125] : memref<4x7x1x128xf32, #tpu.memory_space<vmem>>, vector<4x1x1x128xf32>
    %176 = vector.shape_cast %175 : vector<4x1x1x128xf32> to vector<4x1x128xf32>
    %177 = vector.broadcast %176 : vector<4x1x128xf32> to vector<4x16x128xf32>
    %178 = arith.mulf %168, %177 : vector<4x16x128xf32>
    %179 = arith.addf %165, %178 : vector<4x16x128xf32>
    %c0_126 = arith.constant 0 : index
    %c4_127 = arith.constant 4 : index
    %c0_128 = arith.constant 0 : index
    %c0_129 = arith.constant 0 : index
    %180 = vector.load %arg3[%c0_126, %c4_127, %c0_128, %c0_129] : memref<4x7x16x128xbf16, #tpu.memory_space<vmem>>, vector<4x1x16x128xbf16>
    %181 = vector.shape_cast %180 : vector<4x1x16x128xbf16> to vector<4x16x128xbf16>
    %182 = arith.extf %181 : vector<4x16x128xbf16> to vector<4x16x128xf32>
    %c0_130 = arith.constant 0 : index
    %c4_131 = arith.constant 4 : index
    %c0_132 = arith.constant 0 : index
    %c0_133 = arith.constant 0 : index
    %183 = vector.load %arg7[%c0_130, %c4_131, %c0_132, %c0_133] : memref<1x7x1x128xf32, #tpu.memory_space<vmem>>, vector<1x1x1x128xf32>
    %184 = vector.shape_cast %183 : vector<1x1x1x128xf32> to vector<1x128xf32>
    %185 = vector.shape_cast %184 : vector<1x128xf32> to vector<1x1x128xf32>
    %186 = vector.broadcast %185 : vector<1x1x128xf32> to vector<4x16x128xf32>
    %187 = arith.mulf %182, %186 : vector<4x16x128xf32>
    %188 = arith.addf %174, %187 : vector<4x16x128xf32>
    %c0_134 = arith.constant 0 : index
    %c4_135 = arith.constant 4 : index
    %c0_136 = arith.constant 0 : index
    %c0_137 = arith.constant 0 : index
    %189 = vector.load %arg8[%c0_134, %c4_135, %c0_136, %c0_137] : memref<4x7x1x128xf32, #tpu.memory_space<vmem>>, vector<4x1x1x128xf32>
    %190 = vector.shape_cast %189 : vector<4x1x1x128xf32> to vector<4x1x128xf32>
    %191 = vector.broadcast %190 : vector<4x1x128xf32> to vector<4x16x128xf32>
    %192 = arith.mulf %182, %191 : vector<4x16x128xf32>
    %193 = arith.addf %179, %192 : vector<4x16x128xf32>
    %c0_138 = arith.constant 0 : index
    %c5 = arith.constant 5 : index
    %c0_139 = arith.constant 0 : index
    %c0_140 = arith.constant 0 : index
    %194 = vector.load %arg3[%c0_138, %c5, %c0_139, %c0_140] : memref<4x7x16x128xbf16, #tpu.memory_space<vmem>>, vector<4x1x16x128xbf16>
    %195 = vector.shape_cast %194 : vector<4x1x16x128xbf16> to vector<4x16x128xbf16>
    %196 = arith.extf %195 : vector<4x16x128xbf16> to vector<4x16x128xf32>
    %c0_141 = arith.constant 0 : index
    %c5_142 = arith.constant 5 : index
    %c0_143 = arith.constant 0 : index
    %c0_144 = arith.constant 0 : index
    %197 = vector.load %arg7[%c0_141, %c5_142, %c0_143, %c0_144] : memref<1x7x1x128xf32, #tpu.memory_space<vmem>>, vector<1x1x1x128xf32>
    %198 = vector.shape_cast %197 : vector<1x1x1x128xf32> to vector<1x128xf32>
    %199 = vector.shape_cast %198 : vector<1x128xf32> to vector<1x1x128xf32>
    %200 = vector.broadcast %199 : vector<1x1x128xf32> to vector<4x16x128xf32>
    %201 = arith.mulf %196, %200 : vector<4x16x128xf32>
    %202 = arith.addf %188, %201 : vector<4x16x128xf32>
    %c0_145 = arith.constant 0 : index
    %c5_146 = arith.constant 5 : index
    %c0_147 = arith.constant 0 : index
    %c0_148 = arith.constant 0 : index
    %203 = vector.load %arg8[%c0_145, %c5_146, %c0_147, %c0_148] : memref<4x7x1x128xf32, #tpu.memory_space<vmem>>, vector<4x1x1x128xf32>
    %204 = vector.shape_cast %203 : vector<4x1x1x128xf32> to vector<4x1x128xf32>
    %205 = vector.broadcast %204 : vector<4x1x128xf32> to vector<4x16x128xf32>
    %206 = arith.mulf %196, %205 : vector<4x16x128xf32>
    %207 = arith.addf %193, %206 : vector<4x16x128xf32>
    %c0_149 = arith.constant 0 : index
    %c6 = arith.constant 6 : index
    %c0_150 = arith.constant 0 : index
    %c0_151 = arith.constant 0 : index
    %208 = vector.load %arg3[%c0_149, %c6, %c0_150, %c0_151] : memref<4x7x16x128xbf16, #tpu.memory_space<vmem>>, vector<4x1x16x128xbf16>
    %209 = vector.shape_cast %208 : vector<4x1x16x128xbf16> to vector<4x16x128xbf16>
    %210 = arith.extf %209 : vector<4x16x128xbf16> to vector<4x16x128xf32>
    %c0_152 = arith.constant 0 : index
    %c6_153 = arith.constant 6 : index
    %c0_154 = arith.constant 0 : index
    %c0_155 = arith.constant 0 : index
    %211 = vector.load %arg7[%c0_152, %c6_153, %c0_154, %c0_155] : memref<1x7x1x128xf32, #tpu.memory_space<vmem>>, vector<1x1x1x128xf32>
    %212 = vector.shape_cast %211 : vector<1x1x1x128xf32> to vector<1x128xf32>
    %213 = vector.shape_cast %212 : vector<1x128xf32> to vector<1x1x128xf32>
    %214 = vector.broadcast %213 : vector<1x1x128xf32> to vector<4x16x128xf32>
    %215 = arith.mulf %210, %214 : vector<4x16x128xf32>
    %216 = arith.addf %202, %215 : vector<4x16x128xf32>
    %c0_156 = arith.constant 0 : index
    %c6_157 = arith.constant 6 : index
    %c0_158 = arith.constant 0 : index
    %c0_159 = arith.constant 0 : index
    %217 = vector.load %arg8[%c0_156, %c6_157, %c0_158, %c0_159] : memref<4x7x1x128xf32, #tpu.memory_space<vmem>>, vector<4x1x1x128xf32>
    %218 = vector.shape_cast %217 : vector<4x1x1x128xf32> to vector<4x1x128xf32>
    %219 = vector.broadcast %218 : vector<4x1x128xf32> to vector<4x16x128xf32>
    %220 = arith.mulf %210, %219 : vector<4x16x128xf32>
    %221 = arith.addf %207, %220 : vector<4x16x128xf32>
    %222 = vector.extract_strided_slice %216 {offsets = [0, 0, 0], sizes = [4, 16, 64], strides = [1, 1, 1]} : vector<4x16x128xf32> to vector<4x16x64xf32>
    %cst_160 = arith.constant dense<0.000000e+00> : vector<4x16xf32>
    %223 = vector.multi_reduction <add>, %222, %cst_160 [2] : vector<4x16x64xf32> to vector<4x16xf32>
    %224 = vector.shape_cast %223 : vector<4x16xf32> to vector<4x16x1xf32>
    %225 = vector.extract_strided_slice %216 {offsets = [0, 0, 64], sizes = [4, 16, 64], strides = [1, 1, 1]} : vector<4x16x128xf32> to vector<4x16x64xf32>
    %cst_161 = arith.constant dense<0.000000e+00> : vector<4x16xf32>
    %226 = vector.multi_reduction <add>, %225, %cst_161 [2] : vector<4x16x64xf32> to vector<4x16xf32>
    %227 = vector.shape_cast %226 : vector<4x16xf32> to vector<4x16x1xf32>
    %cst_162 = arith.constant dense<0xFF800000> : vector<16x1xf32>
    %228 = vector.multi_reduction <maximumf>, %224, %cst_162 [0] : vector<4x16x1xf32> to vector<16x1xf32>
    %229 = vector.shape_cast %228 : vector<16x1xf32> to vector<1x16x1xf32>
    %230 = vector.broadcast %229 : vector<1x16x1xf32> to vector<4x16x1xf32>
    %231 = arith.subf %224, %230 : vector<4x16x1xf32>
    %232 = math.exp %231 : vector<4x16x1xf32>
    %cst_163 = arith.constant dense<0.000000e+00> : vector<16x1xf32>
    %233 = vector.multi_reduction <add>, %232, %cst_163 [0] : vector<4x16x1xf32> to vector<16x1xf32>
    %234 = vector.shape_cast %233 : vector<16x1xf32> to vector<1x16x1xf32>
    %235 = tpu.reciprocal %234 {approx = true} : vector<1x16x1xf32> -> vector<1x16x1xf32>
    %236 = vector.broadcast %235 : vector<1x16x1xf32> to vector<4x16x1xf32>
    %237 = arith.mulf %232, %236 : vector<4x16x1xf32>
    %cst_164 = arith.constant dense<0xFF800000> : vector<16x1xf32>
    %238 = vector.multi_reduction <maximumf>, %227, %cst_164 [0] : vector<4x16x1xf32> to vector<16x1xf32>
    %239 = vector.shape_cast %238 : vector<16x1xf32> to vector<1x16x1xf32>
    %240 = vector.broadcast %239 : vector<1x16x1xf32> to vector<4x16x1xf32>
    %241 = arith.subf %227, %240 : vector<4x16x1xf32>
    %242 = math.exp %241 : vector<4x16x1xf32>
    %cst_165 = arith.constant dense<0.000000e+00> : vector<16x1xf32>
    %243 = vector.multi_reduction <add>, %242, %cst_165 [0] : vector<4x16x1xf32> to vector<16x1xf32>
    %244 = vector.shape_cast %243 : vector<16x1xf32> to vector<1x16x1xf32>
    %245 = tpu.reciprocal %244 {approx = true} : vector<1x16x1xf32> -> vector<1x16x1xf32>
    %246 = vector.broadcast %245 : vector<1x16x1xf32> to vector<4x16x1xf32>
    %247 = arith.mulf %242, %246 : vector<4x16x1xf32>
    %248 = vector.extract_strided_slice %221 {offsets = [0, 0, 0], sizes = [4, 16, 64], strides = [1, 1, 1]} : vector<4x16x128xf32> to vector<4x16x64xf32>
    %249 = vector.broadcast %237 : vector<4x16x1xf32> to vector<4x16x64xf32>
    %250 = arith.mulf %249, %248 : vector<4x16x64xf32>
    %cst_166 = arith.constant dense<0.000000e+00> : vector<16x64xf32>
    %251 = vector.multi_reduction <add>, %250, %cst_166 [0] : vector<4x16x64xf32> to vector<16x64xf32>
    %c0_167 = arith.constant 0 : index
    %c0_168 = arith.constant 0 : index
    %252 = vector.load %arg9[%c0_167, %c0_168] : memref<1x128xf32, #tpu.memory_space<vmem>>, vector<1x64xf32>
    %253 = vector.broadcast %252 : vector<1x64xf32> to vector<16x64xf32>
    %254 = arith.addf %251, %253 : vector<16x64xf32>
    %255 = vector.extract_strided_slice %221 {offsets = [0, 0, 64], sizes = [4, 16, 64], strides = [1, 1, 1]} : vector<4x16x128xf32> to vector<4x16x64xf32>
    %256 = vector.broadcast %247 : vector<4x16x1xf32> to vector<4x16x64xf32>
    %257 = arith.mulf %256, %255 : vector<4x16x64xf32>
    %cst_169 = arith.constant dense<0.000000e+00> : vector<16x64xf32>
    %258 = vector.multi_reduction <add>, %257, %cst_169 [0] : vector<4x16x64xf32> to vector<16x64xf32>
    %c0_170 = arith.constant 0 : index
    %c64_171 = arith.constant 64 : index
    %259 = vector.load %arg9[%c0_170, %c64_171] : memref<1x128xf32, #tpu.memory_space<vmem>>, vector<1x64xf32>
    %260 = vector.broadcast %259 : vector<1x64xf32> to vector<16x64xf32>
    %261 = arith.addf %258, %260 : vector<16x64xf32>
    %c0_172 = arith.constant 0 : index
    %c0_173 = arith.constant 0 : index
    %262 = vector.load %arg12[%c0_172, %c0_173] : memref<128x64xf32, #tpu.memory_space<vmem>>, vector<64x64xf32>
    %cst_174 = arith.constant dense<0.000000e+00> : vector<16x64xf32>
    %263 = tpu.matmul %114, %262, %cst_174 {dimension_numbers = #tpu.dot_dimension_numbers<[1], [0], [0], [1], [0, 0, 1, 1], [], []>} : vector<16x64xf32>, vector<64x64xf32>, vector<16x64xf32> -> vector<16x64xf32>
    %c64_175 = arith.constant 64 : index
    %c0_176 = arith.constant 0 : index
    %264 = vector.load %arg12[%c64_175, %c0_176] : memref<128x64xf32, #tpu.memory_space<vmem>>, vector<64x64xf32>
    %cst_177 = arith.constant dense<0.000000e+00> : vector<16x64xf32>
    %265 = tpu.matmul %121, %264, %cst_177 {dimension_numbers = #tpu.dot_dimension_numbers<[1], [0], [0], [1], [0, 0, 1, 1], [], []>} : vector<16x64xf32>, vector<64x64xf32>, vector<16x64xf32> -> vector<16x64xf32>
    %266 = arith.addf %263, %265 : vector<16x64xf32>
    %c0_178 = arith.constant 0 : index
    %c0_179 = arith.constant 0 : index
    %267 = vector.load %arg13[%c0_178, %c0_179] : memref<1x64xf32, #tpu.memory_space<vmem>>, vector<1x64xf32>
    %268 = vector.broadcast %267 : vector<1x64xf32> to vector<16x64xf32>
    %269 = arith.addf %266, %268 : vector<16x64xf32>
    %270 = arith.negf %269 : vector<16x64xf32>
    %271 = math.exp %270 : vector<16x64xf32>
    %cst_180 = arith.constant 1.000000e+00 : f32
    %272 = vector.broadcast %cst_180 : f32 to vector<16x64xf32>
    %273 = arith.addf %272, %271 : vector<16x64xf32>
    %274 = arith.divf %272, %273 : vector<16x64xf32>
    %275 = arith.mulf %274, %114 : vector<16x64xf32>
    %cst_181 = arith.constant 1.000000e+00 : f32
    %276 = vector.broadcast %cst_181 : f32 to vector<16x64xf32>
    %277 = arith.subf %276, %274 : vector<16x64xf32>
    %278 = arith.mulf %277, %121 : vector<16x64xf32>
    %279 = arith.addf %275, %278 : vector<16x64xf32>
    %c0_182 = arith.constant 0 : index
    %c0_183 = arith.constant 0 : index
    %280 = vector.load %arg16[%c0_182, %c0_183] : memref<16x256xf32, #tpu.memory_space<vmem>>, vector<16x64xf32>
    tpu.vector_store %arg16[%c0_182, %c0_183], %279 {strides = array<i32>} : memref<16x256xf32, #tpu.memory_space<vmem>>, vector<16x64xf32>,
    %c0_184 = arith.constant 0 : index
    %c0_185 = arith.constant 0 : index
    %281 = vector.load %arg14[%c0_184, %c0_185] : memref<128x64xf32, #tpu.memory_space<vmem>>, vector<64x64xf32>
    %cst_186 = arith.constant dense<0.000000e+00> : vector<16x64xf32>
    %282 = tpu.matmul %254, %281, %cst_186 {dimension_numbers = #tpu.dot_dimension_numbers<[1], [0], [0], [1], [0, 0, 1, 1], [], []>} : vector<16x64xf32>, vector<64x64xf32>, vector<16x64xf32> -> vector<16x64xf32>
    %c64_187 = arith.constant 64 : index
    %c0_188 = arith.constant 0 : index
    %283 = vector.load %arg14[%c64_187, %c0_188] : memref<128x64xf32, #tpu.memory_space<vmem>>, vector<64x64xf32>
    %cst_189 = arith.constant dense<0.000000e+00> : vector<16x64xf32>
    %284 = tpu.matmul %261, %283, %cst_189 {dimension_numbers = #tpu.dot_dimension_numbers<[1], [0], [0], [1], [0, 0, 1, 1], [], []>} : vector<16x64xf32>, vector<64x64xf32>, vector<16x64xf32> -> vector<16x64xf32>
    %285 = arith.addf %282, %284 : vector<16x64xf32>
    %c0_190 = arith.constant 0 : index
    %c0_191 = arith.constant 0 : index
    %286 = vector.load %arg15[%c0_190, %c0_191] : memref<1x64xf32, #tpu.memory_space<vmem>>, vector<1x64xf32>
    %287 = vector.broadcast %286 : vector<1x64xf32> to vector<16x64xf32>
    %288 = arith.addf %285, %287 : vector<16x64xf32>
    %289 = arith.negf %288 : vector<16x64xf32>
    %290 = math.exp %289 : vector<16x64xf32>
    %cst_192 = arith.constant 1.000000e+00 : f32
    %291 = vector.broadcast %cst_192 : f32 to vector<16x64xf32>
    %292 = arith.addf %291, %290 : vector<16x64xf32>
    %293 = arith.divf %291, %292 : vector<16x64xf32>
    %294 = arith.mulf %293, %254 : vector<16x64xf32>
    %cst_193 = arith.constant 1.000000e+00 : f32
    %295 = vector.broadcast %cst_193 : f32 to vector<16x64xf32>
    %296 = arith.subf %295, %293 : vector<16x64xf32>
    %297 = arith.mulf %296, %261 : vector<16x64xf32>
    %298 = arith.addf %294, %297 : vector<16x64xf32>
    %c0_194 = arith.constant 0 : index
    %c64_195 = arith.constant 64 : index
    %299 = vector.load %arg16[%c0_194, %c64_195] : memref<16x256xf32, #tpu.memory_space<vmem>>, vector<16x64xf32>
    tpu.vector_store %arg16[%c0_194, %c64_195], %298 {strides = array<i32>} : memref<16x256xf32, #tpu.memory_space<vmem>>, vector<16x64xf32>,
    return
  }
  func.func @transform_0(%arg0: i32) -> (i32, i32) {
    %c0_i32 = arith.constant 0 : i32
    %c0_i32_0 = arith.constant 0 : i32
    return %arg0, %c0_i32 : i32, i32
  }
  func.func @transform_1(%arg0: i32) -> (i32, i32, i32, i32) {
    %c0_i32 = arith.constant 0 : i32
    %c0_i32_0 = arith.constant 0 : i32
    %c0_i32_1 = arith.constant 0 : i32
    %c0_i32_2 = arith.constant 0 : i32
    return %c0_i32, %c0_i32_0, %arg0, %c0_i32_1 : i32, i32, i32, i32
  }
  func.func @transform_2(%arg0: i32) -> (i32, i32, i32, i32) {
    %c0_i32 = arith.constant 0 : i32
    %c0_i32_0 = arith.constant 0 : i32
    %c0_i32_1 = arith.constant 0 : i32
    %c0_i32_2 = arith.constant 0 : i32
    return %c0_i32, %c0_i32_0, %arg0, %c0_i32_1 : i32, i32, i32, i32
  }
  func.func @transform_3(%arg0: i32) -> (i32, i32, i32, i32) {
    %c0_i32 = arith.constant 0 : i32
    %c0_i32_0 = arith.constant 0 : i32
    %c0_i32_1 = arith.constant 0 : i32
    %c0_i32_2 = arith.constant 0 : i32
    %c0_i32_3 = arith.constant 0 : i32
    return %c0_i32, %c0_i32_0, %c0_i32_1, %c0_i32_2 : i32, i32, i32, i32
  }
  func.func @transform_4(%arg0: i32) -> (i32, i32, i32, i32) {
    %c0_i32 = arith.constant 0 : i32
    %c0_i32_0 = arith.constant 0 : i32
    %c0_i32_1 = arith.constant 0 : i32
    %c0_i32_2 = arith.constant 0 : i32
    %c0_i32_3 = arith.constant 0 : i32
    return %c0_i32, %c0_i32_0, %c0_i32_1, %c0_i32_2 : i32, i32, i32, i32
  }
  func.func @transform_5(%arg0: i32) -> (i32, i32) {
    %c0_i32 = arith.constant 0 : i32
    %c0_i32_0 = arith.constant 0 : i32
    %c0_i32_1 = arith.constant 0 : i32
    return %c0_i32, %c0_i32_0 : i32, i32
  }
  func.func @transform_6(%arg0: i32) -> (i32, i32, i32, i32) {
    %c0_i32 = arith.constant 0 : i32
    %c0_i32_0 = arith.constant 0 : i32
    %c0_i32_1 = arith.constant 0 : i32
    %c0_i32_2 = arith.constant 0 : i32
    %c0_i32_3 = arith.constant 0 : i32
    return %c0_i32, %c0_i32_0, %c0_i32_1, %c0_i32_2 : i32, i32, i32, i32
  }
  func.func @transform_7(%arg0: i32) -> (i32, i32, i32, i32) {
    %c0_i32 = arith.constant 0 : i32
    %c0_i32_0 = arith.constant 0 : i32
    %c0_i32_1 = arith.constant 0 : i32
    %c0_i32_2 = arith.constant 0 : i32
    %c0_i32_3 = arith.constant 0 : i32
    return %c0_i32, %c0_i32_0, %c0_i32_1, %c0_i32_2 : i32, i32, i32, i32
  }
  func.func @transform_8(%arg0: i32) -> (i32, i32) {
    %c0_i32 = arith.constant 0 : i32
    %c0_i32_0 = arith.constant 0 : i32
    %c0_i32_1 = arith.constant 0 : i32
    return %c0_i32, %c0_i32_0 : i32, i32
  }
  func.func @transform_9(%arg0: i32) -> (i32, i32) {
    %c0_i32 = arith.constant 0 : i32
    %c0_i32_0 = arith.constant 0 : i32
    %c0_i32_1 = arith.constant 0 : i32
    return %c0_i32, %c0_i32_0 : i32, i32
  }
  func.func @transform_10(%arg0: i32) -> (i32, i32) {
    %c0_i32 = arith.constant 0 : i32
    %c0_i32_0 = arith.constant 0 : i32
    %c0_i32_1 = arith.constant 0 : i32
    return %c0_i32, %c0_i32_0 : i32, i32
  }
  func.func @transform_11(%arg0: i32) -> (i32, i32) {
    %c0_i32 = arith.constant 0 : i32
    %c0_i32_0 = arith.constant 0 : i32
    %c0_i32_1 = arith.constant 0 : i32
    return %c0_i32, %c0_i32_0 : i32, i32
  }
  func.func @transform_12(%arg0: i32) -> (i32, i32) {
    %c0_i32 = arith.constant 0 : i32
    %c0_i32_0 = arith.constant 0 : i32
    %c0_i32_1 = arith.constant 0 : i32
    return %c0_i32, %c0_i32_0 : i32, i32
  }
  func.func @transform_13(%arg0: i32) -> (i32, i32) {
    %c0_i32 = arith.constant 0 : i32
    %c0_i32_0 = arith.constant 0 : i32
    %c0_i32_1 = arith.constant 0 : i32
    return %c0_i32, %c0_i32_0 : i32, i32
  }
  func.func @transform_14(%arg0: i32) -> (i32, i32) {
    %c0_i32 = arith.constant 0 : i32
    %c0_i32_0 = arith.constant 0 : i32
    %c0_i32_1 = arith.constant 0 : i32
    return %c0_i32, %c0_i32_0 : i32, i32
  }
  func.func @transform_15(%arg0: i32) -> (i32, i32) {
    %c0_i32 = arith.constant 0 : i32
    %c0_i32_0 = arith.constant 0 : i32
    return %arg0, %c0_i32 : i32, i32
  }
}

</mosaic_0001>

<llo_original>
// kernel: feature_model_forward.1
$region0: #{feature_model_forward.1}
  #allocation0 [shape = 'u32[]', space=smem, size = 0x4, offset = 0x4, fixed_abs, tag = 'smem constant byte address 0x4 - core index']
  #allocation1 [shape = 'u32[144,128]{1,0:T(1,128)}', space=vmem, size = 0x12000, scoped, tag = 'internal scratch']
  %s0 = inlined_call_operand.hbm [shape: bf16[16,768], index: 0, kind: input, shape index: {}]
  %s1 = inlined_call_operand.hbm [shape: bf16[4,5,16,128], index: 1, kind: input, shape index: {}]
  %s2 = inlined_call_operand.hbm [shape: bf16[4,7,16,128], index: 2, kind: input, shape index: {}]
  %s3 = inlined_call_operand.hbm [shape: f32[1,5,1,128], index: 3, kind: input, shape index: {}]
  %s4 = inlined_call_operand.hbm [shape: f32[4,5,1,128], index: 4, kind: input, shape index: {}]
  %s5 = inlined_call_operand.hbm [shape: f32[1,128], index: 5, kind: input, shape index: {}]
  %s6 = inlined_call_operand.hbm [shape: f32[1,7,1,128], index: 6, kind: input, shape index: {}]
  %s7 = inlined_call_operand.hbm [shape: f32[4,7,1,128], index: 7, kind: input, shape index: {}]
  %s8 = inlined_call_operand.hbm [shape: f32[1,128], index: 8, kind: input, shape index: {}]
  %s9 = inlined_call_operand.hbm [shape: f32[768,128], index: 9, kind: input, shape index: {}]
  %s10 = inlined_call_operand.hbm [shape: f32[1,128], index: 10, kind: input, shape index: {}]
  %s11 = inlined_call_operand.hbm [shape: f32[128,64], index: 11, kind: input, shape index: {}]
  %s12 = inlined_call_operand.hbm [shape: f32[1,64], index: 12, kind: input, shape index: {}]
  %s13 = inlined_call_operand.hbm [shape: f32[128,64], index: 13, kind: input, shape index: {}]
  %s14 = inlined_call_operand.hbm [shape: f32[1,64], index: 14, kind: input, shape index: {}]
  %s15 = inlined_call_operand.hbm [shape: f32[16,256], index: 15, kind: output, shape index: {}]
  %s16 = sld [smem:[#allocation0]]
  $region130: #{feature_model_forward.1} parent=0
    _
  %s18 = ssub.s32 1, %s16
  %s19 = scalar_select 0, %s18, %s16
  $region1: #{feature_model_forward.1} parent=0
    #allocation2 [shape = 'u8[24576]{0}', space=vmem, size = 0x6000, scoped, tag = 'input window, operand 0, single buffered']
    #allocation3 [shape = 's32[1]{0}', space=sflag, size = 0x4, scoped, tag = 'scoped memory for feature_model_forward.1']
    #allocation4 [shape = 's32[1]{0}', space=sflag, size = 0x4, scoped, tag = 'scoped memory for feature_model_forward.1']
    #allocation5 [shape = 'u8[81920]{0}', space=vmem, size = 0x14000, scoped, tag = 'input window, operand 1, single buffered']
    #allocation6 [shape = 's32[1]{0}', space=sflag, size = 0x4, scoped, tag = 'scoped memory for feature_model_forward.1']
    #allocation7 [shape = 'u8[114688]{0}', space=vmem, size = 0x1c000, scoped, tag = 'input window, operand 2, single buffered']
    #allocation8 [shape = 'u8[2560]{0}', space=vmem, size = 0xc00, scoped, tag = 'input window, operand 3, single buffered']
    #allocation9 [shape = 's32[1]{0}', space=sflag, size = 0x4, scoped, tag = 'scoped memory for feature_model_forward.1']
    #allocation10 [shape = 'u8[10240]{0}', space=vmem, size = 0x2800, scoped, tag = 'input window, operand 4, single buffered']
    #allocation11 [shape = 'u8[512]{0}', space=vmem, size = 0x400, scoped, tag = 'input window, operand 5, single buffered']
    #allocation12 [shape = 's32[1]{0}', space=sflag, size = 0x4, scoped, tag = 'scoped memory for feature_model_forward.1']
    #allocation13 [shape = 'u8[3584]{0}', space=vmem, size = 0x1000, scoped, tag = 'input window, operand 6, single buffered']
    #allocation14 [shape = 'u8[14336]{0}', space=vmem, size = 0x3800, scoped, tag = 'input window, operand 7, single buffered']
    #allocation15 [shape = 's32[1]{0}', space=sflag, size = 0x4, scoped, tag = 'scoped memory for feature_model_forward.1']
    #allocation16 [shape = 'u8[512]{0}', space=vmem, size = 0x400, scoped, tag = 'input window, operand 8, single buffered']
    #allocation17 [shape = 'u8[393216]{0}', space=vmem, size = 0x60000, scoped, tag = 'input window, operand 9, single buffered']
    #allocation18 [shape = 's32[1]{0}', space=sflag, size = 0x4, scoped, tag = 'scoped memory for feature_model_forward.1']
    #allocation19 [shape = 'u8[512]{0}', space=vmem, size = 0x400, scoped, tag = 'input window, operand 10, single buffered']
    #allocation20 [shape = 'u8[65536]{0}', space=vmem, size = 0x10000, scoped, tag = 'input window, operand 11, single buffered']
    #allocation21 [shape = 's32[1]{0}', space=sflag, size = 0x4, scoped, tag = 'scoped memory for feature_model_forward.1']
    #allocation22 [shape = 'u8[512]{0}', space=vmem, size = 0x400, scoped, tag = 'input window, operand 12, single buffered']
    #allocation23 [shape = 'u8[65536]{0}', space=vmem, size = 0x10000, scoped, tag = 'input window, operand 13, single buffered']
    #allocation24 [shape = 's32[1]{0}', space=sflag, size = 0x4, scoped, tag = 'scoped memory for feature_model_forward.1']
    #allocation25 [shape = 'u8[512]{0}', space=vmem, size = 0x400, scoped, tag = 'input window, operand 14, single buffered']
    #allocation26 [shape = 'u8[16384]{0}', space=vmem, size = 0x4000, scoped, tag = 'output window, operand 0, single buffered']
    %20 = vsyncpa [#allocation3], 0
    %21 = vsyncpa [#allocation6], 0
    %22 = vsyncpa [#allocation9], 0
    %23 = vsyncpa [#allocation12], 0
    %24 = vsyncpa [#allocation15], 0
    %25 = vsyncpa [#allocation18], 0
    %26 = vsyncpa [#allocation21], 0
    %27 = vsyncpa [#allocation24], 0
    %28 = vsyncpa [#allocation4], 0
    // Predicated region
    $region2: #{feature_model_forward.1} parent=1 // pred_check
      _
    $region3: #{feature_model_forward.1} parent=1 // pred_check_branch
      %30 = sbr.rel (0) target = $region5
    $region4: #{feature_model_forward.1} parent=1 // pred_region
      %s32 = ssub.s32 768, 768
      %33 = vsyncadd [#allocation3], %s32
      %s34 = sshll.u32 [#allocation2], 4
      %s35 = int_to_ptr.vmem [resolvable:$true] %s34
      %40 = dma.hbm_to_vmem [thread:$0]  %s0, 768, %s35, [#allocation3], 384, 384, 24
    $region5: #{feature_model_forward.1} parent=1 // pred_fallthru
      _
    // Predicated region
    $region6: #{feature_model_forward.1} parent=1 // pred_check
      _
    $region7: #{feature_model_forward.1} parent=1 // pred_check_branch
      %42 = sbr.rel (0) target = $region9
    $region8: #{feature_model_forward.1} parent=1 // pred_region
      %s44 = ssub.s32 2560, 2560
      %45 = vsyncadd [#allocation6], %s44
      %s46 = sshll.u32 [#allocation5], 4
      %s47 = int_to_ptr.vmem [resolvable:$true] %s46
      %52 = dma.hbm_to_vmem [thread:$0]  %s1, 2560, %s47, [#allocation6], 64, 64, 4
    $region9: #{feature_model_forward.1} parent=1 // pred_fallthru
      _
    // Predicated region
    $region10: #{feature_model_forward.1} parent=1 // pred_check
      _
    $region11: #{feature_model_forward.1} parent=1 // pred_check_branch
      %54 = sbr.rel (0) target = $region13
    $region12: #{feature_model_forward.1} parent=1 // pred_region
      %s56 = ssub.s32 3584, 3584
      %57 = vsyncadd [#allocation6], %s56
      %s58 = sshll.u32 [#allocation7], 4
      %s59 = int_to_ptr.vmem [resolvable:$true] %s58
      %64 = dma.hbm_to_vmem [thread:$0]  %s2, 3584, %s59, [#allocation6], 64, 64, 4
    $region13: #{feature_model_forward.1} parent=1 // pred_fallthru
      _
    // Predicated region
    $region14: #{feature_model_forward.1} parent=1 // pred_check
      _
    $region15: #{feature_model_forward.1} parent=1 // pred_check_branch
      %66 = sbr.rel (0) target = $region17
    $region16: #{feature_model_forward.1} parent=1 // pred_region
      %s68 = ssub.s32 80, 80
      %69 = vsyncadd [#allocation9], %s68
      %s70 = sshll.u32 [#allocation8], 4
      %s71 = int_to_ptr.vmem [resolvable:$true] %s70
      %76 = dma.hbm_to_vmem [thread:$0]  %s3, 80, %s71, [#allocation9], 16, 16, 1
    $region17: #{feature_model_forward.1} parent=1 // pred_fallthru
      _
    // Predicated region
    $region18: #{feature_model_forward.1} parent=1 // pred_check
      _
    $region19: #{feature_model_forward.1} parent=1 // pred_check_branch
      %78 = sbr.rel (0) target = $region21
    $region20: #{feature_model_forward.1} parent=1 // pred_region
      %s80 = ssub.s32 320, 320
      %81 = vsyncadd [#allocation9], %s80
      %s82 = sshll.u32 [#allocation10], 4
      %s83 = int_to_ptr.vmem [resolvable:$true] %s82
      %88 = dma.hbm_to_vmem [thread:$0]  %s4, 320, %s83, [#allocation9], 16, 16, 1
    $region21: #{feature_model_forward.1} parent=1 // pred_fallthru
      _
    // Predicated region
    $region22: #{feature_model_forward.1} parent=1 // pred_check
      _
    $region23: #{feature_model_forward.1} parent=1 // pred_check_branch
      %90 = sbr.rel (0) target = $region25
    $region24: #{feature_model_forward.1} parent=1 // pred_region
      %s92 = ssub.s32 16, 16
      %93 = vsyncadd [#allocation12], %s92
      %s95 = sshll.u32 [#allocation11], 4
      %s96 = int_to_ptr.vmem [resolvable:$true] %s95
      %98 = dma.hbm_to_vmem [thread:$0]  %s5, 16, %s96, [#allocation12]
    $region25: #{feature_model_forward.1} parent=1 // pred_fallthru
      _
    // Predicated region
    $region26: #{feature_model_forward.1} parent=1 // pred_check
      _
    $region27: #{feature_model_forward.1} parent=1 // pred_check_branch
      %100 = sbr.rel (0) target = $region29
    $region28: #{feature_model_forward.1} parent=1 // pred_region
      %s102 = ssub.s32 112, 112
      %103 = vsyncadd [#allocation12], %s102
      %s104 = sshll.u32 [#allocation13], 4
      %s105 = int_to_ptr.vmem [resolvable:$true] %s104
      %110 = dma.hbm_to_vmem [thread:$0]  %s6, 112, %s105, [#allocation12], 16, 16, 1
    $region29: #{feature_model_forward.1} parent=1 // pred_fallthru
      _
    // Predicated region
    $region30: #{feature_model_forward.1} parent=1 // pred_check
      _
    $region31: #{feature_model_forward.1} parent=1 // pred_check_branch
      %112 = sbr.rel (0) target = $region33
    $region32: #{feature_model_forward.1} parent=1 // pred_region
      %s114 = ssub.s32 448, 448
      %115 = vsyncadd [#allocation15], %s114
      %s116 = sshll.u32 [#allocation14], 4
      %s117 = int_to_ptr.vmem [resolvable:$true] %s116
      %122 = dma.hbm_to_vmem [thread:$0]  %s7, 448, %s117, [#allocation15], 16, 16, 1
    $region33: #{feature_model_forward.1} parent=1 // pred_fallthru
      _
    // Predicated region
    $region34: #{feature_model_forward.1} parent=1 // pred_check
      _
    $region35: #{feature_model_forward.1} parent=1 // pred_check_branch
      %124 = sbr.rel (0) target = $region37
    $region36: #{feature_model_forward.1} parent=1 // pred_region
      %s126 = ssub.s32 16, 16
      %127 = vsyncadd [#allocation15], %s126
      %s129 = sshll.u32 [#allocation16], 4
      %s130 = int_to_ptr.vmem [resolvable:$true] %s129
      %132 = dma.hbm_to_vmem [thread:$0]  %s8, 16, %s130, [#allocation15]
    $region37: #{feature_model_forward.1} parent=1 // pred_fallthru
      _
    // Predicated region
    $region38: #{feature_model_forward.1} parent=1 // pred_check
      _
    $region39: #{feature_model_forward.1} parent=1 // pred_check_branch
      %134 = sbr.rel (0) target = $region41
    $region40: #{feature_model_forward.1} parent=1 // pred_region
      %s136 = ssub.s32 12288, 12288
      %137 = vsyncadd [#allocation18], %s136
      %s138 = sshll.u32 [#allocation17], 4
      %s139 = int_to_ptr.vmem [resolvable:$true] %s138
      %144 = dma.hbm_to_vmem [thread:$0]  %s9, 12288, %s139, [#allocation18], 128, 128, 8
    $region41: #{feature_model_forward.1} parent=1 // pred_fallthru
      _
    // Predicated region
    $region42: #{feature_model_forward.1} parent=1 // pred_check
      _
    $region43: #{feature_model_forward.1} parent=1 // pred_check_branch
      %146 = sbr.rel (0) target = $region45
    $region44: #{feature_model_forward.1} parent=1 // pred_region
      %s148 = ssub.s32 16, 16
      %149 = vsyncadd [#allocation18], %s148
      %s151 = sshll.u32 [#allocation19], 4
      %s152 = int_to_ptr.vmem [resolvable:$true] %s151
      %154 = dma.hbm_to_vmem [thread:$0]  %s10, 16, %s152, [#allocation18]
    $region45: #{feature_model_forward.1} parent=1 // pred_fallthru
      _
    // Predicated region
    $region46: #{feature_model_forward.1} parent=1 // pred_check
      _
    $region47: #{feature_model_forward.1} parent=1 // pred_check_branch
      %156 = sbr.rel (0) target = $region49
    $region48: #{feature_model_forward.1} parent=1 // pred_region
      %s158 = ssub.s32 2048, 2048
      %159 = vsyncadd [#allocation21], %s158
      %s160 = sshll.u32 [#allocation20], 4
      %s161 = int_to_ptr.vmem [resolvable:$true] %s160
      %166 = dma.hbm_to_vmem [thread:$0]  %s11, 2048, %s161, [#allocation21], 128, 128, 8
    $region49: #{feature_model_forward.1} parent=1 // pred_fallthru
      _
    // Predicated region
    $region50: #{feature_model_forward.1} parent=1 // pred_check
      _
    $region51: #{feature_model_forward.1} parent=1 // pred_check_branch
      %168 = sbr.rel (0) target = $region53
    $region52: #{feature_model_forward.1} parent=1 // pred_region
      %s170 = ssub.s32 16, 16
      %171 = vsyncadd [#allocation21], %s170
      %s173 = sshll.u32 [#allocation22], 4
      %s174 = int_to_ptr.vmem [resolvable:$true] %s173
      %176 = dma.hbm_to_vmem [thread:$0]  %s12, 16, %s174, [#allocation21]
    $region53: #{feature_model_forward.1} parent=1 // pred_fallthru
      _
    // Predicated region
    $region54: #{feature_model_forward.1} parent=1 // pred_check
      _
    $region55: #{feature_model_forward.1} parent=1 // pred_check_branch
      %178 = sbr.rel (0) target = $region57
    $region56: #{feature_model_forward.1} parent=1 // pred_region
      %s180 = ssub.s32 2048, 2048
      %181 = vsyncadd [#allocation24], %s180
      %s182 = sshll.u32 [#allocation23], 4
      %s183 = int_to_ptr.vmem [resolvable:$true] %s182
      %188 = dma.hbm_to_vmem [thread:$0]  %s13, 2048, %s183, [#allocation24], 128, 128, 8
    $region57: #{feature_model_forward.1} parent=1 // pred_fallthru
      _
    // Predicated region
    $region58: #{feature_model_forward.1} parent=1 // pred_check
      _
    $region59: #{feature_model_forward.1} parent=1 // pred_check_branch
      %190 = sbr.rel (0) target = $region61
    $region60: #{feature_model_forward.1} parent=1 // pred_region
      %s192 = ssub.s32 16, 16
      %193 = vsyncadd [#allocation24], %s192
      %s195 = sshll.u32 [#allocation25], 4
      %s196 = int_to_ptr.vmem [resolvable:$true] %s195
      %198 = dma.hbm_to_vmem [thread:$0]  %s14, 16, %s196, [#allocation24]
    $region61: #{feature_model_forward.1} parent=1 // pred_fallthru
      _
    // Predicated region
    $region62: #{feature_model_forward.1} parent=1 // pred_check
      _
    $region63: #{feature_model_forward.1} parent=1 // pred_check_branch
      %200 = sbr.rel (0) target = $region65
    $region64: #{feature_model_forward.1} parent=1 // pred_region
      %201 = dma.done [#allocation3], 768
    $region65: #{feature_model_forward.1} parent=1 // pred_fallthru
      _
    // Predicated region
    $region66: #{feature_model_forward.1} parent=1 // pred_check
      _
    $region67: #{feature_model_forward.1} parent=1 // pred_check_branch
      %203 = sbr.rel (0) target = $region69
    $region68: #{feature_model_forward.1} parent=1 // pred_region
      %204 = dma.done [#allocation6], 2560
    $region69: #{feature_model_forward.1} parent=1 // pred_fallthru
      _
    // Predicated region
    $region70: #{feature_model_forward.1} parent=1 // pred_check
      _
    $region71: #{feature_model_forward.1} parent=1 // pred_check_branch
      %206 = sbr.rel (0) target = $region73
    $region72: #{feature_model_forward.1} parent=1 // pred_region
      %207 = dma.done [#allocation6], 3584
    $region73: #{feature_model_forward.1} parent=1 // pred_fallthru
      _
    // Predicated region
    $region74: #{feature_model_forward.1} parent=1 // pred_check
      _
    $region75: #{feature_model_forward.1} parent=1 // pred_check_branch
      %209 = sbr.rel (0) target = $region77
    $region76: #{feature_model_forward.1} parent=1 // pred_region
      %210 = dma.done [#allocation9], 80
    $region77: #{feature_model_forward.1} parent=1 // pred_fallthru
      _
    // Predicated region
    $region78: #{feature_model_forward.1} parent=1 // pred_check
      _
    $region79: #{feature_model_forward.1} parent=1 // pred_check_branch
      %212 = sbr.rel (0) target = $region81
    $region80: #{feature_model_forward.1} parent=1 // pred_region
      %213 = dma.done [#allocation9], 320
    $region81: #{feature_model_forward.1} parent=1 // pred_fallthru
      _
    // Predicated region
    $region82: #{feature_model_forward.1} parent=1 // pred_check
      _
    $region83: #{feature_model_forward.1} parent=1 // pred_check_branch
      %215 = sbr.rel (0) target = $region85
    $region84: #{feature_model_forward.1} parent=1 // pred_region
      %216 = dma.done [#allocation12], 16
    $region85: #{feature_model_forward.1} parent=1 // pred_fallthru
      _
    // Predicated region
    $region86: #{feature_model_forward.1} parent=1 // pred_check
      _
    $region87: #{feature_model_forward.1} parent=1 // pred_check_branch
      %218 = sbr.rel (0) target = $region89
    $region88: #{feature_model_forward.1} parent=1 // pred_region
      %219 = dma.done [#allocation12], 112
    $region89: #{feature_model_forward.1} parent=1 // pred_fallthru
      _
    // Predicated region
    $region90: #{feature_model_forward.1} parent=1 // pred_check
      _
    $region91: #{feature_model_forward.1} parent=1 // pred_check_branch
      %221 = sbr.rel (0) target = $region93
    $region92: #{feature_model_forward.1} parent=1 // pred_region
      %222 = dma.done [#allocation15], 448
    $region93: #{feature_model_forward.1} parent=1 // pred_fallthru
      _
    // Predicated region
    $region94: #{feature_model_forward.1} parent=1 // pred_check
      _
    $region95: #{feature_model_forward.1} parent=1 // pred_check_branch
      %224 = sbr.rel (0) target = $region97
    $region96: #{feature_model_forward.1} parent=1 // pred_region
      %225 = dma.done [#allocation15], 16
    $region97: #{feature_model_forward.1} parent=1 // pred_fallthru
      _
    // Predicated region
    $region98: #{feature_model_forward.1} parent=1 // pred_check
      _
    $region99: #{feature_model_forward.1} parent=1 // pred_check_branch
      %227 = sbr.rel (0) target = $region101
    $region100: #{feature_model_forward.1} parent=1 // pred_region
      %228 = dma.done [#allocation18], 12288
    $region101: #{feature_model_forward.1} parent=1 // pred_fallthru
      _
    // Predicated region
    $region102: #{feature_model_forward.1} parent=1 // pred_check
      _
    $region103: #{feature_model_forward.1} parent=1 // pred_check_branch
      %230 = sbr.rel (0) target = $region105
    $region104: #{feature_model_forward.1} parent=1 // pred_region
      %231 = dma.done [#allocation18], 16
    $region105: #{feature_model_forward.1} parent=1 // pred_fallthru
      _
    // Predicated region
    $region106: #{feature_model_forward.1} parent=1 // pred_check
      _
    $region107: #{feature_model_forward.1} parent=1 // pred_check_branch
      %233 = sbr.rel (0) target = $region109
    $region108: #{feature_model_forward.1} parent=1 // pred_region
      %234 = dma.done [#allocation21], 2048
    $region109: #{feature_model_forward.1} parent=1 // pred_fallthru
      _
    // Predicated region
    $region110: #{feature_model_forward.1} parent=1 // pred_check
      _
    $region111: #{feature_model_forward.1} parent=1 // pred_check_branch
      %236 = sbr.rel (0) target = $region113
    $region112: #{feature_model_forward.1} parent=1 // pred_region
      %237 = dma.done [#allocation21], 16
    $region113: #{feature_model_forward.1} parent=1 // pred_fallthru
      _
    // Predicated region
    $region114: #{feature_model_forward.1} parent=1 // pred_check
      _
    $region115: #{feature_model_forward.1} parent=1 // pred_check_branch
      %239 = sbr.rel (0) target = $region117
    $region116: #{feature_model_forward.1} parent=1 // pred_region
      %240 = dma.done [#allocation24], 2048
    $region117: #{feature_model_forward.1} parent=1 // pred_fallthru
      _
    // Predicated region
    $region118: #{feature_model_forward.1} parent=1 // pred_check
      _
    $region119: #{feature_model_forward.1} parent=1 // pred_check_branch
      %242 = sbr.rel (0) target = $region121
    $region120: #{feature_model_forward.1} parent=1 // pred_region
      %243 = dma.done [#allocation24], 16
    $region121: #{feature_model_forward.1} parent=1 // pred_fallthru
      _
    %v244 = vld [vmem:[#allocation2] sm:$0xff]
    %v245 = vld [vmem:[#allocation2 + $0x8] sm:$0xff]
    %v246 = vld [vmem:[#allocation2 + $0x10] sm:$0xff]
    %v247 = vld [vmem:[#allocation2 + $0x18] sm:$0xff]
    %v248 = vld [vmem:[#allocation2 + $0x20] sm:$0xff]
    %v249 = vld [vmem:[#allocation2 + $0x28] sm:$0xff]
    %v250 = vunpack.c.l.bf16 %v244
    %v251 = vunpack.c.h.bf16 %v244
    %v252 = vunpack.c.l.bf16 %v245
    %v253 = vunpack.c.h.bf16 %v245
    %v254 = vunpack.c.l.bf16 %v246
    %v255 = vunpack.c.h.bf16 %v246
    %v256 = vunpack.c.l.bf16 %v247
    %v257 = vunpack.c.h.bf16 %v247
    %v258 = vunpack.c.l.bf16 %v248
    %v259 = vunpack.c.h.bf16 %v248
    %v260 = vunpack.c.l.bf16 %v249
    %v261 = vunpack.c.h.bf16 %v249
    %v262 = vld [vmem:[#allocation17] sm:$0xff]
    %v263 = vld [vmem:[#allocation17 + $0x8] sm:$0xff]
    %v264 = vld [vmem:[#allocation17 + $0x10] sm:$0xff]
    %v265 = vld [vmem:[#allocation17 + $0x18] sm:$0xff]
    %v266 = vld [vmem:[#allocation17 + $0x20] sm:$0xff]
    %v267 = vld [vmem:[#allocation17 + $0x28] sm:$0xff]
    %v268 = vld [vmem:[#allocation17 + $0x30] sm:$0xff]
    %v269 = vld [vmem:[#allocation17 + $0x38] sm:$0xff]
    %v270 = vld [vmem:[#allocation17 + $0x40] sm:$0xff]
    %v271 = vld [vmem:[#allocation17 + $0x48] sm:$0xff]
    %v272 = vld [vmem:[#allocation17 + $0x50] sm:$0xff]
    %v273 = vld [vmem:[#allocation17 + $0x58] sm:$0xff]
    %v274 = vld [vmem:[#allocation17 + $0x60] sm:$0xff]
    %v275 = vld [vmem:[#allocation17 + $0x68] sm:$0xff]
    %v276 = vld [vmem:[#allocation17 + $0x70] sm:$0xff]
    %v277 = vld [vmem:[#allocation17 + $0x78] sm:$0xff]
    %v278 = vld [vmem:[#allocation17 + $0x80] sm:$0xff]
    %v279 = vld [vmem:[#allocation17 + $0x88] sm:$0xff]
    %v280 = vld [vmem:[#allocation17 + $0x90] sm:$0xff]
    %v281 = vld [vmem:[#allocation17 + $0x98] sm:$0xff]
    %v282 = vld [vmem:[#allocation17 + $0xa0] sm:$0xff]
    %v283 = vld [vmem:[#allocation17 + $0xa8] sm:$0xff]
    %v284 = vld [vmem:[#allocation17 + $0xb0] sm:$0xff]
    %v285 = vld [vmem:[#allocation17 + $0xb8] sm:$0xff]
    %v286 = vld [vmem:[#allocation17 + $0xc0] sm:$0xff]
    %v287 = vld [vmem:[#allocation17 + $0xc8] sm:$0xff]
    %v288 = vld [vmem:[#allocation17 + $0xd0] sm:$0xff]
    %v289 = vld [vmem:[#allocation17 + $0xd8] sm:$0xff]
    %v290 = vld [vmem:[#allocation17 + $0xe0] sm:$0xff]
    %v291 = vld [vmem:[#allocation17 + $0xe8] sm:$0xff]
    %v292 = vld [vmem:[#allocation17 + $0xf0] sm:$0xff]
    %v293 = vld [vmem:[#allocation17 + $0xf8] sm:$0xff]
    %v294 = vld [vmem:[#allocation17 + $0x100] sm:$0xff]
    %v295 = vld [vmem:[#allocation17 + $0x108] sm:$0xff]
    %v296 = vld [vmem:[#allocation17 + $0x110] sm:$0xff]
    %v297 = vld [vmem:[#allocation17 + $0x118] sm:$0xff]
    %v298 = vld [vmem:[#allocation17 + $0x120] sm:$0xff]
    %v299 = vld [vmem:[#allocation17 + $0x128] sm:$0xff]
    %v300 = vld [vmem:[#allocation17 + $0x130] sm:$0xff]
    %v301 = vld [vmem:[#allocation17 + $0x138] sm:$0xff]
    %v302 = vld [vmem:[#allocation17 + $0x140] sm:$0xff]
    %v303 = vld [vmem:[#allocation17 + $0x148] sm:$0xff]
    %v304 = vld [vmem:[#allocation17 + $0x150] sm:$0xff]
    %v305 = vld [vmem:[#allocation17 + $0x158] sm:$0xff]
    %v306 = vld [vmem:[#allocation17 + $0x160] sm:$0xff]
    %v307 = vld [vmem:[#allocation17 + $0x168] sm:$0xff]
    %v308 = vld [vmem:[#allocation17 + $0x170] sm:$0xff]
    %v309 = vld [vmem:[#allocation17 + $0x178] sm:$0xff]
    %v310 = vld [vmem:[#allocation17 + $0x180] sm:$0xff]
    %v311 = vld [vmem:[#allocation17 + $0x188] sm:$0xff]
    %v312 = vld [vmem:[#allocation17 + $0x190] sm:$0xff]
    %v313 = vld [vmem:[#allocation17 + $0x198] sm:$0xff]
    %v314 = vld [vmem:[#allocation17 + $0x1a0] sm:$0xff]
    %v315 = vld [vmem:[#allocation17 + $0x1a8] sm:$0xff]
    %v316 = vld [vmem:[#allocation17 + $0x1b0] sm:$0xff]
    %v317 = vld [vmem:[#allocation17 + $0x1b8] sm:$0xff]
    %v318 = vld [vmem:[#allocation17 + $0x1c0] sm:$0xff]
    %v319 = vld [vmem:[#allocation17 + $0x1c8] sm:$0xff]
    %v320 = vld [vmem:[#allocation17 + $0x1d0] sm:$0xff]
    %v321 = vld [vmem:[#allocation17 + $0x1d8] sm:$0xff]
    %v322 = vld [vmem:[#allocation17 + $0x1e0] sm:$0xff]
    %v323 = vld [vmem:[#allocation17 + $0x1e8] sm:$0xff]
    %v324 = vld [vmem:[#allocation17 + $0x1f0] sm:$0xff]
    %v325 = vld [vmem:[#allocation17 + $0x1f8] sm:$0xff]
    %v326 = vld [vmem:[#allocation17 + $0x200] sm:$0xff]
    %v327 = vld [vmem:[#allocation17 + $0x208] sm:$0xff]
    %v328 = vld [vmem:[#allocation17 + $0x210] sm:$0xff]
    %v329 = vld [vmem:[#allocation17 + $0x218] sm:$0xff]
    %v330 = vld [vmem:[#allocation17 + $0x220] sm:$0xff]
    %v331 = vld [vmem:[#allocation17 + $0x228] sm:$0xff]
    %v332 = vld [vmem:[#allocation17 + $0x230] sm:$0xff]
    %v333 = vld [vmem:[#allocation17 + $0x238] sm:$0xff]
    %v334 = vld [vmem:[#allocation17 + $0x240] sm:$0xff]
    %v335 = vld [vmem:[#allocation17 + $0x248] sm:$0xff]
    %v336 = vld [vmem:[#allocation17 + $0x250] sm:$0xff]
    %v337 = vld [vmem:[#allocation17 + $0x258] sm:$0xff]
    %v338 = vld [vmem:[#allocation17 + $0x260] sm:$0xff]
    %v339 = vld [vmem:[#allocation17 + $0x268] sm:$0xff]
    %v340 = vld [vmem:[#allocation17 + $0x270] sm:$0xff]
    %v341 = vld [vmem:[#allocation17 + $0x278] sm:$0xff]
    %v342 = vld [vmem:[#allocation17 + $0x280] sm:$0xff]
    %v343 = vld [vmem:[#allocation17 + $0x288] sm:$0xff]
    %v344 = vld [vmem:[#allocation17 + $0x290] sm:$0xff]
    %v345 = vld [vmem:[#allocation17 + $0x298] sm:$0xff]
    %v346 = vld [vmem:[#allocation17 + $0x2a0] sm:$0xff]
    %v347 = vld [vmem:[#allocation17 + $0x2a8] sm:$0xff]
    %v348 = vld [vmem:[#allocation17 + $0x2b0] sm:$0xff]
    %v349 = vld [vmem:[#allocation17 + $0x2b8] sm:$0xff]
    %v350 = vld [vmem:[#allocation17 + $0x2c0] sm:$0xff]
    %v351 = vld [vmem:[#allocation17 + $0x2c8] sm:$0xff]
    %v352 = vld [vmem:[#allocation17 + $0x2d0] sm:$0xff]
    %v353 = vld [vmem:[#allocation17 + $0x2d8] sm:$0xff]
    %v354 = vld [vmem:[#allocation17 + $0x2e0] sm:$0xff]
    %v355 = vld [vmem:[#allocation17 + $0x2e8] sm:$0xff]
    %v356 = vld [vmem:[#allocation17 + $0x2f0] sm:$0xff]
    %v357 = vld [vmem:[#allocation17 + $0x2f8] sm:$0xff]
    %v358 = vld [vmem:[#allocation19] sm:$0x1]
    %v360 = vlaneseq
    %v361 = vshrl.u32 %v360, 7
    %v362 = vsub.s32 0, %v361
    %v363 = vrot.slane %v358, %v362
    %365 = vmatprep.subr.mxu0 0.0
    %366 = vmatpush1.msra.mxu0 %v262
    %367 = vmatprep.subr.mxu0 0.0
    %368 = vmatpush1.msra.mxu0 %v263
    %369 = vmatprep.subr.mxu0 0.0
    %370 = vmatpush1.msra.mxu0 %v264
    %371 = vmatprep.subr.mxu0 0.0
    %372 = vmatpush1.msra.mxu0 %v265
    %373 = vmatprep.subr.mxu0 0.0
    %374 = vmatpush1.msra.mxu0 %v266
    %375 = vmatprep.subr.mxu0 0.0
    %376 = vmatpush1.msra.mxu0 %v267
    %377 = vmatprep.subr.mxu0 0.0
    %378 = vmatpush1.msra.mxu0 %v268
    %379 = vmatprep.subr.mxu0 0.0
    %380 = vmatpush1.msra.mxu0 %v269
    %381 = vmatprep.subr.mxu0 0.0
    %382 = vmatpush1.msra.mxu0 %v270
    %383 = vmatprep.subr.mxu0 0.0
    %384 = vmatpush1.msra.mxu0 %v271
    %385 = vmatprep.subr.mxu0 0.0
    %386 = vmatpush1.msra.mxu0 %v272
    %387 = vmatprep.subr.mxu0 0.0
    %388 = vmatpush1.msra.mxu0 %v273
    %389 = vmatprep.subr.mxu0 0.0
    %390 = vmatpush1.msra.mxu0 %v274
    %391 = vmatprep.subr.mxu0 0.0
    %392 = vmatpush1.msra.mxu0 %v275
    %393 = vmatprep.subr.mxu0 0.0
    %394 = vmatpush1.msra.mxu0 %v276
    %395 = vmatprep.subr.mxu0 0.0
    %396 = vmatpush1.msra.mxu0 %v277
    %397 = vmatprep.subr.mxu0 0.0
    %398 = vmatpush1.msra.mxu0 %v278
    %399 = vmatprep.subr.mxu0 0.0
    %400 = vmatpush1.msra.mxu0 %v279
    %401 = vmatprep.subr.mxu0 0.0
    %402 = vmatpush1.msra.mxu0 %v280
    %403 = vmatprep.subr.mxu0 0.0
    %404 = vmatpush1.msra.mxu0 %v281
    %405 = vmatprep.subr.mxu0 0.0
    %406 = vmatpush1.msra.mxu0 %v282
    %407 = vmatprep.subr.mxu0 0.0
    %408 = vmatpush1.msra.mxu0 %v283
    %409 = vmatprep.subr.mxu0 0.0
    %410 = vmatpush1.msra.mxu0 %v284
    %411 = vmatprep.subr.mxu0 0.0
    %412 = vmatpush1.msra.mxu0 %v285
    %413 = vmatprep.subr.mxu0 0.0
    %414 = vmatpush1.msra.mxu0 %v286
    %415 = vmatprep.subr.mxu0 0.0
    %416 = vmatpush1.msra.mxu0 %v287
    %417 = vmatprep.subr.mxu0 0.0
    %418 = vmatpush1.msra.mxu0 %v288
    %419 = vmatprep.subr.mxu0 0.0
    %420 = vmatpush1.msra.mxu0 %v289
    %421 = vmatprep.subr.mxu0 0.0
    %422 = vmatpush1.msra.mxu0 %v290
    %423 = vmatprep.subr.mxu0 0.0
    %424 = vmatpush1.msra.mxu0 %v291
    %425 = vmatprep.subr.mxu0 0.0
    %426 = vmatpush1.msra.mxu0 %v292
    %427 = vmatprep.subr.mxu0 0.0
    %428 = vmatpush1.msra.mxu0 %v293
    %429 = vmatprep.mubr.f32.mxu0 %v251
    %430 = vmatmul.mubr.f32.gmra.mrb[0].mxu0 %v250
    %v431 = vpop.f32.mrb[0].mxu0
    %v432 = vadd.f32 %v363, %v431
    %v433 = vpop.f32.mrb[0].mxu0
    %434 = vmatprep.mubr.f32.mxu0 %v257
    %435 = vmatmul.mubr.f32.gmra.mrb[0].mxu0 %v256
    %v436 = vpop.f32.mrb[0].mxu0
    %v437 = vadd.f32 %v363, %v436
    %v438 = vpop.f32.mrb[0].mxu0
    %439 = vdwg.mxu0
    %440 = vmatprep.subr.mxu0 0.0
    %441 = vmatpush1.msra.mxu0 %v294
    %442 = vmatprep.subr.mxu0 0.0
    %443 = vmatpush1.msra.mxu0 %v295
    %444 = vmatprep.subr.mxu0 0.0
    %445 = vmatpush1.msra.mxu0 %v296
    %446 = vmatprep.subr.mxu0 0.0
    %447 = vmatpush1.msra.mxu0 %v297
    %448 = vmatprep.subr.mxu0 0.0
    %449 = vmatpush1.msra.mxu0 %v298
    %450 = vmatprep.subr.mxu0 0.0
    %451 = vmatpush1.msra.mxu0 %v299
    %452 = vmatprep.subr.mxu0 0.0
    %453 = vmatpush1.msra.mxu0 %v300
    %454 = vmatprep.subr.mxu0 0.0
    %455 = vmatpush1.msra.mxu0 %v301
    %456 = vmatprep.subr.mxu0 0.0
    %457 = vmatpush1.msra.mxu0 %v302
    %458 = vmatprep.subr.mxu0 0.0
    %459 = vmatpush1.msra.mxu0 %v303
    %460 = vmatprep.subr.mxu0 0.0
    %461 = vmatpush1.msra.mxu0 %v304
    %462 = vmatprep.subr.mxu0 0.0
    %463 = vmatpush1.msra.mxu0 %v305
    %464 = vmatprep.subr.mxu0 0.0
    %465 = vmatpush1.msra.mxu0 %v306
    %466 = vmatprep.subr.mxu0 0.0
    %467 = vmatpush1.msra.mxu0 %v307
    %468 = vmatprep.subr.mxu0 0.0
    %469 = vmatpush1.msra.mxu0 %v308
    %470 = vmatprep.subr.mxu0 0.0
    %471 = vmatpush1.msra.mxu0 %v309
    %472 = vmatprep.subr.mxu0 0.0
    %473 = vmatpush1.msra.mxu0 %v310
    %474 = vmatprep.subr.mxu0 0.0
    %475 = vmatpush1.msra.mxu0 %v311
    %476 = vmatprep.subr.mxu0 0.0
    %477 = vmatpush1.msra.mxu0 %v312
    %478 = vmatprep.subr.mxu0 0.0
    %479 = vmatpush1.msra.mxu0 %v313
    %480 = vmatprep.subr.mxu0 0.0
    %481 = vmatpush1.msra.mxu0 %v314
    %482 = vmatprep.subr.mxu0 0.0
    %483 = vmatpush1.msra.mxu0 %v315
    %484 = vmatprep.subr.mxu0 0.0
    %485 = vmatpush1.msra.mxu0 %v316
    %486 = vmatprep.subr.mxu0 0.0
    %487 = vmatpush1.msra.mxu0 %v317
    %488 = vmatprep.subr.mxu0 0.0
    %489 = vmatpush1.msra.mxu0 %v318
    %490 = vmatprep.subr.mxu0 0.0
    %491 = vmatpush1.msra.mxu0 %v319
    %492 = vmatprep.subr.mxu0 0.0
    %493 = vmatpush1.msra.mxu0 %v320
    %494 = vmatprep.subr.mxu0 0.0
    %495 = vmatpush1.msra.mxu0 %v321
    %496 = vmatprep.subr.mxu0 0.0
    %497 = vmatpush1.msra.mxu0 %v322
    %498 = vmatprep.subr.mxu0 0.0
    %499 = vmatpush1.msra.mxu0 %v323
    %500 = vmatprep.subr.mxu0 0.0
    %501 = vmatpush1.msra.mxu0 %v324
    %502 = vmatprep.subr.mxu0 0.0
    %503 = vmatpush1.msra.mxu0 %v325
    %504 = vmatprep.mubr.f32.mxu0 %v253
    %505 = vmatmul.mubr.f32.gmra.mrb[0].mxu0 %v252
    %v506 = vpop.f32.mrb[0].mxu0
    %v507 = vadd.f32 %v432, %v506
    %v508 = vpop.f32.mrb[0].mxu0
    %509 = vmatprep.mubr.f32.mxu0 %v259
    %510 = vmatmul.mubr.f32.gmra.mrb[0].mxu0 %v258
    %v511 = vpop.f32.mrb[0].mxu0
    %v512 = vadd.f32 %v437, %v511
    %v513 = vpop.f32.mrb[0].mxu0
    %514 = vdwg.mxu0
    %515 = vmatprep.subr.mxu0 0.0
    %516 = vmatpush1.msra.mxu0 %v326
    %517 = vmatprep.subr.mxu0 0.0
    %518 = vmatpush1.msra.mxu0 %v327
    %519 = vmatprep.subr.mxu0 0.0
    %520 = vmatpush1.msra.mxu0 %v328
    %521 = vmatprep.subr.mxu0 0.0
    %522 = vmatpush1.msra.mxu0 %v329
    %523 = vmatprep.subr.mxu0 0.0
    %524 = vmatpush1.msra.mxu0 %v330
    %525 = vmatprep.subr.mxu0 0.0
    %526 = vmatpush1.msra.mxu0 %v331
    %527 = vmatprep.subr.mxu0 0.0
    %528 = vmatpush1.msra.mxu0 %v332
    %529 = vmatprep.subr.mxu0 0.0
    %530 = vmatpush1.msra.mxu0 %v333
    %531 = vmatprep.subr.mxu0 0.0
    %532 = vmatpush1.msra.mxu0 %v334
    %533 = vmatprep.subr.mxu0 0.0
    %534 = vmatpush1.msra.mxu0 %v335
    %535 = vmatprep.subr.mxu0 0.0
    %536 = vmatpush1.msra.mxu0 %v336
    %537 = vmatprep.subr.mxu0 0.0
    %538 = vmatpush1.msra.mxu0 %v337
    %539 = vmatprep.subr.mxu0 0.0
    %540 = vmatpush1.msra.mxu0 %v338
    %541 = vmatprep.subr.mxu0 0.0
    %542 = vmatpush1.msra.mxu0 %v339
    %543 = vmatprep.subr.mxu0 0.0
    %544 = vmatpush1.msra.mxu0 %v340
    %545 = vmatprep.subr.mxu0 0.0
    %546 = vmatpush1.msra.mxu0 %v341
    %547 = vmatprep.subr.mxu0 0.0
    %548 = vmatpush1.msra.mxu0 %v342
    %549 = vmatprep.subr.mxu0 0.0
    %550 = vmatpush1.msra.mxu0 %v343
    %551 = vmatprep.subr.mxu0 0.0
    %552 = vmatpush1.msra.mxu0 %v344
    %553 = vmatprep.subr.mxu0 0.0
    %554 = vmatpush1.msra.mxu0 %v345
    %555 = vmatprep.subr.mxu0 0.0
    %556 = vmatpush1.msra.mxu0 %v346
    %557 = vmatprep.subr.mxu0 0.0
    %558 = vmatpush1.msra.mxu0 %v347
    %559 = vmatprep.subr.mxu0 0.0
    %560 = vmatpush1.msra.mxu0 %v348
    %561 = vmatprep.subr.mxu0 0.0
    %562 = vmatpush1.msra.mxu0 %v349
    %563 = vmatprep.subr.mxu0 0.0
    %564 = vmatpush1.msra.mxu0 %v350
    %565 = vmatprep.subr.mxu0 0.0
    %566 = vmatpush1.msra.mxu0 %v351
    %567 = vmatprep.subr.mxu0 0.0
    %568 = vmatpush1.msra.mxu0 %v352
    %569 = vmatprep.subr.mxu0 0.0
    %570 = vmatpush1.msra.mxu0 %v353
    %571 = vmatprep.subr.mxu0 0.0
    %572 = vmatpush1.msra.mxu0 %v354
    %573 = vmatprep.subr.mxu0 0.0
    %574 = vmatpush1.msra.mxu0 %v355
    %575 = vmatprep.subr.mxu0 0.0
    %576 = vmatpush1.msra.mxu0 %v356
    %577 = vmatprep.subr.mxu0 0.0
    %578 = vmatpush1.msra.mxu0 %v357
    %579 = vmatprep.mubr.f32.mxu0 %v255
    %580 = vmatmul.mubr.f32.gmra.mrb[0].mxu0 %v254
    %v581 = vpop.f32.mrb[0].mxu0
    %v582 = vadd.f32 %v507, %v581
    %v583 = vpop.f32.mrb[0].mxu0
    %584 = vmatprep.mubr.f32.mxu0 %v261
    %585 = vmatmul.mubr.f32.gmra.mrb[0].mxu0 %v260
    %v586 = vpop.f32.mrb[0].mxu0
    %v587 = vadd.f32 %v512, %v586
    %v588 = vpop.f32.mrb[0].mxu0
    %589 = vdwg.mxu0
    %v590 = vmax.f32 %v582, 0.0
    %v591 = vmax.f32 %v587, 0.0
    %592 = vst [vmem:[#allocation26 + $0x8] sm:$0xff] %v590
    %593 = vst [vmem:[#allocation26 + $0x18] sm:$0xff] %v591
    %v594 = vld [vmem:[#allocation5] sm:$0xf]
    %v595 = vld [vmem:[#allocation5 + $0x4] sm:$0xf]
    %v596 = vld [vmem:[#allocation5 + $0x28] sm:$0xf]
    %v597 = vld [vmem:[#allocation5 + $0x2c] sm:$0xf]
    %v598 = vld [vmem:[#allocation5 + $0x50] sm:$0xf]
    %v599 = vld [vmem:[#allocation5 + $0x54] sm:$0xf]
    %v600 = vld [vmem:[#allocation5 + $0x78] sm:$0xf]
    %v601 = vld [vmem:[#allocation5 + $0x7c] sm:$0xf]
    %v602 = vunpack.c.l.bf16 %v594
    %v603 = vunpack.c.l.bf16 %v595
    %v604 = vunpack.c.l.bf16 %v596
    %v605 = vunpack.c.l.bf16 %v597
    %v606 = vunpack.c.l.bf16 %v598
    %v607 = vunpack.c.l.bf16 %v599
    %v608 = vunpack.c.l.bf16 %v600
    %v609 = vunpack.c.l.bf16 %v601
    %v610 = vld [vmem:[#allocation8] sm:$0x1]
    %v612 = vlaneseq
    %v613 = vshrl.u32 %v612, 7
    %v614 = vsub.s32 0, %v613
    %v615 = vrot.slane %v610, %v614
    %v617 = vmul.f32 %v602, %v615
    %v618 = vmul.f32 %v603, %v615
    %v619 = vmul.f32 %v604, %v615
    %v620 = vmul.f32 %v605, %v615
    %v621 = vmul.f32 %v606, %v615
    %v622 = vmul.f32 %v607, %v615
    %v623 = vmul.f32 %v608, %v615
    %v624 = vmul.f32 %v609, %v615
    %v625 = vadd.f32 %v617, 0.0
    %v626 = vadd.f32 %v618, 0.0
    %v627 = vadd.f32 %v619, 0.0
    %v628 = vadd.f32 %v620, 0.0
    %v629 = vadd.f32 %v621, 0.0
    %v630 = vadd.f32 %v622, 0.0
    %v631 = vadd.f32 %v623, 0.0
    %v632 = vadd.f32 %v624, 0.0
    %v633 = vld [vmem:[#allocation10] sm:$0x1]
    %v634 = vld [vmem:[#allocation10 + $0x5] sm:$0x1]
    %v635 = vld [vmem:[#allocation10 + $0xa] sm:$0x1]
    %v636 = vld [vmem:[#allocation10 + $0xf] sm:$0x1]
    %v641 = vlaneseq
    %v642 = vshrl.u32 %v641, 7
    %v643 = vsub.s32 0, %v642
    %v644 = vrot.slane %v633, %v643
    %v645 = vlaneseq
    %v646 = vshrl.u32 %v645, 7
    %v647 = vsub.s32 0, %v646
    %v648 = vrot.slane %v634, %v647
    %v649 = vlaneseq
    %v650 = vshrl.u32 %v649, 7
    %v651 = vsub.s32 0, %v650
    %v652 = vrot.slane %v635, %v651
    %v653 = vlaneseq
    %v654 = vshrl.u32 %v653, 7
    %v655 = vsub.s32 0, %v654
    %v656 = vrot.slane %v636, %v655
    %v661 = vmul.f32 %v602, %v644
    %v662 = vmul.f32 %v603, %v644
    %v663 = vmul.f32 %v604, %v648
    %v664 = vmul.f32 %v605, %v648
    %v665 = vmul.f32 %v606, %v652
    %v666 = vmul.f32 %v607, %v652
    %v667 = vmul.f32 %v608, %v656
    %v668 = vmul.f32 %v609, %v656
    %v669 = vadd.f32 %v661, 0.0
    %v670 = vadd.f32 %v662, 0.0
    %v671 = vadd.f32 %v663, 0.0
    %v672 = vadd.f32 %v664, 0.0
    %v673 = vadd.f32 %v665, 0.0
    %v674 = vadd.f32 %v666, 0.0
    %v675 = vadd.f32 %v667, 0.0
    %v676 = vadd.f32 %v668, 0.0
    %s677 = scalar_lea.vmem [#allocation5], 8
    %v678 = vld [vmem:[%s677] sm:$0xf]
    %v679 = vld [vmem:[%s677 + $0x4] sm:$0xf]
    %v680 = vld [vmem:[%s677 + $0x28] sm:$0xf]
    %v681 = vld [vmem:[%s677 + $0x2c] sm:$0xf]
    %v682 = vld [vmem:[%s677 + $0x50] sm:$0xf]
    %v683 = vld [vmem:[%s677 + $0x54] sm:$0xf]
    %v684 = vld [vmem:[%s677 + $0x78] sm:$0xf]
    %v685 = vld [vmem:[%s677 + $0x7c] sm:$0xf]
    %v686 = vunpack.c.l.bf16 %v678
    %v687 = vunpack.c.l.bf16 %v679
    %v688 = vunpack.c.l.bf16 %v680
    %v689 = vunpack.c.l.bf16 %v681
    %v690 = vunpack.c.l.bf16 %v682
    %v691 = vunpack.c.l.bf16 %v683
    %v692 = vunpack.c.l.bf16 %v684
    %v693 = vunpack.c.l.bf16 %v685
    %s694 = scalar_lea.vmem [#allocation8], 1
    %v695 = vld [vmem:[%s694] sm:$0x1]
    %v697 = vlaneseq
    %v698 = vshrl.u32 %v697, 7
    %v699 = vsub.s32 0, %v698
    %v700 = vrot.slane %v695, %v699
    %v702 = vmul.f32 %v686, %v700
    %v703 = vmul.f32 %v687, %v700
    %v704 = vmul.f32 %v688, %v700
    %v705 = vmul.f32 %v689, %v700
    %v706 = vmul.f32 %v690, %v700
    %v707 = vmul.f32 %v691, %v700
    %v708 = vmul.f32 %v692, %v700
    %v709 = vmul.f32 %v693, %v700
    %v710 = vadd.f32 %v625, %v702
    %v711 = vadd.f32 %v626, %v703
    %v712 = vadd.f32 %v627, %v704
    %v713 = vadd.f32 %v628, %v705
    %v714 = vadd.f32 %v629, %v706
    %v715 = vadd.f32 %v630, %v707
    %v716 = vadd.f32 %v631, %v708
    %v717 = vadd.f32 %v632, %v709
    %s718 = scalar_lea.vmem [#allocation10], 1
    %v719 = vld [vmem:[%s718] sm:$0x1]
    %v720 = vld [vmem:[%s718 + $0x5] sm:$0x1]
    %v721 = vld [vmem:[%s718 + $0xa] sm:$0x1]
    %v722 = vld [vmem:[%s718 + $0xf] sm:$0x1]
    %v727 = vlaneseq
    %v728 = vshrl.u32 %v727, 7
    %v729 = vsub.s32 0, %v728
    %v730 = vrot.slane %v719, %v729
    %v731 = vlaneseq
    %v732 = vshrl.u32 %v731, 7
    %v733 = vsub.s32 0, %v732
    %v734 = vrot.slane %v720, %v733
    %v735 = vlaneseq
    %v736 = vshrl.u32 %v735, 7
    %v737 = vsub.s32 0, %v736
    %v738 = vrot.slane %v721, %v737
    %v739 = vlaneseq
    %v740 = vshrl.u32 %v739, 7
    %v741 = vsub.s32 0, %v740
    %v742 = vrot.slane %v722, %v741
    %v747 = vmul.f32 %v686, %v730
    %v748 = vmul.f32 %v687, %v730
    %v749 = vmul.f32 %v688, %v734
    %v750 = vmul.f32 %v689, %v734
    %v751 = vmul.f32 %v690, %v738
    %v752 = vmul.f32 %v691, %v738
    %v753 = vmul.f32 %v692, %v742
    %v754 = vmul.f32 %v693, %v742
    %v755 = vadd.f32 %v669, %v747
    %v756 = vadd.f32 %v670, %v748
    %v757 = vadd.f32 %v671, %v749
    %v758 = vadd.f32 %v672, %v750
    %v759 = vadd.f32 %v673, %v751
    %v760 = vadd.f32 %v674, %v752
    %v761 = vadd.f32 %v675, %v753
    %v762 = vadd.f32 %v676, %v754
    %s763 = scalar_lea.vmem [#allocation5], 16
    %v764 = vld [vmem:[%s763] sm:$0xf]
    %v765 = vld [vmem:[%s763 + $0x4] sm:$0xf]
    %v766 = vld [vmem:[%s763 + $0x28] sm:$0xf]
    %v767 = vld [vmem:[%s763 + $0x2c] sm:$0xf]
    %v768 = vld [vmem:[%s763 + $0x50] sm:$0xf]
    %v769 = vld [vmem:[%s763 + $0x54] sm:$0xf]
    %v770 = vld [vmem:[%s763 + $0x78] sm:$0xf]
    %v771 = vld [vmem:[%s763 + $0x7c] sm:$0xf]
    %v772 = vunpack.c.l.bf16 %v764
    %v773 = vunpack.c.l.bf16 %v765
    %v774 = vunpack.c.l.bf16 %v766
    %v775 = vunpack.c.l.bf16 %v767
    %v776 = vunpack.c.l.bf16 %v768
    %v777 = vunpack.c.l.bf16 %v769
    %v778 = vunpack.c.l.bf16 %v770
    %v779 = vunpack.c.l.bf16 %v771
    %s780 = scalar_lea.vmem [#allocation8], 2
    %v781 = vld [vmem:[%s780] sm:$0x1]
    %v783 = vlaneseq
    %v784 = vshrl.u32 %v783, 7
    %v785 = vsub.s32 0, %v784
    %v786 = vrot.slane %v781, %v785
    %v788 = vmul.f32 %v772, %v786
    %v789 = vmul.f32 %v773, %v786
    %v790 = vmul.f32 %v774, %v786
    %v791 = vmul.f32 %v775, %v786
    %v792 = vmul.f32 %v776, %v786
    %v793 = vmul.f32 %v777, %v786
    %v794 = vmul.f32 %v778, %v786
    %v795 = vmul.f32 %v779, %v786
    %v796 = vadd.f32 %v710, %v788
    %v797 = vadd.f32 %v711, %v789
    %v798 = vadd.f32 %v712, %v790
    %v799 = vadd.f32 %v713, %v791
    %v800 = vadd.f32 %v714, %v792
    %v801 = vadd.f32 %v715, %v793
    %v802 = vadd.f32 %v716, %v794
    %v803 = vadd.f32 %v717, %v795
    %s804 = scalar_lea.vmem [#allocation10], 2
    %v805 = vld [vmem:[%s804] sm:$0x1]
    %v806 = vld [vmem:[%s804 + $0x5] sm:$0x1]
    %v807 = vld [vmem:[%s804 + $0xa] sm:$0x1]
    %v808 = vld [vmem:[%s804 + $0xf] sm:$0x1]
    %v813 = vlaneseq
    %v814 = vshrl.u32 %v813, 7
    %v815 = vsub.s32 0, %v814
    %v816 = vrot.slane %v805, %v815
    %v817 = vlaneseq
    %v818 = vshrl.u32 %v817, 7
    %v819 = vsub.s32 0, %v818
    %v820 = vrot.slane %v806, %v819
    %v821 = vlaneseq
    %v822 = vshrl.u32 %v821, 7
    %v823 = vsub.s32 0, %v822
    %v824 = vrot.slane %v807, %v823
    %v825 = vlaneseq
    %v826 = vshrl.u32 %v825, 7
    %v827 = vsub.s32 0, %v826
    %v828 = vrot.slane %v808, %v827
    %v833 = vmul.f32 %v772, %v816
    %v834 = vmul.f32 %v773, %v816
    %v835 = vmul.f32 %v774, %v820
    %v836 = vmul.f32 %v775, %v820
    %v837 = vmul.f32 %v776, %v824
    %v838 = vmul.f32 %v777, %v824
    %v839 = vmul.f32 %v778, %v828
    %v840 = vmul.f32 %v779, %v828
    %v841 = vadd.f32 %v755, %v833
    %v842 = vadd.f32 %v756, %v834
    %v843 = vadd.f32 %v757, %v835
    %v844 = vadd.f32 %v758, %v836
    %v845 = vadd.f32 %v759, %v837
    %v846 = vadd.f32 %v760, %v838
    %v847 = vadd.f32 %v761, %v839
    %v848 = vadd.f32 %v762, %v840
    %s849 = scalar_lea.vmem [#allocation5], 24
    %v850 = vld [vmem:[%s849] sm:$0xf]
    %v851 = vld [vmem:[%s849 + $0x4] sm:$0xf]
    %v852 = vld [vmem:[%s849 + $0x28] sm:$0xf]
    %v853 = vld [vmem:[%s849 + $0x2c] sm:$0xf]
    %v854 = vld [vmem:[%s849 + $0x50] sm:$0xf]
    %v855 = vld [vmem:[%s849 + $0x54] sm:$0xf]
    %v856 = vld [vmem:[%s849 + $0x78] sm:$0xf]
    %v857 = vld [vmem:[%s849 + $0x7c] sm:$0xf]
    %v858 = vunpack.c.l.bf16 %v850
    %v859 = vunpack.c.l.bf16 %v851
    %v860 = vunpack.c.l.bf16 %v852
    %v861 = vunpack.c.l.bf16 %v853
    %v862 = vunpack.c.l.bf16 %v854
    %v863 = vunpack.c.l.bf16 %v855
    %v864 = vunpack.c.l.bf16 %v856
    %v865 = vunpack.c.l.bf16 %v857
    %s866 = scalar_lea.vmem [#allocation8], 3
    %v867 = vld [vmem:[%s866] sm:$0x1]
    %v869 = vlaneseq
    %v870 = vshrl.u32 %v869, 7
    %v871 = vsub.s32 0, %v870
    %v872 = vrot.slane %v867, %v871
    %v874 = vmul.f32 %v858, %v872
    %v875 = vmul.f32 %v859, %v872
    %v876 = vmul.f32 %v860, %v872
    %v877 = vmul.f32 %v861, %v872
    %v878 = vmul.f32 %v862, %v872
    %v879 = vmul.f32 %v863, %v872
    %v880 = vmul.f32 %v864, %v872
    %v881 = vmul.f32 %v865, %v872
    %v882 = vadd.f32 %v796, %v874
    %v883 = vadd.f32 %v797, %v875
    %v884 = vadd.f32 %v798, %v876
    %v885 = vadd.f32 %v799, %v877
    %v886 = vadd.f32 %v800, %v878
    %v887 = vadd.f32 %v801, %v879
    %v888 = vadd.f32 %v802, %v880
    %v889 = vadd.f32 %v803, %v881
    %s890 = scalar_lea.vmem [#allocation10], 3
    %v891 = vld [vmem:[%s890] sm:$0x1]
    %v892 = vld [vmem:[%s890 + $0x5] sm:$0x1]
    %v893 = vld [vmem:[%s890 + $0xa] sm:$0x1]
    %v894 = vld [vmem:[%s890 + $0xf] sm:$0x1]
    %v899 = vlaneseq
    %v900 = vshrl.u32 %v899, 7
    %v901 = vsub.s32 0, %v900
    %v902 = vrot.slane %v891, %v901
    %v903 = vlaneseq
    %v904 = vshrl.u32 %v903, 7
    %v905 = vsub.s32 0, %v904
    %v906 = vrot.slane %v892, %v905
    %v907 = vlaneseq
    %v908 = vshrl.u32 %v907, 7
    %v909 = vsub.s32 0, %v908
    %v910 = vrot.slane %v893, %v909
    %v911 = vlaneseq
    %v912 = vshrl.u32 %v911, 7
    %v913 = vsub.s32 0, %v912
    %v914 = vrot.slane %v894, %v913
    %v919 = vmul.f32 %v858, %v902
    %v920 = vmul.f32 %v859, %v902
    %v921 = vmul.f32 %v860, %v906
    %v922 = vmul.f32 %v861, %v906
    %v923 = vmul.f32 %v862, %v910
    %v924 = vmul.f32 %v863, %v910
    %v925 = vmul.f32 %v864, %v914
    %v926 = vmul.f32 %v865, %v914
    %v927 = vadd.f32 %v841, %v919
    %v928 = vadd.f32 %v842, %v920
    %v929 = vadd.f32 %v843, %v921
    %v930 = vadd.f32 %v844, %v922
    %v931 = vadd.f32 %v845, %v923
    %v932 = vadd.f32 %v846, %v924
    %v933 = vadd.f32 %v847, %v925
    %v934 = vadd.f32 %v848, %v926
    %s935 = scalar_lea.vmem [#allocation5], 32
    %v936 = vld [vmem:[%s935] sm:$0xf]
    %v937 = vld [vmem:[%s935 + $0x4] sm:$0xf]
    %v938 = vld [vmem:[%s935 + $0x28] sm:$0xf]
    %v939 = vld [vmem:[%s935 + $0x2c] sm:$0xf]
    %v940 = vld [vmem:[%s935 + $0x50] sm:$0xf]
    %v941 = vld [vmem:[%s935 + $0x54] sm:$0xf]
    %v942 = vld [vmem:[%s935 + $0x78] sm:$0xf]
    %v943 = vld [vmem:[%s935 + $0x7c] sm:$0xf]
    %v944 = vunpack.c.l.bf16 %v936
    %v945 = vunpack.c.l.bf16 %v937
    %v946 = vunpack.c.l.bf16 %v938
    %v947 = vunpack.c.l.bf16 %v939
    %v948 = vunpack.c.l.bf16 %v940
    %v949 = vunpack.c.l.bf16 %v941
    %v950 = vunpack.c.l.bf16 %v942
    %v951 = vunpack.c.l.bf16 %v943
    %s952 = scalar_lea.vmem [#allocation8], 4
    %v953 = vld [vmem:[%s952] sm:$0x1]
    %v955 = vlaneseq
    %v956 = vshrl.u32 %v955, 7
    %v957 = vsub.s32 0, %v956
    %v958 = vrot.slane %v953, %v957
    %v960 = vmul.f32 %v944, %v958
    %v961 = vmul.f32 %v945, %v958
    %v962 = vmul.f32 %v946, %v958
    %v963 = vmul.f32 %v947, %v958
    %v964 = vmul.f32 %v948, %v958
    %v965 = vmul.f32 %v949, %v958
    %v966 = vmul.f32 %v950, %v958
    %v967 = vmul.f32 %v951, %v958
    %v968 = vadd.f32 %v882, %v960
    %v969 = vadd.f32 %v883, %v961
    %v970 = vadd.f32 %v884, %v962
    %v971 = vadd.f32 %v885, %v963
    %v972 = vadd.f32 %v886, %v964
    %v973 = vadd.f32 %v887, %v965
    %v974 = vadd.f32 %v888, %v966
    %v975 = vadd.f32 %v889, %v967
    %s976 = scalar_lea.vmem [#allocation10], 4
    %v977 = vld [vmem:[%s976] sm:$0x1]
    %v978 = vld [vmem:[%s976 + $0x5] sm:$0x1]
    %v979 = vld [vmem:[%s976 + $0xa] sm:$0x1]
    %v980 = vld [vmem:[%s976 + $0xf] sm:$0x1]
    %v985 = vlaneseq
    %v986 = vshrl.u32 %v985, 7
    %v987 = vsub.s32 0, %v986
    %v988 = vrot.slane %v977, %v987
    %v989 = vlaneseq
    %v990 = vshrl.u32 %v989, 7
    %v991 = vsub.s32 0, %v990
    %v992 = vrot.slane %v978, %v991
    %v993 = vlaneseq
    %v994 = vshrl.u32 %v993, 7
    %v995 = vsub.s32 0, %v994
    %v996 = vrot.slane %v979, %v995
    %v997 = vlaneseq
    %v998 = vshrl.u32 %v997, 7
    %v999 = vsub.s32 0, %v998
    %v1000 = vrot.slane %v980, %v999
    %v1005 = vmul.f32 %v944, %v988
    %v1006 = vmul.f32 %v945, %v988
    %v1007 = vmul.f32 %v946, %v992
    %v1008 = vmul.f32 %v947, %v992
    %v1009 = vmul.f32 %v948, %v996
    %v1010 = vmul.f32 %v949, %v996
    %v1011 = vmul.f32 %v950, %v1000
    %v1012 = vmul.f32 %v951, %v1000
    %v1013 = vadd.f32 %v927, %v1005
    %v1014 = vadd.f32 %v928, %v1006
    %v1015 = vadd.f32 %v929, %v1007
    %v1016 = vadd.f32 %v930, %v1008
    %v1017 = vadd.f32 %v931, %v1009
    %v1018 = vadd.f32 %v932, %v1010
    %v1019 = vadd.f32 %v933, %v1011
    %v1020 = vadd.f32 %v934, %v1012
    %vm1021 = vcmask 523264
    %v1022 = vsel %vm1021, %v968, 0.0
    %1023 = vadd.xlane.f32.xlu0 %v1022
    %v1024 = vpop.xlane.xlu0 %1023
    %v1025 = vsel %vm1021, %v969, 0.0
    %1026 = vadd.xlane.f32.xlu0 %v1025
    %v1027 = vpop.xlane.xlu0 %1026
    %v1028 = vsel %vm1021, %v970, 0.0
    %1029 = vadd.xlane.f32.xlu0 %v1028
    %v1030 = vpop.xlane.xlu0 %1029
    %v1031 = vsel %vm1021, %v971, 0.0
    %1032 = vadd.xlane.f32.xlu0 %v1031
    %v1033 = vpop.xlane.xlu0 %1032
    %v1034 = vsel %vm1021, %v972, 0.0
    %1035 = vadd.xlane.f32.xlu0 %v1034
    %v1036 = vpop.xlane.xlu0 %1035
    %v1037 = vsel %vm1021, %v973, 0.0
    %1038 = vadd.xlane.f32.xlu0 %v1037
    %v1039 = vpop.xlane.xlu0 %1038
    %v1040 = vsel %vm1021, %v974, 0.0
    %1041 = vadd.xlane.f32.xlu0 %v1040
    %v1042 = vpop.xlane.xlu0 %1041
    %v1043 = vsel %vm1021, %v975, 0.0
    %1044 = vadd.xlane.f32.xlu0 %v1043
    %v1045 = vpop.xlane.xlu0 %1044
    %1054 = vrot.lane.b32.xlu0 %v968, 64
    %v1055 = vpop.permute.xlu0 %1054
    %1056 = vrot.lane.b32.xlu0 %v969, 64
    %v1057 = vpop.permute.xlu0 %1056
    %1058 = vrot.lane.b32.xlu0 %v970, 64
    %v1059 = vpop.permute.xlu0 %1058
    %1060 = vrot.lane.b32.xlu0 %v971, 64
    %v1061 = vpop.permute.xlu0 %1060
    %1062 = vrot.lane.b32.xlu0 %v972, 64
    %v1063 = vpop.permute.xlu0 %1062
    %1064 = vrot.lane.b32.xlu0 %v973, 64
    %v1065 = vpop.permute.xlu0 %1064
    %1066 = vrot.lane.b32.xlu0 %v974, 64
    %v1067 = vpop.permute.xlu0 %1066
    %1068 = vrot.lane.b32.xlu0 %v975, 64
    %v1069 = vpop.permute.xlu0 %1068
    %v1078 = vsel %vm1021, %v1055, 0.0
    %1079 = vadd.xlane.f32.xlu0 %v1078
    %v1080 = vpop.xlane.xlu0 %1079
    %v1081 = vsel %vm1021, %v1057, 0.0
    %1082 = vadd.xlane.f32.xlu0 %v1081
    %v1083 = vpop.xlane.xlu0 %1082
    %v1084 = vsel %vm1021, %v1059, 0.0
    %1085 = vadd.xlane.f32.xlu0 %v1084
    %v1086 = vpop.xlane.xlu0 %1085
    %v1087 = vsel %vm1021, %v1061, 0.0
    %1088 = vadd.xlane.f32.xlu0 %v1087
    %v1089 = vpop.xlane.xlu0 %1088
    %v1090 = vsel %vm1021, %v1063, 0.0
    %1091 = vadd.xlane.f32.xlu0 %v1090
    %v1092 = vpop.xlane.xlu0 %1091
    %v1093 = vsel %vm1021, %v1065, 0.0
    %1094 = vadd.xlane.f32.xlu0 %v1093
    %v1095 = vpop.xlane.xlu0 %1094
    %v1096 = vsel %vm1021, %v1067, 0.0
    %1097 = vadd.xlane.f32.xlu0 %v1096
    %v1098 = vpop.xlane.xlu0 %1097
    %v1099 = vsel %vm1021, %v1069, 0.0
    %1100 = vadd.xlane.f32.xlu0 %v1099
    %v1101 = vpop.xlane.xlu0 %1100
    %v1102 = vmax.f32 %v1024, %v1036
    %v1103 = vmax.f32 %v1030, %v1042
    %v1104 = vmax.f32 %v1102, %v1103
    %v1105 = vmax.f32 %v1027, %v1039
    %v1106 = vmax.f32 %v1033, %v1045
    %v1107 = vmax.f32 %v1105, %v1106
    %v1108 = vsub.f32 %v1024, %v1104
    %v1109 = vsub.f32 %v1027, %v1107
    %v1110 = vsub.f32 %v1030, %v1104
    %v1111 = vsub.f32 %v1033, %v1107
    %v1112 = vsub.f32 %v1036, %v1104
    %v1113 = vsub.f32 %v1039, %v1107
    %v1114 = vsub.f32 %v1042, %v1104
    %v1115 = vsub.f32 %v1045, %v1107
    %v1116 = vmul.f32 %v1108, 1.442695
    %v1117 = vpow.pop %v1116
    %v1118 = vmul.f32 %v1109, 1.442695
    %v1119 = vpow.pop %v1118
    %v1120 = vmul.f32 %v1110, 1.442695
    %v1121 = vpow.pop %v1120
    %v1122 = vmul.f32 %v1111, 1.442695
    %v1123 = vpow.pop %v1122
    %v1124 = vmul.f32 %v1112, 1.442695
    %v1125 = vpow.pop %v1124
    %v1126 = vmul.f32 %v1113, 1.442695
    %v1127 = vpow.pop %v1126
    %v1128 = vmul.f32 %v1114, 1.442695
    %v1129 = vpow.pop %v1128
    %v1130 = vmul.f32 %v1115, 1.442695
    %v1131 = vpow.pop %v1130
    %v1132 = vadd.f32 %v1117, %v1121
    %v1133 = vadd.f32 %v1132, %v1125
    %v1134 = vadd.f32 %v1133, %v1129
    %v1135 = vadd.f32 %v1119, %v1123
    %v1136 = vadd.f32 %v1135, %v1127
    %v1137 = vadd.f32 %v1136, %v1131
    %v1138 = vrcp.pop %v1134
    %v1139 = vrcp.pop %v1137
    %v1140 = vmul.f32 %v1117, %v1138
    %v1141 = vmul.f32 %v1119, %v1139
    %v1142 = vmul.f32 %v1121, %v1138
    %v1143 = vmul.f32 %v1123, %v1139
    %v1144 = vmul.f32 %v1125, %v1138
    %v1145 = vmul.f32 %v1127, %v1139
    %v1146 = vmul.f32 %v1129, %v1138
    %v1147 = vmul.f32 %v1131, %v1139
    %v1148 = vmax.f32 %v1080, %v1092
    %v1149 = vmax.f32 %v1086, %v1098
    %v1150 = vmax.f32 %v1148, %v1149
    %v1151 = vmax.f32 %v1083, %v1095
    %v1152 = vmax.f32 %v1089, %v1101
    %v1153 = vmax.f32 %v1151, %v1152
    %v1154 = vsub.f32 %v1080, %v1150
    %v1155 = vsub.f32 %v1083, %v1153
    %v1156 = vsub.f32 %v1086, %v1150
    %v1157 = vsub.f32 %v1089, %v1153
    %v1158 = vsub.f32 %v1092, %v1150
    %v1159 = vsub.f32 %v1095, %v1153
    %v1160 = vsub.f32 %v1098, %v1150
    %v1161 = vsub.f32 %v1101, %v1153
    %v1162 = vmul.f32 %v1154, 1.442695
    %v1163 = vpow.pop %v1162
    %v1164 = vmul.f32 %v1155, 1.442695
    %v1165 = vpow.pop %v1164
    %v1166 = vmul.f32 %v1156, 1.442695
    %v1167 = vpow.pop %v1166
    %v1168 = vmul.f32 %v1157, 1.442695
    %v1169 = vpow.pop %v1168
    %v1170 = vmul.f32 %v1158, 1.442695
    %v1171 = vpow.pop %v1170
    %v1172 = vmul.f32 %v1159, 1.442695
    %v1173 = vpow.pop %v1172
    %v1174 = vmul.f32 %v1160, 1.442695
    %v1175 = vpow.pop %v1174
    %v1176 = vmul.f32 %v1161, 1.442695
    %v1177 = vpow.pop %v1176
    %v1178 = vadd.f32 %v1163, %v1167
    %v1179 = vadd.f32 %v1178, %v1171
    %v1180 = vadd.f32 %v1179, %v1175
    %v1181 = vadd.f32 %v1165, %v1169
    %v1182 = vadd.f32 %v1181, %v1173
    %v1183 = vadd.f32 %v1182, %v1177
    %v1184 = vrcp.pop %v1180
    %v1185 = vrcp.pop %v1183
    %v1186 = vmul.f32 %v1163, %v1184
    %v1187 = vmul.f32 %v1165, %v1185
    %v1188 = vmul.f32 %v1167, %v1184
    %v1189 = vmul.f32 %v1169, %v1185
    %v1190 = vmul.f32 %v1171, %v1184
    %v1191 = vmul.f32 %v1173, %v1185
    %v1192 = vmul.f32 %v1175, %v1184
    %v1193 = vmul.f32 %v1177, %v1185
    %v1194 = vmul.f32 %v1140, %v1013
    %v1195 = vmul.f32 %v1141, %v1014
    %v1196 = vmul.f32 %v1142, %v1015
    %v1197 = vmul.f32 %v1143, %v1016
    %v1198 = vmul.f32 %v1144, %v1017
    %v1199 = vmul.f32 %v1145, %v1018
    %v1200 = vmul.f32 %v1146, %v1019
    %v1201 = vmul.f32 %v1147, %v1020
    %v1202 = vsel %vm1021, %v1194, 0.0
    %v1203 = vsel %vm1021, %v1196, 0.0
    %v1204 = vadd.f32 %v1202, %v1203
    %v1205 = vsel %vm1021, %v1198, 0.0
    %v1206 = vadd.f32 %v1204, %v1205
    %v1207 = vsel %vm1021, %v1200, 0.0
    %v1208 = vadd.f32 %v1206, %v1207
    %v1209 = vsel %vm1021, %v1195, 0.0
    %v1210 = vsel %vm1021, %v1197, 0.0
    %v1211 = vadd.f32 %v1209, %v1210
    %v1212 = vsel %vm1021, %v1199, 0.0
    %v1213 = vadd.f32 %v1211, %v1212
    %v1214 = vsel %vm1021, %v1201, 0.0
    %v1215 = vadd.f32 %v1213, %v1214
    %v1216 = vld [vmem:[#allocation11] sm:$0x1]
    %v1218 = vlaneseq
    %v1219 = vshrl.u32 %v1218, 7
    %v1220 = vsub.s32 0, %v1219
    %v1221 = vrot.slane %v1216, %v1220
    %v1223 = vadd.f32 %v1208, %v1221
    %v1224 = vadd.f32 %v1215, %v1221
    %v1225 = vmul.f32 %v1186, %v1013
    %v1226 = vmul.f32 %v1187, %v1014
    %v1227 = vmul.f32 %v1188, %v1015
    %v1228 = vmul.f32 %v1189, %v1016
    %v1229 = vmul.f32 %v1190, %v1017
    %v1230 = vmul.f32 %v1191, %v1018
    %v1231 = vmul.f32 %v1192, %v1019
    %v1232 = vmul.f32 %v1193, %v1020
    %vm1233 = vcmask 1048064
    %v1234 = vsel %vm1233, %v1225, 0.0
    %v1235 = vsel %vm1233, %v1227, 0.0
    %v1236 = vadd.f32 %v1234, %v1235
    %v1237 = vsel %vm1233, %v1229, 0.0
    %v1238 = vadd.f32 %v1236, %v1237
    %v1239 = vsel %vm1233, %v1231, 0.0
    %v1240 = vadd.f32 %v1238, %v1239
    %v1241 = vsel %vm1233, %v1226, 0.0
    %v1242 = vsel %vm1233, %v1228, 0.0
    %v1243 = vadd.f32 %v1241, %v1242
    %v1244 = vsel %vm1233, %v1230, 0.0
    %v1245 = vadd.f32 %v1243, %v1244
    %v1246 = vsel %vm1233, %v1232, 0.0
    %v1247 = vadd.f32 %v1245, %v1246
    %v1248 = vadd.f32 %v1240, %v1221
    %v1249 = vadd.f32 %v1247, %v1221
    %v1250 = vld [vmem:[#allocation7] sm:$0xf]
    %v1251 = vld [vmem:[#allocation7 + $0x4] sm:$0xf]
    %v1252 = vld [vmem:[#allocation7 + $0x38] sm:$0xf]
    %v1253 = vld [vmem:[#allocation7 + $0x3c] sm:$0xf]
    %v1254 = vld [vmem:[#allocation7 + $0x70] sm:$0xf]
    %v1255 = vld [vmem:[#allocation7 + $0x74] sm:$0xf]
    %v1256 = vld [vmem:[#allocation7 + $0xa8] sm:$0xf]
    %v1257 = vld [vmem:[#allocation7 + $0xac] sm:$0xf]
    %v1258 = vunpack.c.l.bf16 %v1250
    %v1259 = vunpack.c.l.bf16 %v1251
    %v1260 = vunpack.c.l.bf16 %v1252
    %v1261 = vunpack.c.l.bf16 %v1253
    %v1262 = vunpack.c.l.bf16 %v1254
    %v1263 = vunpack.c.l.bf16 %v1255
    %v1264 = vunpack.c.l.bf16 %v1256
    %v1265 = vunpack.c.l.bf16 %v1257
    %v1266 = vld [vmem:[#allocation13] sm:$0x1]
    %v1268 = vlaneseq
    %v1269 = vshrl.u32 %v1268, 7
    %v1270 = vsub.s32 0, %v1269
    %v1271 = vrot.slane %v1266, %v1270
    %v1273 = vmul.f32 %v1258, %v1271
    %v1274 = vmul.f32 %v1259, %v1271
    %v1275 = vmul.f32 %v1260, %v1271
    %v1276 = vmul.f32 %v1261, %v1271
    %v1277 = vmul.f32 %v1262, %v1271
    %v1278 = vmul.f32 %v1263, %v1271
    %v1279 = vmul.f32 %v1264, %v1271
    %v1280 = vmul.f32 %v1265, %v1271
    %v1281 = vadd.f32 %v1273, 0.0
    %v1282 = vadd.f32 %v1274, 0.0
    %v1283 = vadd.f32 %v1275, 0.0
    %v1284 = vadd.f32 %v1276, 0.0
    %v1285 = vadd.f32 %v1277, 0.0
    %v1286 = vadd.f32 %v1278, 0.0
    %v1287 = vadd.f32 %v1279, 0.0
    %v1288 = vadd.f32 %v1280, 0.0
    %v1289 = vld [vmem:[#allocation14] sm:$0x1]
    %v1290 = vld [vmem:[#allocation14 + $0x7] sm:$0x1]
    %v1291 = vld [vmem:[#allocation14 + $0xe] sm:$0x1]
    %v1292 = vld [vmem:[#allocation14 + $0x15] sm:$0x1]
    %v1297 = vlaneseq
    %v1298 = vshrl.u32 %v1297, 7
    %v1299 = vsub.s32 0, %v1298
    %v1300 = vrot.slane %v1289, %v1299
    %v1301 = vlaneseq
    %v1302 = vshrl.u32 %v1301, 7
    %v1303 = vsub.s32 0, %v1302
    %v1304 = vrot.slane %v1290, %v1303
    %v1305 = vlaneseq
    %v1306 = vshrl.u32 %v1305, 7
    %v1307 = vsub.s32 0, %v1306
    %v1308 = vrot.slane %v1291, %v1307
    %v1309 = vlaneseq
    %v1310 = vshrl.u32 %v1309, 7
    %v1311 = vsub.s32 0, %v1310
    %v1312 = vrot.slane %v1292, %v1311
    %v1317 = vmul.f32 %v1258, %v1300
    %v1318 = vmul.f32 %v1259, %v1300
    %v1319 = vmul.f32 %v1260, %v1304
    %v1320 = vmul.f32 %v1261, %v1304
    %v1321 = vmul.f32 %v1262, %v1308
    %v1322 = vmul.f32 %v1263, %v1308
    %v1323 = vmul.f32 %v1264, %v1312
    %v1324 = vmul.f32 %v1265, %v1312
    %v1325 = vadd.f32 %v1317, 0.0
    %v1326 = vadd.f32 %v1318, 0.0
    %v1327 = vadd.f32 %v1319, 0.0
    %v1328 = vadd.f32 %v1320, 0.0
    %v1329 = vadd.f32 %v1321, 0.0
    %v1330 = vadd.f32 %v1322, 0.0
    %v1331 = vadd.f32 %v1323, 0.0
    %v1332 = vadd.f32 %v1324, 0.0
    %s1333 = scalar_lea.vmem [#allocation7], 8
    %v1334 = vld [vmem:[%s1333] sm:$0xf]
    %v1335 = vld [vmem:[%s1333 + $0x4] sm:$0xf]
    %v1336 = vld [vmem:[%s1333 + $0x38] sm:$0xf]
    %v1337 = vld [vmem:[%s1333 + $0x3c] sm:$0xf]
    %v1338 = vld [vmem:[%s1333 + $0x70] sm:$0xf]
    %v1339 = vld [vmem:[%s1333 + $0x74] sm:$0xf]
    %v1340 = vld [vmem:[%s1333 + $0xa8] sm:$0xf]
    %v1341 = vld [vmem:[%s1333 + $0xac] sm:$0xf]
    %v1342 = vunpack.c.l.bf16 %v1334
    %v1343 = vunpack.c.l.bf16 %v1335
    %v1344 = vunpack.c.l.bf16 %v1336
    %v1345 = vunpack.c.l.bf16 %v1337
    %v1346 = vunpack.c.l.bf16 %v1338
    %v1347 = vunpack.c.l.bf16 %v1339
    %v1348 = vunpack.c.l.bf16 %v1340
    %v1349 = vunpack.c.l.bf16 %v1341
    %s1350 = scalar_lea.vmem [#allocation13], 1
    %v1351 = vld [vmem:[%s1350] sm:$0x1]
    %v1353 = vlaneseq
    %v1354 = vshrl.u32 %v1353, 7
    %v1355 = vsub.s32 0, %v1354
    %v1356 = vrot.slane %v1351, %v1355
    %v1358 = vmul.f32 %v1342, %v1356
    %v1359 = vmul.f32 %v1343, %v1356
    %v1360 = vmul.f32 %v1344, %v1356
    %v1361 = vmul.f32 %v1345, %v1356
    %v1362 = vmul.f32 %v1346, %v1356
    %v1363 = vmul.f32 %v1347, %v1356
    %v1364 = vmul.f32 %v1348, %v1356
    %v1365 = vmul.f32 %v1349, %v1356
    %v1366 = vadd.f32 %v1281, %v1358
    %v1367 = vadd.f32 %v1282, %v1359
    %v1368 = vadd.f32 %v1283, %v1360
    %v1369 = vadd.f32 %v1284, %v1361
    %v1370 = vadd.f32 %v1285, %v1362
    %v1371 = vadd.f32 %v1286, %v1363
    %v1372 = vadd.f32 %v1287, %v1364
    %v1373 = vadd.f32 %v1288, %v1365
    %s1374 = scalar_lea.vmem [#allocation14], 1
    %v1375 = vld [vmem:[%s1374] sm:$0x1]
    %v1376 = vld [vmem:[%s1374 + $0x7] sm:$0x1]
    %v1377 = vld [vmem:[%s1374 + $0xe] sm:$0x1]
    %v1378 = vld [vmem:[%s1374 + $0x15] sm:$0x1]
    %v1383 = vlaneseq
    %v1384 = vshrl.u32 %v1383, 7
    %v1385 = vsub.s32 0, %v1384
    %v1386 = vrot.slane %v1375, %v1385
    %v1387 = vlaneseq
    %v1388 = vshrl.u32 %v1387, 7
    %v1389 = vsub.s32 0, %v1388
    %v1390 = vrot.slane %v1376, %v1389
    %v1391 = vlaneseq
    %v1392 = vshrl.u32 %v1391, 7
    %v1393 = vsub.s32 0, %v1392
    %v1394 = vrot.slane %v1377, %v1393
    %v1395 = vlaneseq
    %v1396 = vshrl.u32 %v1395, 7
    %v1397 = vsub.s32 0, %v1396
    %v1398 = vrot.slane %v1378, %v1397
    %v1403 = vmul.f32 %v1342, %v1386
    %v1404 = vmul.f32 %v1343, %v1386
    %v1405 = vmul.f32 %v1344, %v1390
    %v1406 = vmul.f32 %v1345, %v1390
    %v1407 = vmul.f32 %v1346, %v1394
    %v1408 = vmul.f32 %v1347, %v1394
    %v1409 = vmul.f32 %v1348, %v1398
    %v1410 = vmul.f32 %v1349, %v1398
    %v1411 = vadd.f32 %v1325, %v1403
    %v1412 = vadd.f32 %v1326, %v1404
    %v1413 = vadd.f32 %v1327, %v1405
    %v1414 = vadd.f32 %v1328, %v1406
    %v1415 = vadd.f32 %v1329, %v1407
    %v1416 = vadd.f32 %v1330, %v1408
    %v1417 = vadd.f32 %v1331, %v1409
    %v1418 = vadd.f32 %v1332, %v1410
    %s1419 = scalar_lea.vmem [#allocation7], 16
    %v1420 = vld [vmem:[%s1419] sm:$0xf]
    %v1421 = vld [vmem:[%s1419 + $0x4] sm:$0xf]
    %v1422 = vld [vmem:[%s1419 + $0x38] sm:$0xf]
    %v1423 = vld [vmem:[%s1419 + $0x3c] sm:$0xf]
    %v1424 = vld [vmem:[%s1419 + $0x70] sm:$0xf]
    %v1425 = vld [vmem:[%s1419 + $0x74] sm:$0xf]
    %v1426 = vld [vmem:[%s1419 + $0xa8] sm:$0xf]
    %v1427 = vld [vmem:[%s1419 + $0xac] sm:$0xf]
    %v1428 = vunpack.c.l.bf16 %v1420
    %v1429 = vunpack.c.l.bf16 %v1421
    %v1430 = vunpack.c.l.bf16 %v1422
    %v1431 = vunpack.c.l.bf16 %v1423
    %v1432 = vunpack.c.l.bf16 %v1424
    %v1433 = vunpack.c.l.bf16 %v1425
    %v1434 = vunpack.c.l.bf16 %v1426
    %v1435 = vunpack.c.l.bf16 %v1427
    %s1436 = scalar_lea.vmem [#allocation13], 2
    %v1437 = vld [vmem:[%s1436] sm:$0x1]
    %v1439 = vlaneseq
    %v1440 = vshrl.u32 %v1439, 7
    %v1441 = vsub.s32 0, %v1440
    %v1442 = vrot.slane %v1437, %v1441
    %v1444 = vmul.f32 %v1428, %v1442
    %v1445 = vmul.f32 %v1429, %v1442
    %v1446 = vmul.f32 %v1430, %v1442
    %v1447 = vmul.f32 %v1431, %v1442
    %v1448 = vmul.f32 %v1432, %v1442
    %v1449 = vmul.f32 %v1433, %v1442
    %v1450 = vmul.f32 %v1434, %v1442
    %v1451 = vmul.f32 %v1435, %v1442
    %v1452 = vadd.f32 %v1366, %v1444
    %v1453 = vadd.f32 %v1367, %v1445
    %v1454 = vadd.f32 %v1368, %v1446
    %v1455 = vadd.f32 %v1369, %v1447
    %v1456 = vadd.f32 %v1370, %v1448
    %v1457 = vadd.f32 %v1371, %v1449
    %v1458 = vadd.f32 %v1372, %v1450
    %v1459 = vadd.f32 %v1373, %v1451
    %s1460 = scalar_lea.vmem [#allocation14], 2
    %v1461 = vld [vmem:[%s1460] sm:$0x1]
    %v1462 = vld [vmem:[%s1460 + $0x7] sm:$0x1]
    %v1463 = vld [vmem:[%s1460 + $0xe] sm:$0x1]
    %v1464 = vld [vmem:[%s1460 + $0x15] sm:$0x1]
    %v1469 = vlaneseq
    %v1470 = vshrl.u32 %v1469, 7
    %v1471 = vsub.s32 0, %v1470
    %v1472 = vrot.slane %v1461, %v1471
    %v1473 = vlaneseq
    %v1474 = vshrl.u32 %v1473, 7
    %v1475 = vsub.s32 0, %v1474
    %v1476 = vrot.slane %v1462, %v1475
    %v1477 = vlaneseq
    %v1478 = vshrl.u32 %v1477, 7
    %v1479 = vsub.s32 0, %v1478
    %v1480 = vrot.slane %v1463, %v1479
    %v1481 = vlaneseq
    %v1482 = vshrl.u32 %v1481, 7
    %v1483 = vsub.s32 0, %v1482
    %v1484 = vrot.slane %v1464, %v1483
    %v1489 = vmul.f32 %v1428, %v1472
    %v1490 = vmul.f32 %v1429, %v1472
    %v1491 = vmul.f32 %v1430, %v1476
    %v1492 = vmul.f32 %v1431, %v1476
    %v1493 = vmul.f32 %v1432, %v1480
    %v1494 = vmul.f32 %v1433, %v1480
    %v1495 = vmul.f32 %v1434, %v1484
    %v1496 = vmul.f32 %v1435, %v1484
    %v1497 = vadd.f32 %v1411, %v1489
    %v1498 = vadd.f32 %v1412, %v1490
    %v1499 = vadd.f32 %v1413, %v1491
    %v1500 = vadd.f32 %v1414, %v1492
    %v1501 = vadd.f32 %v1415, %v1493
    %v1502 = vadd.f32 %v1416, %v1494
    %v1503 = vadd.f32 %v1417, %v1495
    %v1504 = vadd.f32 %v1418, %v1496
    %s1505 = scalar_lea.vmem [#allocation7], 24
    %v1506 = vld [vmem:[%s1505] sm:$0xf]
    %v1507 = vld [vmem:[%s1505 + $0x4] sm:$0xf]
    %v1508 = vld [vmem:[%s1505 + $0x38] sm:$0xf]
    %v1509 = vld [vmem:[%s1505 + $0x3c] sm:$0xf]
    %v1510 = vld [vmem:[%s1505 + $0x70] sm:$0xf]
    %v1511 = vld [vmem:[%s1505 + $0x74] sm:$0xf]
    %v1512 = vld [vmem:[%s1505 + $0xa8] sm:$0xf]
    %v1513 = vld [vmem:[%s1505 + $0xac] sm:$0xf]
    %v1514 = vunpack.c.l.bf16 %v1506
    %v1515 = vunpack.c.l.bf16 %v1507
    %v1516 = vunpack.c.l.bf16 %v1508
    %v1517 = vunpack.c.l.bf16 %v1509
    %v1518 = vunpack.c.l.bf16 %v1510
    %v1519 = vunpack.c.l.bf16 %v1511
    %v1520 = vunpack.c.l.bf16 %v1512
    %v1521 = vunpack.c.l.bf16 %v1513
    %s1522 = scalar_lea.vmem [#allocation13], 3
    %v1523 = vld [vmem:[%s1522] sm:$0x1]
    %v1525 = vlaneseq
    %v1526 = vshrl.u32 %v1525, 7
    %v1527 = vsub.s32 0, %v1526
    %v1528 = vrot.slane %v1523, %v1527
    %v1530 = vmul.f32 %v1514, %v1528
    %v1531 = vmul.f32 %v1515, %v1528
    %v1532 = vmul.f32 %v1516, %v1528
    %v1533 = vmul.f32 %v1517, %v1528
    %v1534 = vmul.f32 %v1518, %v1528
    %v1535 = vmul.f32 %v1519, %v1528
    %v1536 = vmul.f32 %v1520, %v1528
    %v1537 = vmul.f32 %v1521, %v1528
    %v1538 = vadd.f32 %v1452, %v1530
    %v1539 = vadd.f32 %v1453, %v1531
    %v1540 = vadd.f32 %v1454, %v1532
    %v1541 = vadd.f32 %v1455, %v1533
    %v1542 = vadd.f32 %v1456, %v1534
    %v1543 = vadd.f32 %v1457, %v1535
    %v1544 = vadd.f32 %v1458, %v1536
    %v1545 = vadd.f32 %v1459, %v1537
    %s1546 = scalar_lea.vmem [#allocation14], 3
    %v1547 = vld [vmem:[%s1546] sm:$0x1]
    %v1548 = vld [vmem:[%s1546 + $0x7] sm:$0x1]
    %v1549 = vld [vmem:[%s1546 + $0xe] sm:$0x1]
    %v1550 = vld [vmem:[%s1546 + $0x15] sm:$0x1]
    %v1555 = vlaneseq
    %v1556 = vshrl.u32 %v1555, 7
    %v1557 = vsub.s32 0, %v1556
    %v1558 = vrot.slane %v1547, %v1557
    %v1559 = vlaneseq
    %v1560 = vshrl.u32 %v1559, 7
    %v1561 = vsub.s32 0, %v1560
    %v1562 = vrot.slane %v1548, %v1561
    %v1563 = vlaneseq
    %v1564 = vshrl.u32 %v1563, 7
    %v1565 = vsub.s32 0, %v1564
    %v1566 = vrot.slane %v1549, %v1565
    %v1567 = vlaneseq
    %v1568 = vshrl.u32 %v1567, 7
    %v1569 = vsub.s32 0, %v1568
    %v1570 = vrot.slane %v1550, %v1569
    %v1575 = vmul.f32 %v1514, %v1558
    %v1576 = vmul.f32 %v1515, %v1558
    %v1577 = vmul.f32 %v1516, %v1562
    %v1578 = vmul.f32 %v1517, %v1562
    %v1579 = vmul.f32 %v1518, %v1566
    %v1580 = vmul.f32 %v1519, %v1566
    %v1581 = vmul.f32 %v1520, %v1570
    %v1582 = vmul.f32 %v1521, %v1570
    %v1583 = vadd.f32 %v1497, %v1575
    %v1584 = vadd.f32 %v1498, %v1576
    %v1585 = vadd.f32 %v1499, %v1577
    %v1586 = vadd.f32 %v1500, %v1578
    %v1587 = vadd.f32 %v1501, %v1579
    %v1588 = vadd.f32 %v1502, %v1580
    %v1589 = vadd.f32 %v1503, %v1581
    %v1590 = vadd.f32 %v1504, %v1582
    %s1591 = scalar_lea.vmem [#allocation7], 32
    %v1592 = vld [vmem:[%s1591] sm:$0xf]
    %v1593 = vld [vmem:[%s1591 + $0x4] sm:$0xf]
    %v1594 = vld [vmem:[%s1591 + $0x38] sm:$0xf]
    %v1595 = vld [vmem:[%s1591 + $0x3c] sm:$0xf]
    %v1596 = vld [vmem:[%s1591 + $0x70] sm:$0xf]
    %v1597 = vld [vmem:[%s1591 + $0x74] sm:$0xf]
    %v1598 = vld [vmem:[%s1591 + $0xa8] sm:$0xf]
    %v1599 = vld [vmem:[%s1591 + $0xac] sm:$0xf]
    %v1600 = vunpack.c.l.bf16 %v1592
    %v1601 = vunpack.c.l.bf16 %v1593
    %v1602 = vunpack.c.l.bf16 %v1594
    %v1603 = vunpack.c.l.bf16 %v1595
    %v1604 = vunpack.c.l.bf16 %v1596
    %v1605 = vunpack.c.l.bf16 %v1597
    %v1606 = vunpack.c.l.bf16 %v1598
    %v1607 = vunpack.c.l.bf16 %v1599
    %s1608 = scalar_lea.vmem [#allocation13], 4
    %v1609 = vld [vmem:[%s1608] sm:$0x1]
    %v1611 = vlaneseq
    %v1612 = vshrl.u32 %v1611, 7
    %v1613 = vsub.s32 0, %v1612
    %v1614 = vrot.slane %v1609, %v1613
    %v1616 = vmul.f32 %v1600, %v1614
    %v1617 = vmul.f32 %v1601, %v1614
    %v1618 = vmul.f32 %v1602, %v1614
    %v1619 = vmul.f32 %v1603, %v1614
    %v1620 = vmul.f32 %v1604, %v1614
    %v1621 = vmul.f32 %v1605, %v1614
    %v1622 = vmul.f32 %v1606, %v1614
    %v1623 = vmul.f32 %v1607, %v1614
    %v1624 = vadd.f32 %v1538, %v1616
    %v1625 = vadd.f32 %v1539, %v1617
    %v1626 = vadd.f32 %v1540, %v1618
    %v1627 = vadd.f32 %v1541, %v1619
    %v1628 = vadd.f32 %v1542, %v1620
    %v1629 = vadd.f32 %v1543, %v1621
    %v1630 = vadd.f32 %v1544, %v1622
    %v1631 = vadd.f32 %v1545, %v1623
    %s1632 = scalar_lea.vmem [#allocation14], 4
    %v1633 = vld [vmem:[%s1632] sm:$0x1]
    %v1634 = vld [vmem:[%s1632 + $0x7] sm:$0x1]
    %v1635 = vld [vmem:[%s1632 + $0xe] sm:$0x1]
    %v1636 = vld [vmem:[%s1632 + $0x15] sm:$0x1]
    %v1641 = vlaneseq
    %v1642 = vshrl.u32 %v1641, 7
    %v1643 = vsub.s32 0, %v1642
    %v1644 = vrot.slane %v1633, %v1643
    %v1645 = vlaneseq
    %v1646 = vshrl.u32 %v1645, 7
    %v1647 = vsub.s32 0, %v1646
    %v1648 = vrot.slane %v1634, %v1647
    %v1649 = vlaneseq
    %v1650 = vshrl.u32 %v1649, 7
    %v1651 = vsub.s32 0, %v1650
    %v1652 = vrot.slane %v1635, %v1651
    %v1653 = vlaneseq
    %v1654 = vshrl.u32 %v1653, 7
    %v1655 = vsub.s32 0, %v1654
    %v1656 = vrot.slane %v1636, %v1655
    %v1661 = vmul.f32 %v1600, %v1644
    %v1662 = vmul.f32 %v1601, %v1644
    %v1663 = vmul.f32 %v1602, %v1648
    %v1664 = vmul.f32 %v1603, %v1648
    %v1665 = vmul.f32 %v1604, %v1652
    %v1666 = vmul.f32 %v1605, %v1652
    %v1667 = vmul.f32 %v1606, %v1656
    %v1668 = vmul.f32 %v1607, %v1656
    %v1669 = vadd.f32 %v1583, %v1661
    %v1670 = vadd.f32 %v1584, %v1662
    %v1671 = vadd.f32 %v1585, %v1663
    %v1672 = vadd.f32 %v1586, %v1664
    %v1673 = vadd.f32 %v1587, %v1665
    %v1674 = vadd.f32 %v1588, %v1666
    %v1675 = vadd.f32 %v1589, %v1667
    %v1676 = vadd.f32 %v1590, %v1668
    %s1677 = scalar_lea.vmem [#allocation7], 40
    %v1678 = vld [vmem:[%s1677] sm:$0xf]
    %v1679 = vld [vmem:[%s1677 + $0x4] sm:$0xf]
    %v1680 = vld [vmem:[%s1677 + $0x38] sm:$0xf]
    %v1681 = vld [vmem:[%s1677 + $0x3c] sm:$0xf]
    %v1682 = vld [vmem:[%s1677 + $0x70] sm:$0xf]
    %v1683 = vld [vmem:[%s1677 + $0x74] sm:$0xf]
    %v1684 = vld [vmem:[%s1677 + $0xa8] sm:$0xf]
    %v1685 = vld [vmem:[%s1677 + $0xac] sm:$0xf]
    %v1686 = vunpack.c.l.bf16 %v1678
    %v1687 = vunpack.c.l.bf16 %v1679
    %v1688 = vunpack.c.l.bf16 %v1680
    %v1689 = vunpack.c.l.bf16 %v1681
    %v1690 = vunpack.c.l.bf16 %v1682
    %v1691 = vunpack.c.l.bf16 %v1683
    %v1692 = vunpack.c.l.bf16 %v1684
    %v1693 = vunpack.c.l.bf16 %v1685
    %s1694 = scalar_lea.vmem [#allocation13], 5
    %v1695 = vld [vmem:[%s1694] sm:$0x1]
    %v1697 = vlaneseq
    %v1698 = vshrl.u32 %v1697, 7
    %v1699 = vsub.s32 0, %v1698
    %v1700 = vrot.slane %v1695, %v1699
    %v1702 = vmul.f32 %v1686, %v1700
    %v1703 = vmul.f32 %v1687, %v1700
    %v1704 = vmul.f32 %v1688, %v1700
    %v1705 = vmul.f32 %v1689, %v1700
    %v1706 = vmul.f32 %v1690, %v1700
    %v1707 = vmul.f32 %v1691, %v1700
    %v1708 = vmul.f32 %v1692, %v1700
    %v1709 = vmul.f32 %v1693, %v1700
    %v1710 = vadd.f32 %v1624, %v1702
    %v1711 = vadd.f32 %v1625, %v1703
    %v1712 = vadd.f32 %v1626, %v1704
    %v1713 = vadd.f32 %v1627, %v1705
    %v1714 = vadd.f32 %v1628, %v1706
    %v1715 = vadd.f32 %v1629, %v1707
    %v1716 = vadd.f32 %v1630, %v1708
    %v1717 = vadd.f32 %v1631, %v1709
    %s1718 = scalar_lea.vmem [#allocation14], 5
    %v1719 = vld [vmem:[%s1718] sm:$0x1]
    %v1720 = vld [vmem:[%s1718 + $0x7] sm:$0x1]
    %v1721 = vld [vmem:[%s1718 + $0xe] sm:$0x1]
    %v1722 = vld [vmem:[%s1718 + $0x15] sm:$0x1]
    %v1727 = vlaneseq
    %v1728 = vshrl.u32 %v1727, 7
    %v1729 = vsub.s32 0, %v1728
    %v1730 = vrot.slane %v1719, %v1729
    %v1731 = vlaneseq
    %v1732 = vshrl.u32 %v1731, 7
    %v1733 = vsub.s32 0, %v1732
    %v1734 = vrot.slane %v1720, %v1733
    %v1735 = vlaneseq
    %v1736 = vshrl.u32 %v1735, 7
    %v1737 = vsub.s32 0, %v1736
    %v1738 = vrot.slane %v1721, %v1737
    %v1739 = vlaneseq
    %v1740 = vshrl.u32 %v1739, 7
    %v1741 = vsub.s32 0, %v1740
    %v1742 = vrot.slane %v1722, %v1741
    %v1747 = vmul.f32 %v1686, %v1730
    %v1748 = vmul.f32 %v1687, %v1730
    %v1749 = vmul.f32 %v1688, %v1734
    %v1750 = vmul.f32 %v1689, %v1734
    %v1751 = vmul.f32 %v1690, %v1738
    %v1752 = vmul.f32 %v1691, %v1738
    %v1753 = vmul.f32 %v1692, %v1742
    %v1754 = vmul.f32 %v1693, %v1742
    %v1755 = vadd.f32 %v1669, %v1747
    %v1756 = vadd.f32 %v1670, %v1748
    %v1757 = vadd.f32 %v1671, %v1749
    %v1758 = vadd.f32 %v1672, %v1750
    %v1759 = vadd.f32 %v1673, %v1751
    %v1760 = vadd.f32 %v1674, %v1752
    %v1761 = vadd.f32 %v1675, %v1753
    %v1762 = vadd.f32 %v1676, %v1754
    %s1763 = scalar_lea.vmem [#allocation7], 48
    %v1764 = vld [vmem:[%s1763] sm:$0xf]
    %v1765 = vld [vmem:[%s1763 + $0x4] sm:$0xf]
    %v1766 = vld [vmem:[%s1763 + $0x38] sm:$0xf]
    %v1767 = vld [vmem:[%s1763 + $0x3c] sm:$0xf]
    %v1768 = vld [vmem:[%s1763 + $0x70] sm:$0xf]
    %v1769 = vld [vmem:[%s1763 + $0x74] sm:$0xf]
    %v1770 = vld [vmem:[%s1763 + $0xa8] sm:$0xf]
    %v1771 = vld [vmem:[%s1763 + $0xac] sm:$0xf]
    %v1772 = vunpack.c.l.bf16 %v1764
    %v1773 = vunpack.c.l.bf16 %v1765
    %v1774 = vunpack.c.l.bf16 %v1766
    %v1775 = vunpack.c.l.bf16 %v1767
    %v1776 = vunpack.c.l.bf16 %v1768
    %v1777 = vunpack.c.l.bf16 %v1769
    %v1778 = vunpack.c.l.bf16 %v1770
    %v1779 = vunpack.c.l.bf16 %v1771
    %s1780 = scalar_lea.vmem [#allocation13], 6
    %v1781 = vld [vmem:[%s1780] sm:$0x1]
    %v1783 = vlaneseq
    %v1784 = vshrl.u32 %v1783, 7
    %v1785 = vsub.s32 0, %v1784
    %v1786 = vrot.slane %v1781, %v1785
    %v1788 = vmul.f32 %v1772, %v1786
    %v1789 = vmul.f32 %v1773, %v1786
    %v1790 = vmul.f32 %v1774, %v1786
    %v1791 = vmul.f32 %v1775, %v1786
    %v1792 = vmul.f32 %v1776, %v1786
    %v1793 = vmul.f32 %v1777, %v1786
    %v1794 = vmul.f32 %v1778, %v1786
    %v1795 = vmul.f32 %v1779, %v1786
    %v1796 = vadd.f32 %v1710, %v1788
    %v1797 = vadd.f32 %v1711, %v1789
    %v1798 = vadd.f32 %v1712, %v1790
    %v1799 = vadd.f32 %v1713, %v1791
    %v1800 = vadd.f32 %v1714, %v1792
    %v1801 = vadd.f32 %v1715, %v1793
    %v1802 = vadd.f32 %v1716, %v1794
    %v1803 = vadd.f32 %v1717, %v1795
    %s1804 = scalar_lea.vmem [#allocation14], 6
    %v1805 = vld [vmem:[%s1804] sm:$0x1]
    %v1806 = vld [vmem:[%s1804 + $0x7] sm:$0x1]
    %v1807 = vld [vmem:[%s1804 + $0xe] sm:$0x1]
    %v1808 = vld [vmem:[%s1804 + $0x15] sm:$0x1]
    %v1813 = vlaneseq
    %v1814 = vshrl.u32 %v1813, 7
    %v1815 = vsub.s32 0, %v1814
    %v1816 = vrot.slane %v1805, %v1815
    %v1817 = vlaneseq
    %v1818 = vshrl.u32 %v1817, 7
    %v1819 = vsub.s32 0, %v1818
    %v1820 = vrot.slane %v1806, %v1819
    %v1821 = vlaneseq
    %v1822 = vshrl.u32 %v1821, 7
    %v1823 = vsub.s32 0, %v1822
    %v1824 = vrot.slane %v1807, %v1823
    %v1825 = vlaneseq
    %v1826 = vshrl.u32 %v1825, 7
    %v1827 = vsub.s32 0, %v1826
    %v1828 = vrot.slane %v1808, %v1827
    %v1833 = vmul.f32 %v1772, %v1816
    %v1834 = vmul.f32 %v1773, %v1816
    %v1835 = vmul.f32 %v1774, %v1820
    %v1836 = vmul.f32 %v1775, %v1820
    %v1837 = vmul.f32 %v1776, %v1824
    %v1838 = vmul.f32 %v1777, %v1824
    %v1839 = vmul.f32 %v1778, %v1828
    %v1840 = vmul.f32 %v1779, %v1828
    %v1841 = vadd.f32 %v1755, %v1833
    %v1842 = vadd.f32 %v1756, %v1834
    %v1843 = vadd.f32 %v1757, %v1835
    %v1844 = vadd.f32 %v1758, %v1836
    %v1845 = vadd.f32 %v1759, %v1837
    %v1846 = vadd.f32 %v1760, %v1838
    %v1847 = vadd.f32 %v1761, %v1839
    %v1848 = vadd.f32 %v1762, %v1840
    %v1849 = vsel %vm1021, %v1796, 0.0
    %1850 = vadd.xlane.f32.xlu0 %v1849
    %v1851 = vpop.xlane.xlu0 %1850
    %v1852 = vsel %vm1021, %v1797, 0.0
    %1853 = vadd.xlane.f32.xlu0 %v1852
    %v1854 = vpop.xlane.xlu0 %1853
    %v1855 = vsel %vm1021, %v1798, 0.0
    %1856 = vadd.xlane.f32.xlu0 %v1855
    %v1857 = vpop.xlane.xlu0 %1856
    %v1858 = vsel %vm1021, %v1799, 0.0
    %1859 = vadd.xlane.f32.xlu0 %v1858
    %v1860 = vpop.xlane.xlu0 %1859
    %v1861 = vsel %vm1021, %v1800, 0.0
    %1862 = vadd.xlane.f32.xlu0 %v1861
    %v1863 = vpop.xlane.xlu0 %1862
    %v1864 = vsel %vm1021, %v1801, 0.0
    %1865 = vadd.xlane.f32.xlu0 %v1864
    %v1866 = vpop.xlane.xlu0 %1865
    %v1867 = vsel %vm1021, %v1802, 0.0
    %1868 = vadd.xlane.f32.xlu0 %v1867
    %v1869 = vpop.xlane.xlu0 %1868
    %v1870 = vsel %vm1021, %v1803, 0.0
    %1871 = vadd.xlane.f32.xlu0 %v1870
    %v1872 = vpop.xlane.xlu0 %1871
    %1881 = vrot.lane.b32.xlu0 %v1796, 64
    %v1882 = vpop.permute.xlu0 %1881
    %1883 = vrot.lane.b32.xlu0 %v1797, 64
    %v1884 = vpop.permute.xlu0 %1883
    %1885 = vrot.lane.b32.xlu0 %v1798, 64
    %v1886 = vpop.permute.xlu0 %1885
    %1887 = vrot.lane.b32.xlu0 %v1799, 64
    %v1888 = vpop.permute.xlu0 %1887
    %1889 = vrot.lane.b32.xlu0 %v1800, 64
    %v1890 = vpop.permute.xlu0 %1889
    %1891 = vrot.lane.b32.xlu0 %v1801, 64
    %v1892 = vpop.permute.xlu0 %1891
    %1893 = vrot.lane.b32.xlu0 %v1802, 64
    %v1894 = vpop.permute.xlu0 %1893
    %1895 = vrot.lane.b32.xlu0 %v1803, 64
    %v1896 = vpop.permute.xlu0 %1895
    %v1905 = vsel %vm1021, %v1882, 0.0
    %1906 = vadd.xlane.f32.xlu0 %v1905
    %v1907 = vpop.xlane.xlu0 %1906
    %v1908 = vsel %vm1021, %v1884, 0.0
    %1909 = vadd.xlane.f32.xlu0 %v1908
    %v1910 = vpop.xlane.xlu0 %1909
    %v1911 = vsel %vm1021, %v1886, 0.0
    %1912 = vadd.xlane.f32.xlu0 %v1911
    %v1913 = vpop.xlane.xlu0 %1912
    %v1914 = vsel %vm1021, %v1888, 0.0
    %1915 = vadd.xlane.f32.xlu0 %v1914
    %v1916 = vpop.xlane.xlu0 %1915
    %v1917 = vsel %vm1021, %v1890, 0.0
    %1918 = vadd.xlane.f32.xlu0 %v1917
    %v1919 = vpop.xlane.xlu0 %1918
    %v1920 = vsel %vm1021, %v1892, 0.0
    %1921 = vadd.xlane.f32.xlu0 %v1920
    %v1922 = vpop.xlane.xlu0 %1921
    %v1923 = vsel %vm1021, %v1894, 0.0
    %1924 = vadd.xlane.f32.xlu0 %v1923
    %v1925 = vpop.xlane.xlu0 %1924
    %v1926 = vsel %vm1021, %v1896, 0.0
    %1927 = vadd.xlane.f32.xlu0 %v1926
    %v1928 = vpop.xlane.xlu0 %1927
    %v1929 = vmax.f32 %v1851, %v1863
    %v1930 = vmax.f32 %v1857, %v1869
    %v1931 = vmax.f32 %v1929, %v1930
    %v1932 = vmax.f32 %v1854, %v1866
    %v1933 = vmax.f32 %v1860, %v1872
    %v1934 = vmax.f32 %v1932, %v1933
    %v1935 = vsub.f32 %v1851, %v1931
    %v1936 = vsub.f32 %v1854, %v1934
    %v1937 = vsub.f32 %v1857, %v1931
    %v1938 = vsub.f32 %v1860, %v1934
    %v1939 = vsub.f32 %v1863, %v1931
    %v1940 = vsub.f32 %v1866, %v1934
    %v1941 = vsub.f32 %v1869, %v1931
    %v1942 = vsub.f32 %v1872, %v1934
    %v1943 = vmul.f32 %v1935, 1.442695
    %v1944 = vpow.pop %v1943
    %v1945 = vmul.f32 %v1936, 1.442695
    %v1946 = vpow.pop %v1945
    %v1947 = vmul.f32 %v1937, 1.442695
    %v1948 = vpow.pop %v1947
    %v1949 = vmul.f32 %v1938, 1.442695
    %v1950 = vpow.pop %v1949
    %v1951 = vmul.f32 %v1939, 1.442695
    %v1952 = vpow.pop %v1951
    %v1953 = vmul.f32 %v1940, 1.442695
    %v1954 = vpow.pop %v1953
    %v1955 = vmul.f32 %v1941, 1.442695
    %v1956 = vpow.pop %v1955
    %v1957 = vmul.f32 %v1942, 1.442695
    %v1958 = vpow.pop %v1957
    %v1959 = vadd.f32 %v1944, %v1948
    %v1960 = vadd.f32 %v1959, %v1952
    %v1961 = vadd.f32 %v1960, %v1956
    %v1962 = vadd.f32 %v1946, %v1950
    %v1963 = vadd.f32 %v1962, %v1954
    %v1964 = vadd.f32 %v1963, %v1958
    %v1965 = vrcp.pop %v1961
    %v1966 = vrcp.pop %v1964
    %v1967 = vmul.f32 %v1944, %v1965
    %v1968 = vmul.f32 %v1946, %v1966
    %v1969 = vmul.f32 %v1948, %v1965
    %v1970 = vmul.f32 %v1950, %v1966
    %v1971 = vmul.f32 %v1952, %v1965
    %v1972 = vmul.f32 %v1954, %v1966
    %v1973 = vmul.f32 %v1956, %v1965
    %v1974 = vmul.f32 %v1958, %v1966
    %v1975 = vmax.f32 %v1907, %v1919
    %v1976 = vmax.f32 %v1913, %v1925
    %v1977 = vmax.f32 %v1975, %v1976
    %v1978 = vmax.f32 %v1910, %v1922
    %v1979 = vmax.f32 %v1916, %v1928
    %v1980 = vmax.f32 %v1978, %v1979
    %v1981 = vsub.f32 %v1907, %v1977
    %v1982 = vsub.f32 %v1910, %v1980
    %v1983 = vsub.f32 %v1913, %v1977
    %v1984 = vsub.f32 %v1916, %v1980
    %v1985 = vsub.f32 %v1919, %v1977
    %v1986 = vsub.f32 %v1922, %v1980
    %v1987 = vsub.f32 %v1925, %v1977
    %v1988 = vsub.f32 %v1928, %v1980
    %v1989 = vmul.f32 %v1981, 1.442695
    %v1990 = vpow.pop %v1989
    %v1991 = vmul.f32 %v1982, 1.442695
    %v1992 = vpow.pop %v1991
    %v1993 = vmul.f32 %v1983, 1.442695
    %v1994 = vpow.pop %v1993
    %v1995 = vmul.f32 %v1984, 1.442695
    %v1996 = vpow.pop %v1995
    %v1997 = vmul.f32 %v1985, 1.442695
    %v1998 = vpow.pop %v1997
    %v1999 = vmul.f32 %v1986, 1.442695
    %v2000 = vpow.pop %v1999
    %v2001 = vmul.f32 %v1987, 1.442695
    %v2002 = vpow.pop %v2001
    %v2003 = vmul.f32 %v1988, 1.442695
    %v2004 = vpow.pop %v2003
    %v2005 = vadd.f32 %v1990, %v1994
    %v2006 = vadd.f32 %v2005, %v1998
    %v2007 = vadd.f32 %v2006, %v2002
    %v2008 = vadd.f32 %v1992, %v1996
    %v2009 = vadd.f32 %v2008, %v2000
    %v2010 = vadd.f32 %v2009, %v2004
    %v2011 = vrcp.pop %v2007
    %v2012 = vrcp.pop %v2010
    %v2013 = vmul.f32 %v1990, %v2011
    %v2014 = vmul.f32 %v1992, %v2012
    %v2015 = vmul.f32 %v1994, %v2011
    %v2016 = vmul.f32 %v1996, %v2012
    %v2017 = vmul.f32 %v1998, %v2011
    %v2018 = vmul.f32 %v2000, %v2012
    %v2019 = vmul.f32 %v2002, %v2011
    %v2020 = vmul.f32 %v2004, %v2012
    %v2021 = vmul.f32 %v1967, %v1841
    %v2022 = vmul.f32 %v1968, %v1842
    %v2023 = vmul.f32 %v1969, %v1843
    %v2024 = vmul.f32 %v1970, %v1844
    %v2025 = vmul.f32 %v1971, %v1845
    %v2026 = vmul.f32 %v1972, %v1846
    %v2027 = vmul.f32 %v1973, %v1847
    %v2028 = vmul.f32 %v1974, %v1848
    %v2029 = vsel %vm1021, %v2021, 0.0
    %v2030 = vsel %vm1021, %v2023, 0.0
    %v2031 = vadd.f32 %v2029, %v2030
    %v2032 = vsel %vm1021, %v2025, 0.0
    %v2033 = vadd.f32 %v2031, %v2032
    %v2034 = vsel %vm1021, %v2027, 0.0
    %v2035 = vadd.f32 %v2033, %v2034
    %v2036 = vsel %vm1021, %v2022, 0.0
    %v2037 = vsel %vm1021, %v2024, 0.0
    %v2038 = vadd.f32 %v2036, %v2037
    %v2039 = vsel %vm1021, %v2026, 0.0
    %v2040 = vadd.f32 %v2038, %v2039
    %v2041 = vsel %vm1021, %v2028, 0.0
    %v2042 = vadd.f32 %v2040, %v2041
    %v2043 = vld [vmem:[#allocation16] sm:$0x1]
    %v2045 = vlaneseq
    %v2046 = vshrl.u32 %v2045, 7
    %v2047 = vsub.s32 0, %v2046
    %v2048 = vrot.slane %v2043, %v2047
    %v2050 = vadd.f32 %v2035, %v2048
    %v2051 = vadd.f32 %v2042, %v2048
    %v2052 = vmul.f32 %v2013, %v1841
    %v2053 = vmul.f32 %v2014, %v1842
    %v2054 = vmul.f32 %v2015, %v1843
    %v2055 = vmul.f32 %v2016, %v1844
    %v2056 = vmul.f32 %v2017, %v1845
    %v2057 = vmul.f32 %v2018, %v1846
    %v2058 = vmul.f32 %v2019, %v1847
    %v2059 = vmul.f32 %v2020, %v1848
    %v2060 = vsel %vm1233, %v2052, 0.0
    %v2061 = vsel %vm1233, %v2054, 0.0
    %v2062 = vadd.f32 %v2060, %v2061
    %v2063 = vsel %vm1233, %v2056, 0.0
    %v2064 = vadd.f32 %v2062, %v2063
    %v2065 = vsel %vm1233, %v2058, 0.0
    %v2066 = vadd.f32 %v2064, %v2065
    %v2067 = vsel %vm1233, %v2053, 0.0
    %v2068 = vsel %vm1233, %v2055, 0.0
    %v2069 = vadd.f32 %v2067, %v2068
    %v2070 = vsel %vm1233, %v2057, 0.0
    %v2071 = vadd.f32 %v2069, %v2070
    %v2072 = vsel %vm1233, %v2059, 0.0
    %v2073 = vadd.f32 %v2071, %v2072
    %v2074 = vadd.f32 %v2066, %v2048
    %v2075 = vadd.f32 %v2073, %v2048
    %v2076 = vld [vmem:[#allocation20] sm:$0xff]
    %v2077 = vld [vmem:[#allocation20 + $0x8] sm:$0xff]
    %v2078 = vld [vmem:[#allocation20 + $0x10] sm:$0xff]
    %v2079 = vld [vmem:[#allocation20 + $0x18] sm:$0xff]
    %v2080 = vld [vmem:[#allocation20 + $0x20] sm:$0xff]
    %v2081 = vld [vmem:[#allocation20 + $0x28] sm:$0xff]
    %v2082 = vld [vmem:[#allocation20 + $0x30] sm:$0xff]
    %v2083 = vld [vmem:[#allocation20 + $0x38] sm:$0xff]
    %v2084 = vld [vmem:[#allocation20 + $0x40] sm:$0xff]
    %v2085 = vld [vmem:[#allocation20 + $0x48] sm:$0xff]
    %v2086 = vld [vmem:[#allocation20 + $0x50] sm:$0xff]
    %v2087 = vld [vmem:[#allocation20 + $0x58] sm:$0xff]
    %v2088 = vld [vmem:[#allocation20 + $0x60] sm:$0xff]
    %v2089 = vld [vmem:[#allocation20 + $0x68] sm:$0xff]
    %v2090 = vld [vmem:[#allocation20 + $0x70] sm:$0xff]
    %v2091 = vld [vmem:[#allocation20 + $0x78] sm:$0xff]
    %2094 = vrot.lane.b32.xlu0 %v1248, 64
    %v2095 = vpop.permute.xlu0 %2094
    %2096 = vrot.lane.b32.xlu0 %v1249, 64
    %v2097 = vpop.permute.xlu0 %2096
    %v2098 = vsel %vm1021, %v2095, 0
    %v2100 = vsel %vm1021, %v2097, 0
    %2102 = vmatprep.subr.mxu0 0.0
    %2103 = vmatpush1.msra.mxu0 %v2084
    %2104 = vmatprep.subr.mxu0 0.0
    %2105 = vmatpush1.msra.mxu0 %v2085
    %2106 = vmatprep.subr.mxu0 0.0
    %2107 = vmatpush1.msra.mxu0 %v2086
    %2108 = vmatprep.subr.mxu0 0.0
    %2109 = vmatpush1.msra.mxu0 %v2087
    %2110 = vmatprep.subr.mxu0 0.0
    %2111 = vmatpush1.msra.mxu0 %v2088
    %2112 = vmatprep.subr.mxu0 0.0
    %2113 = vmatpush1.msra.mxu0 %v2089
    %2114 = vmatprep.subr.mxu0 0.0
    %2115 = vmatpush1.msra.mxu0 %v2090
    %2116 = vmatprep.subr.mxu0 0.0
    %2117 = vmatpush1.msra.mxu0 %v2091
    %2118 = vmatprep.subr.mxu0 0.0
    %2119 = vmatpush1.msra.mxu0 0.0
    %2120 = vmatprep.subr.mxu0 0.0
    %2121 = vmatpush1.msra.mxu0 0.0
    %2122 = vmatprep.subr.mxu0 0.0
    %2123 = vmatpush1.msra.mxu0 0.0
    %2124 = vmatprep.subr.mxu0 0.0
    %2125 = vmatpush1.msra.mxu0 0.0
    %2126 = vmatprep.subr.mxu0 0.0
    %2127 = vmatpush1.msra.mxu0 0.0
    %2128 = vmatprep.subr.mxu0 0.0
    %2129 = vmatpush1.msra.mxu0 0.0
    %2130 = vmatprep.subr.mxu0 0.0
    %2131 = vmatpush1.msra.mxu0 0.0
    %2132 = vmatprep.subr.mxu0 0.0
    %2133 = vmatpush1.msra.mxu0 0.0
    %2134 = vmatprep.subr.mxu0 0.0
    %2135 = vmatpush1.msra.mxu0 0.0
    %2136 = vmatprep.subr.mxu0 0.0
    %2137 = vmatpush1.msra.mxu0 0.0
    %2138 = vmatprep.subr.mxu0 0.0
    %2139 = vmatpush1.msra.mxu0 0.0
    %2140 = vmatprep.subr.mxu0 0.0
    %2141 = vmatpush1.msra.mxu0 0.0
    %2142 = vmatprep.subr.mxu0 0.0
    %2143 = vmatpush1.msra.mxu0 0.0
    %2144 = vmatprep.subr.mxu0 0.0
    %2145 = vmatpush1.msra.mxu0 0.0
    %2146 = vmatprep.subr.mxu0 0.0
    %2147 = vmatpush1.msra.mxu0 0.0
    %2148 = vmatprep.subr.mxu0 0.0
    %2149 = vmatpush1.msra.mxu0 0.0
    %2150 = vmatprep.subr.mxu0 0.0
    %2151 = vmatpush1.msra.mxu0 0.0
    %2152 = vmatprep.subr.mxu0 0.0
    %2153 = vmatpush1.msra.mxu0 0.0
    %2154 = vmatprep.subr.mxu0 0.0
    %2155 = vmatpush1.msra.mxu0 0.0
    %2156 = vmatprep.subr.mxu0 0.0
    %2157 = vmatpush1.msra.mxu0 0.0
    %2158 = vmatprep.subr.mxu0 0.0
    %2159 = vmatpush1.msra.mxu0 0.0
    %2160 = vmatprep.subr.mxu0 0.0
    %2161 = vmatpush1.msra.mxu0 0.0
    %2162 = vmatprep.subr.mxu0 0.0
    %2163 = vmatpush1.msra.mxu0 0.0
    %2164 = vmatprep.subr.mxu0 0.0
    %2165 = vmatpush1.msra.mxu0 0.0
    %2166 = vmatprep.mubr.f32.mxu0 0.0
    %2167 = vmatmul.mubr.f32.gmra.mrb[0].mxu0 %v2098
    %v2168 = vpop.f32.mrb[0].mxu0
    %v2169 = vadd.f32 0.0, %v2168
    %v2170 = vpop.f32.mrb[0].mxu0
    %2171 = vmatprep.mubr.f32.mxu0 0.0
    %2172 = vmatmul.mubr.f32.gmra.mrb[0].mxu0 %v2100
    %v2173 = vpop.f32.mrb[0].mxu0
    %v2174 = vadd.f32 0.0, %v2173
    %v2175 = vpop.f32.mrb[0].mxu0
    %2176 = vdwg.mxu0
    %v2178 = vsel %vm1021, %v1223, 0
    %v2181 = vsel %vm1021, %v1224, 0
    %2183 = vmatprep.subr.mxu0 0.0
    %2184 = vmatpush1.msra.mxu0 %v2076
    %2185 = vmatprep.subr.mxu0 0.0
    %2186 = vmatpush1.msra.mxu0 %v2077
    %2187 = vmatprep.subr.mxu0 0.0
    %2188 = vmatpush1.msra.mxu0 %v2078
    %2189 = vmatprep.subr.mxu0 0.0
    %2190 = vmatpush1.msra.mxu0 %v2079
    %2191 = vmatprep.subr.mxu0 0.0
    %2192 = vmatpush1.msra.mxu0 %v2080
    %2193 = vmatprep.subr.mxu0 0.0
    %2194 = vmatpush1.msra.mxu0 %v2081
    %2195 = vmatprep.subr.mxu0 0.0
    %2196 = vmatpush1.msra.mxu0 %v2082
    %2197 = vmatprep.subr.mxu0 0.0
    %2198 = vmatpush1.msra.mxu0 %v2083
    %2199 = vmatprep.subr.mxu0 0.0
    %2200 = vmatpush1.msra.mxu0 0.0
    %2201 = vmatprep.subr.mxu0 0.0
    %2202 = vmatpush1.msra.mxu0 0.0
    %2203 = vmatprep.subr.mxu0 0.0
    %2204 = vmatpush1.msra.mxu0 0.0
    %2205 = vmatprep.subr.mxu0 0.0
    %2206 = vmatpush1.msra.mxu0 0.0
    %2207 = vmatprep.subr.mxu0 0.0
    %2208 = vmatpush1.msra.mxu0 0.0
    %2209 = vmatprep.subr.mxu0 0.0
    %2210 = vmatpush1.msra.mxu0 0.0
    %2211 = vmatprep.subr.mxu0 0.0
    %2212 = vmatpush1.msra.mxu0 0.0
    %2213 = vmatprep.subr.mxu0 0.0
    %2214 = vmatpush1.msra.mxu0 0.0
    %2215 = vmatprep.subr.mxu0 0.0
    %2216 = vmatpush1.msra.mxu0 0.0
    %2217 = vmatprep.subr.mxu0 0.0
    %2218 = vmatpush1.msra.mxu0 0.0
    %2219 = vmatprep.subr.mxu0 0.0
    %2220 = vmatpush1.msra.mxu0 0.0
    %2221 = vmatprep.subr.mxu0 0.0
    %2222 = vmatpush1.msra.mxu0 0.0
    %2223 = vmatprep.subr.mxu0 0.0
    %2224 = vmatpush1.msra.mxu0 0.0
    %2225 = vmatprep.subr.mxu0 0.0
    %2226 = vmatpush1.msra.mxu0 0.0
    %2227 = vmatprep.subr.mxu0 0.0
    %2228 = vmatpush1.msra.mxu0 0.0
    %2229 = vmatprep.subr.mxu0 0.0
    %2230 = vmatpush1.msra.mxu0 0.0
    %2231 = vmatprep.subr.mxu0 0.0
    %2232 = vmatpush1.msra.mxu0 0.0
    %2233 = vmatprep.subr.mxu0 0.0
    %2234 = vmatpush1.msra.mxu0 0.0
    %2235 = vmatprep.subr.mxu0 0.0
    %2236 = vmatpush1.msra.mxu0 0.0
    %2237 = vmatprep.subr.mxu0 0.0
    %2238 = vmatpush1.msra.mxu0 0.0
    %2239 = vmatprep.subr.mxu0 0.0
    %2240 = vmatpush1.msra.mxu0 0.0
    %2241 = vmatprep.subr.mxu0 0.0
    %2242 = vmatpush1.msra.mxu0 0.0
    %2243 = vmatprep.subr.mxu0 0.0
    %2244 = vmatpush1.msra.mxu0 0.0
    %2245 = vmatprep.subr.mxu0 0.0
    %2246 = vmatpush1.msra.mxu0 0.0
    %2247 = vmatprep.mubr.f32.mxu0 0.0
    %2248 = vmatmul.mubr.f32.gmra.mrb[0].mxu0 %v2178
    %v2249 = vpop.f32.mrb[0].mxu0
    %v2250 = vadd.f32 %v2169, %v2249
    %v2251 = vpop.f32.mrb[0].mxu0
    %2252 = vmatprep.mubr.f32.mxu0 0.0
    %2253 = vmatmul.mubr.f32.gmra.mrb[0].mxu0 %v2181
    %v2254 = vpop.f32.mrb[0].mxu0
    %v2255 = vadd.f32 %v2174, %v2254
    %v2256 = vpop.f32.mrb[0].mxu0
    %2257 = vdwg.mxu0
    %v2258 = vld [vmem:[#allocation22] sm:$0x1]
    %v2260 = vlaneseq
    %v2261 = vshrl.u32 %v2260, 7
    %v2262 = vsub.s32 0, %v2261
    %v2263 = vrot.slane %v2258, %v2262
    %v2265 = vadd.f32 %v2250, %v2263
    %v2266 = vadd.f32 %v2255, %v2263
    %v2267 = vxor.u32 %v2265, 2147483648
    %v2268 = vxor.u32 %v2266, 2147483648
    %v2269 = vmul.f32 %v2267, 1.442695
    %v2270 = vpow.pop %v2269
    %v2271 = vmul.f32 %v2268, 1.442695
    %v2272 = vpow.pop %v2271
    %v2273 = vadd.f32 %v2270, 1.0
    %v2274 = vadd.f32 %v2272, 1.0
    %v2275 = vrcp.pop %v2273
    %v2276 = vmul.f32 1.0, %v2275
    %v2277 = vrcp.pop %v2274
    %v2278 = vmul.f32 1.0, %v2277
    %v2279 = vmul.f32 %v2276, %v1223
    %v2280 = vmul.f32 %v2278, %v1224
    %v2281 = vsub.f32 1.0, %v2276
    %v2282 = vsub.f32 1.0, %v2278
    %v2285 = vmul.f32 %v2281, %v2095
    %v2286 = vmul.f32 %v2282, %v2097
    %v2287 = vadd.f32 %v2279, %v2285
    %v2288 = vadd.f32 %v2280, %v2286
    %2289 = vst.msk [vmem:[#allocation26] sm:$0xff] %vm1021, %v2287
    %2290 = vst.msk [vmem:[#allocation26 + $0x10] sm:$0xff] %vm1021, %v2288
    %v2291 = vld [vmem:[#allocation23] sm:$0xff]
    %v2292 = vld [vmem:[#allocation23 + $0x8] sm:$0xff]
    %v2293 = vld [vmem:[#allocation23 + $0x10] sm:$0xff]
    %v2294 = vld [vmem:[#allocation23 + $0x18] sm:$0xff]
    %v2295 = vld [vmem:[#allocation23 + $0x20] sm:$0xff]
    %v2296 = vld [vmem:[#allocation23 + $0x28] sm:$0xff]
    %v2297 = vld [vmem:[#allocation23 + $0x30] sm:$0xff]
    %v2298 = vld [vmem:[#allocation23 + $0x38] sm:$0xff]
    %v2299 = vld [vmem:[#allocation23 + $0x40] sm:$0xff]
    %v2300 = vld [vmem:[#allocation23 + $0x48] sm:$0xff]
    %v2301 = vld [vmem:[#allocation23 + $0x50] sm:$0xff]
    %v2302 = vld [vmem:[#allocation23 + $0x58] sm:$0xff]
    %v2303 = vld [vmem:[#allocation23 + $0x60] sm:$0xff]
    %v2304 = vld [vmem:[#allocation23 + $0x68] sm:$0xff]
    %v2305 = vld [vmem:[#allocation23 + $0x70] sm:$0xff]
    %v2306 = vld [vmem:[#allocation23 + $0x78] sm:$0xff]
    %2309 = vrot.lane.b32.xlu0 %v2074, 64
    %v2310 = vpop.permute.xlu0 %2309
    %2311 = vrot.lane.b32.xlu0 %v2075, 64
    %v2312 = vpop.permute.xlu0 %2311
    %v2313 = vsel %vm1021, %v2310, 0
    %v2315 = vsel %vm1021, %v2312, 0
    %2317 = vmatprep.subr.mxu0 0.0
    %2318 = vmatpush1.msra.mxu0 %v2299
    %2319 = vmatprep.subr.mxu0 0.0
    %2320 = vmatpush1.msra.mxu0 %v2300
    %2321 = vmatprep.subr.mxu0 0.0
    %2322 = vmatpush1.msra.mxu0 %v2301
    %2323 = vmatprep.subr.mxu0 0.0
    %2324 = vmatpush1.msra.mxu0 %v2302
    %2325 = vmatprep.subr.mxu0 0.0
    %2326 = vmatpush1.msra.mxu0 %v2303
    %2327 = vmatprep.subr.mxu0 0.0
    %2328 = vmatpush1.msra.mxu0 %v2304
    %2329 = vmatprep.subr.mxu0 0.0
    %2330 = vmatpush1.msra.mxu0 %v2305
    %2331 = vmatprep.subr.mxu0 0.0
    %2332 = vmatpush1.msra.mxu0 %v2306
    %2333 = vmatprep.subr.mxu0 0.0
    %2334 = vmatpush1.msra.mxu0 0.0
    %2335 = vmatprep.subr.mxu0 0.0
    %2336 = vmatpush1.msra.mxu0 0.0
    %2337 = vmatprep.subr.mxu0 0.0
    %2338 = vmatpush1.msra.mxu0 0.0
    %2339 = vmatprep.subr.mxu0 0.0
    %2340 = vmatpush1.msra.mxu0 0.0
    %2341 = vmatprep.subr.mxu0 0.0
    %2342 = vmatpush1.msra.mxu0 0.0
    %2343 = vmatprep.subr.mxu0 0.0
    %2344 = vmatpush1.msra.mxu0 0.0
    %2345 = vmatprep.subr.mxu0 0.0
    %2346 = vmatpush1.msra.mxu0 0.0
    %2347 = vmatprep.subr.mxu0 0.0
    %2348 = vmatpush1.msra.mxu0 0.0
    %2349 = vmatprep.subr.mxu0 0.0
    %2350 = vmatpush1.msra.mxu0 0.0
    %2351 = vmatprep.subr.mxu0 0.0
    %2352 = vmatpush1.msra.mxu0 0.0
    %2353 = vmatprep.subr.mxu0 0.0
    %2354 = vmatpush1.msra.mxu0 0.0
    %2355 = vmatprep.subr.mxu0 0.0
    %2356 = vmatpush1.msra.mxu0 0.0
    %2357 = vmatprep.subr.mxu0 0.0
    %2358 = vmatpush1.msra.mxu0 0.0
    %2359 = vmatprep.subr.mxu0 0.0
    %2360 = vmatpush1.msra.mxu0 0.0
    %2361 = vmatprep.subr.mxu0 0.0
    %2362 = vmatpush1.msra.mxu0 0.0
    %2363 = vmatprep.subr.mxu0 0.0
    %2364 = vmatpush1.msra.mxu0 0.0
    %2365 = vmatprep.subr.mxu0 0.0
    %2366 = vmatpush1.msra.mxu0 0.0
    %2367 = vmatprep.subr.mxu0 0.0
    %2368 = vmatpush1.msra.mxu0 0.0
    %2369 = vmatprep.subr.mxu0 0.0
    %2370 = vmatpush1.msra.mxu0 0.0
    %2371 = vmatprep.subr.mxu0 0.0
    %2372 = vmatpush1.msra.mxu0 0.0
    %2373 = vmatprep.subr.mxu0 0.0
    %2374 = vmatpush1.msra.mxu0 0.0
    %2375 = vmatprep.subr.mxu0 0.0
    %2376 = vmatpush1.msra.mxu0 0.0
    %2377 = vmatprep.subr.mxu0 0.0
    %2378 = vmatpush1.msra.mxu0 0.0
    %2379 = vmatprep.subr.mxu0 0.0
    %2380 = vmatpush1.msra.mxu0 0.0
    %2381 = vmatprep.mubr.f32.mxu0 0.0
    %2382 = vmatmul.mubr.f32.gmra.mrb[0].mxu0 %v2313
    %v2383 = vpop.f32.mrb[0].mxu0
    %v2384 = vadd.f32 0.0, %v2383
    %v2385 = vpop.f32.mrb[0].mxu0
    %2386 = vmatprep.mubr.f32.mxu0 0.0
    %2387 = vmatmul.mubr.f32.gmra.mrb[0].mxu0 %v2315
    %v2388 = vpop.f32.mrb[0].mxu0
    %v2389 = vadd.f32 0.0, %v2388
    %v2390 = vpop.f32.mrb[0].mxu0
    %2391 = vdwg.mxu0
    %v2393 = vsel %vm1021, %v2050, 0
    %v2396 = vsel %vm1021, %v2051, 0
    %2398 = vmatprep.subr.mxu0 0.0
    %2399 = vmatpush1.msra.mxu0 %v2291
    %2400 = vmatprep.subr.mxu0 0.0
    %2401 = vmatpush1.msra.mxu0 %v2292
    %2402 = vmatprep.subr.mxu0 0.0
    %2403 = vmatpush1.msra.mxu0 %v2293
    %2404 = vmatprep.subr.mxu0 0.0
    %2405 = vmatpush1.msra.mxu0 %v2294
    %2406 = vmatprep.subr.mxu0 0.0
    %2407 = vmatpush1.msra.mxu0 %v2295
    %2408 = vmatprep.subr.mxu0 0.0
    %2409 = vmatpush1.msra.mxu0 %v2296
    %2410 = vmatprep.subr.mxu0 0.0
    %2411 = vmatpush1.msra.mxu0 %v2297
    %2412 = vmatprep.subr.mxu0 0.0
    %2413 = vmatpush1.msra.mxu0 %v2298
    %2414 = vmatprep.subr.mxu0 0.0
    %2415 = vmatpush1.msra.mxu0 0.0
    %2416 = vmatprep.subr.mxu0 0.0
    %2417 = vmatpush1.msra.mxu0 0.0
    %2418 = vmatprep.subr.mxu0 0.0
    %2419 = vmatpush1.msra.mxu0 0.0
    %2420 = vmatprep.subr.mxu0 0.0
    %2421 = vmatpush1.msra.mxu0 0.0
    %2422 = vmatprep.subr.mxu0 0.0
    %2423 = vmatpush1.msra.mxu0 0.0
    %2424 = vmatprep.subr.mxu0 0.0
    %2425 = vmatpush1.msra.mxu0 0.0
    %2426 = vmatprep.subr.mxu0 0.0
    %2427 = vmatpush1.msra.mxu0 0.0
    %2428 = vmatprep.subr.mxu0 0.0
    %2429 = vmatpush1.msra.mxu0 0.0
    %2430 = vmatprep.subr.mxu0 0.0
    %2431 = vmatpush1.msra.mxu0 0.0
    %2432 = vmatprep.subr.mxu0 0.0
    %2433 = vmatpush1.msra.mxu0 0.0
    %2434 = vmatprep.subr.mxu0 0.0
    %2435 = vmatpush1.msra.mxu0 0.0
    %2436 = vmatprep.subr.mxu0 0.0
    %2437 = vmatpush1.msra.mxu0 0.0
    %2438 = vmatprep.subr.mxu0 0.0
    %2439 = vmatpush1.msra.mxu0 0.0
    %2440 = vmatprep.subr.mxu0 0.0
    %2441 = vmatpush1.msra.mxu0 0.0
    %2442 = vmatprep.subr.mxu0 0.0
    %2443 = vmatpush1.msra.mxu0 0.0
    %2444 = vmatprep.subr.mxu0 0.0
    %2445 = vmatpush1.msra.mxu0 0.0
    %2446 = vmatprep.subr.mxu0 0.0
    %2447 = vmatpush1.msra.mxu0 0.0
    %2448 = vmatprep.subr.mxu0 0.0
    %2449 = vmatpush1.msra.mxu0 0.0
    %2450 = vmatprep.subr.mxu0 0.0
    %2451 = vmatpush1.msra.mxu0 0.0
    %2452 = vmatprep.subr.mxu0 0.0
    %2453 = vmatpush1.msra.mxu0 0.0
    %2454 = vmatprep.subr.mxu0 0.0
    %2455 = vmatpush1.msra.mxu0 0.0
    %2456 = vmatprep.subr.mxu0 0.0
    %2457 = vmatpush1.msra.mxu0 0.0
    %2458 = vmatprep.subr.mxu0 0.0
    %2459 = vmatpush1.msra.mxu0 0.0
    %2460 = vmatprep.subr.mxu0 0.0
    %2461 = vmatpush1.msra.mxu0 0.0
    %2462 = vmatprep.mubr.f32.mxu0 0.0
    %2463 = vmatmul.mubr.f32.gmra.mrb[0].mxu0 %v2393
    %v2464 = vpop.f32.mrb[0].mxu0
    %v2465 = vadd.f32 %v2384, %v2464
    %v2466 = vpop.f32.mrb[0].mxu0
    %2467 = vmatprep.mubr.f32.mxu0 0.0
    %2468 = vmatmul.mubr.f32.gmra.mrb[0].mxu0 %v2396
    %v2469 = vpop.f32.mrb[0].mxu0
    %v2470 = vadd.f32 %v2389, %v2469
    %v2471 = vpop.f32.mrb[0].mxu0
    %2472 = vdwg.mxu0
    %v2473 = vld [vmem:[#allocation25] sm:$0x1]
    %v2475 = vlaneseq
    %v2476 = vshrl.u32 %v2475, 7
    %v2477 = vsub.s32 0, %v2476
    %v2478 = vrot.slane %v2473, %v2477
    %v2480 = vadd.f32 %v2465, %v2478
    %v2481 = vadd.f32 %v2470, %v2478
    %v2482 = vxor.u32 %v2480, 2147483648
    %v2483 = vxor.u32 %v2481, 2147483648
    %v2484 = vmul.f32 %v2482, 1.442695
    %v2485 = vpow.pop %v2484
    %v2486 = vmul.f32 %v2483, 1.442695
    %v2487 = vpow.pop %v2486
    %v2488 = vadd.f32 %v2485, 1.0
    %v2489 = vadd.f32 %v2487, 1.0
    %v2490 = vrcp.pop %v2488
    %v2491 = vmul.f32 1.0, %v2490
    %v2492 = vrcp.pop %v2489
    %v2493 = vmul.f32 1.0, %v2492
    %v2494 = vmul.f32 %v2491, %v2050
    %v2495 = vmul.f32 %v2493, %v2051
    %v2496 = vsub.f32 1.0, %v2491
    %v2497 = vsub.f32 1.0, %v2493
    %v2500 = vmul.f32 %v2496, %v2310
    %v2501 = vmul.f32 %v2497, %v2312
    %v2502 = vadd.f32 %v2494, %v2500
    %v2503 = vadd.f32 %v2495, %v2501
    %2506 = vrot.lane.b32.xlu0 %v2502, 64
    %v2507 = vpop.permute.xlu0 %2506
    %2508 = vrot.lane.b32.xlu0 %v2503, 64
    %v2509 = vpop.permute.xlu0 %2508
    %2512 = vst.msk [vmem:[#allocation26] sm:$0xff] %vm1233, %v2507
    %2513 = vst.msk [vmem:[#allocation26 + $0x10] sm:$0xff] %vm1233, %v2509
    // Predicated region
    $region122: #{feature_model_forward.1} parent=1 // pred_check
      _
    $region123: #{feature_model_forward.1} parent=1 // pred_check_branch
      %2515 = sbr.rel (0) target = $region125
    $region124: #{feature_model_forward.1} parent=1 // pred_region
      %s2517 = ssub.s32 512, 512
      %2518 = vsyncadd [#allocation4], %s2517
      %s2519 = sshll.u32 [#allocation26], 4
      %s2520 = int_to_ptr.vmem [resolvable:$true] %s2519
      %2525 = dma.vmem_to_hbm [thread:$0]  %s2520, 512, %s15, [#allocation4], 256, 256, 16
    $region125: #{feature_model_forward.1} parent=1 // pred_fallthru
      _
    // Predicated region
    $region126: #{feature_model_forward.1} parent=1 // pred_check
      _
    $region127: #{feature_model_forward.1} parent=1 // pred_check_branch
      %2527 = sbr.rel (0) target = $region129
    $region128: #{feature_model_forward.1} parent=1 // pred_region
      %2528 = dma.done [#allocation4], 512
    $region129: #{feature_model_forward.1} parent=1 // pred_fallthru
      _
    %2529 = vsyncpa [#allocation3], 1
    %2530 = vsyncpa [#allocation6], 1
    %2531 = vsyncpa [#allocation9], 1
    %2532 = vsyncpa [#allocation12], 1
    %2533 = vsyncpa [#allocation15], 1
    %2534 = vsyncpa [#allocation18], 1
    %2535 = vsyncpa [#allocation21], 1
    %2536 = vsyncpa [#allocation24], 1
    %2537 = vsyncpa [#allocation4], 1

</llo_original>
